<compile_context>
chip_gen: v7x
topology: tpu7x:2x2x1
jax: 0.10.0
libtpu: 0.0.40
codegen_flags: <defaults>
</compile_context>

<pallas_src>
import numpy as np
import jax
import jax.numpy as jnp
from jax import lax
from jax.experimental import pallas as pl
from jax.experimental.pallas import tpu as pltpu

# ---- model hyper-parameters (PseTae defaults) -------------------------------
INPUT_DIM = 10          # mlp1 = [10, 32, 64]
MLP1 = (10, 32, 64)
EXTRA_SIZE = 4
MLP2 = (132, 128)       # 64*2 (mean_std) + 4 extra = 132
N_HEAD = 4
D_K = 32
D_MODEL = 128           # d_model=None -> in_channels = mlp2[-1]
MLP3 = (512, 128, 128)
MLP4 = (128, 64, 32, 20)
T_SINUSOID = 1000.0
LEN_MAX_SEQ = 24
LN_EPS = 1e-5
OUT_PAD = 128           # final logits padded to 128 lanes inside the kernel
INV_TEMP = float(1.0 / np.sqrt(D_K))


# =============================================================================
# Fused kernel: PSE -> TAE -> decoder, one batch block (bb samples) per grid step
# =============================================================================
def psetae_kernel(px_ref, mk_ref, ex_ref, pos_ref,
                  w1a, b1a, w1b, b1b,
                  w2m, w2s, w2e, b2,
                  lnin_g, lnin_b, wq, bq,
                  w3a, b3a, w3b, b3b,
                  lno_g, lno_b,
                  wd1, bd1, wd2, bd2, wd3, bd3,
                  out_ref):
    bbT, n, _ = mk_ref.shape
    T = pos_ref.shape[0]
    bb = out_ref.shape[0]
    D = D_MODEL

    # ---------------- Pixel-Set Encoder ----------------
    x = px_ref[...]                                           # (bb*T*N, C) bf16
    h = jnp.maximum(jnp.dot(x, w1a[...],
                            preferred_element_type=jnp.float32) + b1a[...], 0.0)
    h = jnp.maximum(jnp.dot(h.astype(jnp.bfloat16), w1b[...],
                            preferred_element_type=jnp.float32) + b1b[...], 0.0)
    h = h.reshape(bbT, n, MLP1[2])                            # (bb*T, N, 64) f32

    m = mk_ref[...]                                           # (bb*T, N, 1) f32
    msum = jnp.sum(m, axis=1)                                 # (bb*T, 1)
    inv_n = 1.0 / jnp.maximum(msum, 1.0)                      # exact division

    # single-pass masked moments: mean / (corrected) std over valid pixels
    hm = h * m
    s1 = jnp.sum(hm, axis=1)                                  # sum m*h    (bb*T, 64)
    s2 = jnp.sum(hm * h, axis=1)                              # sum m*h^2  (bb*T, 64)
    mean = s1 * inv_n
    d = jnp.maximum(msum, 2.0)                                # torch: d[d == 1] = 2
    var = jnp.maximum(s2 - mean * s1, 0.0) / (d - 1.0)
    std = jnp.sqrt(var + 1e-31)

    e = ex_ref[...]                                           # (bb*T, E) bf16
    # MLP2 (Linear + folded BN, no ReLU) as 3 tile-aligned matmuls (no 132-concat)
    feats = (jnp.dot(mean.astype(jnp.bfloat16), w2m[...],
                     preferred_element_type=jnp.float32)
             + jnp.dot(std.astype(jnp.bfloat16), w2s[...],
                       preferred_element_type=jnp.float32)
             + jnp.dot(e, w2e[...], preferred_element_type=jnp.float32)
             + b2[...])                                       # (bb*T, 128)

    # ---------------- Temporal Attention Encoder ----------------
    xf = feats.reshape(bb, T, D)

    # input LayerNorm over channels (f32)
    mu = jnp.mean(xf, axis=-1, keepdims=True)
    v_ln = jnp.mean((xf - mu) ** 2, axis=-1, keepdims=True)
    xf = (xf - mu) * lax.rsqrt(v_ln + LN_EPS) * lnin_g[...] + lnin_b[...]

    # sinusoidal positional encoding (positions 1..T, sliced in the wrapper)
    xf = xf + pos_ref[...][None, :, :]

    # attention scores with the master query folded into the key projection
    x2 = xf.reshape(bb * T, D)
    sc = (jnp.dot(x2.astype(jnp.bfloat16), wq[...],
                  preferred_element_type=jnp.float32) + bq[...]) * INV_TEMP
    sc = sc.reshape(bb, T, N_HEAD)

    # softmax over the temporal axis (exact division; attn dropout = identity)
    sc = sc - jnp.max(sc, axis=1, keepdims=True)
    ex_sc = jnp.exp(sc)
    attn = ex_sc / jnp.sum(ex_sc, axis=1, keepdims=True)      # (bb, T, H)

    # per-head value weighting on VPU/XLU: head_h = sum_t attn[:, t, h] * x[:, t, :]
    heads = []
    for hh in range(N_HEAD):
        w_h = attn[:, :, hh:hh + 1]                           # (bb, T, 1)
        heads.append(jnp.sum(w_h * xf, axis=1))               # (bb, 128)
    att = jnp.concatenate(heads, axis=-1)                     # (bb, 512) head-major

    # MLP3: Linear+BN+ReLU (K=512 single contraction), Linear+BN+ReLU
    h1 = jnp.maximum(jnp.dot(att.astype(jnp.bfloat16), w3a[...],
                             preferred_element_type=jnp.float32) + b3a[...], 0.0)
    h2 = jnp.maximum(jnp.dot(h1.astype(jnp.bfloat16), w3b[...],
                             preferred_element_type=jnp.float32) + b3b[...], 0.0)

    # output LayerNorm
    mu2 = jnp.mean(h2, axis=-1, keepdims=True)
    v2 = jnp.mean((h2 - mu2) ** 2, axis=-1, keepdims=True)
    h2 = (h2 - mu2) * lax.rsqrt(v2 + LN_EPS) * lno_g[...] + lno_b[...]

    # decoder MLP4: Linear+BN+ReLU, Linear+BN+ReLU, Linear (padded to 128 lanes)
    d1 = jnp.maximum(jnp.dot(h2.astype(jnp.bfloat16), wd1[...],
                             preferred_element_type=jnp.float32) + bd1[...], 0.0)
    d2 = jnp.maximum(jnp.dot(d1.astype(jnp.bfloat16), wd2[...],
                             preferred_element_type=jnp.float32) + bd2[...], 0.0)
    out_ref[...] = (jnp.dot(d2.astype(jnp.bfloat16), wd3[...],
                            preferred_element_type=jnp.float32) + bd3[...])


# =============================================================================
# Wrapper: batch-block choice, layout/dtype prep, pallas_call
# =============================================================================
def _choose_batch_block(B, T, N):
    """Batch block bb and padded batch Bp.

    Cap bb so the lane-padded (bb*T, N, 1) mask block + MLP1 intermediates stay
    small in VMEM; split into >= 2 blocks when B >= 16 so the 'parallel' grid
    axis can use both v7x TensorCores.
    """
    cap = max(8, (8192 // max(T * N, 1)) // 8 * 8)
    if B <= cap:
        if B >= 16:
            bb = (((B + 1) // 2) + 7) // 8 * 8
            return bb, 2 * bb
        return B, B                       # one block == full array (always legal)
    bb = cap
    return bb, ((B + bb - 1) // bb) * bb


def psetae_forward(pixels, mask, extra, q):
    """pixels: (B, T, C, N) (PyTorch layout), mask: (B, T, N), extra: (B, T, E).

    Returns logits (B, n_classes=20), eval-mode semantics.
    """
    B, T, C, N = pixels.shape
    E = extra.shape[-1]
    bb, Bp = _choose_batch_block(B, T, N)

    # channel-last + bf16 for the MXU (single fused XLA relayout pass).
    # TODO(synk): the (C, N) -> (N, C) transpose could be moved in-kernel to save
    # one HBM pass of the pixel tensor (needs an unaligned in-kernel transpose).
    px = jnp.transpose(pixels, (0, 1, 3, 2)).astype(jnp.bfloat16).reshape(B * T * N, C)
    mk = mask.astype(jnp.float32).reshape(B * T, N, 1)
    ex = extra.astype(jnp.bfloat16).reshape(B * T, E)
    if Bp != B:
        px = jnp.pad(px, (((0, (Bp - B) * T * N)), (0, 0)))
        mk = jnp.pad(mk, ((0, (Bp - B) * T), (0, 0), (0, 0)))
        ex = jnp.pad(ex, ((0, (Bp - B) * T), (0, 0)))

    # positions=None -> src_pos = arange(1, T+1); embedding lookup = static slice
    table = sinusoid_table(LEN_MAX_SEQ + 1, D_MODEL, T=T_SINUSOID)
    pos = table[1:T + 1]                                      # (T, 128) f32

    weights = [q['W1a'], q['b1a'], q['W1b'], q['b1b'],
               q['W2m'], q['W2s'], q['W2e'], q['b2'],
               q['lnin_g'], q['lnin_b'], q['Wq'], q['bq'],
               q['W3a'], q['b3a'], q['W3b'], q['b3b'],
               q['lno_g'], q['lno_b'],
               q['Wd1'], q['bd1'], q['Wd2'], q['bd2'], q['Wd3'], q['bd3']]

    in_specs = [
        pl.BlockSpec((bb * T * N, C), lambda i: (i, 0)),      # pixels (rows, C)
        pl.BlockSpec((bb * T, N, 1), lambda i: (i, 0, 0)),    # mask
        pl.BlockSpec((bb * T, E), lambda i: (i, 0)),          # extra features
        pl.BlockSpec((T, D_MODEL), lambda i: (0, 0)),         # positional encoding
    ] + [pl.BlockSpec(w.shape, lambda i: (0, 0)) for w in weights]   # resident weights

    out = pl.pallas_call(
        psetae_kernel,
        out_shape=jax.ShapeDtypeStruct((Bp, OUT_PAD), jnp.float32),
        grid=(Bp // bb,),
        in_specs=in_specs,
        out_specs=pl.BlockSpec((bb, OUT_PAD), lambda i: (i, 0)),
        compiler_params=pltpu.CompilerParams(
            dimension_semantics=("parallel",),
            vmem_limit_bytes=32 * 1024 * 1024),
    )(px, mk, ex, pos, *weights)
    return out[:B, :MLP4[-1]]


# =============================================================================
# Parameters (raw -> folded/bf16), sinusoid table
# =============================================================================
def sinusoid_table(n_pos, d_hid, T=1000.0):
    pos = np.arange(n_pos)[:, None].astype(np.float64)
    idx = np.arange(d_hid)[None, :]
    angle = pos / np.power(T, 2.0 * (idx // 2) / d_hid)
    tab = np.zeros((n_pos, d_hid), dtype=np.float64)
    tab[:, 0::2] = np.sin(angle[:, 0::2])
    tab[:, 1::2] = np.cos(angle[:, 1::2])
    return jnp.asarray(tab, dtype=jnp.float32)


def init_params(key):
    ks = iter(jax.random.split(key, 40))

    def lin(din, dout):
        w = 0.1 * jax.random.normal(next(ks), (din, dout), dtype=jnp.float32)
        b = 0.01 * jax.random.normal(next(ks), (1, dout), dtype=jnp.float32)
        return w, b

    def bn(dim):
        # eval-mode BatchNorm: running_mean=0, running_var=1 -> scale/shift
        gamma = 1.0 + 0.1 * jax.random.normal(next(ks), (1, dim), dtype=jnp.float32)
        beta = 0.1 * jax.random.normal(next(ks), (1, dim), dtype=jnp.float32)
        return gamma / jnp.sqrt(1.0 + 1e-5), beta

    def ln(dim):
        g = 1.0 + 0.1 * jax.random.normal(next(ks), (1, dim), dtype=jnp.float32)
        b = 0.1 * jax.random.normal(next(ks), (1, dim), dtype=jnp.float32)
        return g, b

    p = {}
    p['W1a'], p['b1a'] = lin(MLP1[0], MLP1[1]); p['s1a'], p['t1a'] = bn(MLP1[1])
    p['W1b'], p['b1b'] = lin(MLP1[1], MLP1[2]); p['s1b'], p['t1b'] = bn(MLP1[2])
    p['W2'], p['b2'] = lin(MLP2[0], MLP2[1]);   p['s2'], p['t2'] = bn(MLP2[1])
    p['lnin_g'], p['lnin_b'] = ln(D_MODEL)
    p['Q'] = (np.sqrt(2.0 / D_K) *
              jax.random.normal(next(ks), (N_HEAD, D_K), dtype=jnp.float32))
    p['Wk'], p['bk'] = lin(D_MODEL, N_HEAD * D_K)
    p['W3a'], p['b3a'] = lin(MLP3[0], MLP3[1]); p['s3a'], p['t3a'] = bn(MLP3[1])
    p['W3b'], p['b3b'] = lin(MLP3[1], MLP3[2]); p['s3b'], p['t3b'] = bn(MLP3[2])
    p['lno_g'], p['lno_b'] = ln(MLP3[-1])
    p['Wd1'], p['bd1'] = lin(MLP4[0], MLP4[1]); p['sd1'], p['td1'] = bn(MLP4[1])
    p['Wd2'], p['bd2'] = lin(MLP4[1], MLP4[2]); p['sd2'], p['td2'] = bn(MLP4[2])
    p['Wd3'], p['bd3'] = lin(MLP4[2], MLP4[3])
    return p


def _fold_bn(W, b, s, t):
    """Fold eval-mode BatchNorm scale/shift into the preceding Linear (exact)."""
    return W * s, b * s + t


def prepare_params(p):
    """Fold BN into Linears, fold Q into Wk, split W2, pad head; bf16 matmul weights."""
    def w16(x):
        return x.astype(jnp.bfloat16)

    q = {}
    # PSE
    W1a, b1a = _fold_bn(p['W1a'], p['b1a'], p['s1a'], p['t1a'])
    W1b, b1b = _fold_bn(p['W1b'], p['b1b'], p['s1b'], p['t1b'])
    q['W1a'], q['b1a'] = w16(W1a), b1a
    q['W1b'], q['b1b'] = w16(W1b), b1b
    W2f, b2f = _fold_bn(p['W2'], p['b2'], p['s2'], p['t2'])
    q['W2m'] = w16(W2f[:MLP1[2]])                  # rows for the mean features
    q['W2s'] = w16(W2f[MLP1[2]:2 * MLP1[2]])       # rows for the std features
    q['W2e'] = w16(W2f[2 * MLP1[2]:])              # rows for the extra features
    q['b2'] = b2f
    # TAE
    q['lnin_g'], q['lnin_b'] = p['lnin_g'], p['lnin_b']
    Wk3 = p['Wk'].reshape(D_MODEL, N_HEAD, D_K)
    q['Wq'] = w16(jnp.einsum('dhk,hk->dh', Wk3, p['Q']))                  # (128, 4)
    q['bq'] = jnp.einsum('hk,hk->h', p['bk'].reshape(N_HEAD, D_K),
                         p['Q'])[None, :]                                  # (1, 4)
    W3af, b3af = _fold_bn(p['W3a'], p['b3a'], p['s3a'], p['t3a'])
    q['W3a'], q['b3a'] = w16(W3af), b3af           # (512, 128), head-major rows
    W3bf, b3bf = _fold_bn(p['W3b'], p['b3b'], p['s3b'], p['t3b'])
    q['W3b'], q['b3b'] = w16(W3bf), b3bf
    q['lno_g'], q['lno_b'] = p['lno_g'], p['lno_b']
    # decoder
    Wd1, bd1 = _fold_bn(p['Wd1'], p['bd1'], p['sd1'], p['td1'])
    Wd2, bd2 = _fold_bn(p['Wd2'], p['bd2'], p['sd2'], p['td2'])
    q['Wd1'], q['bd1'] = w16(Wd1), bd1
    q['Wd2'], q['bd2'] = w16(Wd2), bd2
    Wd3 = jnp.zeros((MLP4[2], OUT_PAD), jnp.float32).at[:, :MLP4[3]].set(p['Wd3'])
    q['Wd3'] = w16(Wd3)
    q['bd3'] = jnp.zeros((1, OUT_PAD), jnp.float32).at[:, :MLP4[3]].set(p['bd3'])
    return q


if __name__ == "__main__":
    key = jax.random.PRNGKey(0)
    B, T, N = 2, 8, 32                      # batch, sequence length, pixels per set
    C, E = INPUT_DIM, EXTRA_SIZE            # 10 spectral channels, 4 extra features

    k_px, k_mk, k_ex, k_pp = jax.random.split(key, 4)
    # PyTorch layout for the Pixel-Set: B x T x C x N (handled natively by the wrapper)
    pixels = jax.random.normal(k_px, (B, T, C, N), dtype=jnp.float32)
    mask = (jax.random.uniform(k_mk, (B, T, N)) < 0.7).astype(jnp.float32)
    mask = mask.at[:, :, :2].set(1.0)       # guarantee >= 2 valid pixels per (b, t)
    extra = jax.random.normal(k_ex, (B, T, E), dtype=jnp.float32)

    params = prepare_params(init_params(k_pp))
    logits = psetae_forward(pixels, mask, extra, params)
    jax.block_until_ready(logits)
    assert logits.shape == (B, MLP4[-1]) and logits.dtype == jnp.float32
    assert bool(jnp.all(jnp.isfinite(logits)))
    print("KERNEL_OK")
</pallas_src>

<mosaic_0001>
module attributes {stable_mosaic.version = 11 : i64} {
  func.func @psetae_kernel(%arg0: i32, %arg1: memref<512x10xbf16, #tpu.memory_space<vmem>>, %arg2: memref<16x32x1xf32, #tpu.memory_space<vmem>>, %arg3: memref<16x4xbf16, #tpu.memory_space<vmem>>, %arg4: memref<8x128xf32, #tpu.memory_space<vmem>>, %arg5: memref<10x32xbf16, #tpu.memory_space<vmem>>, %arg6: memref<1x32xf32, #tpu.memory_space<vmem>>, %arg7: memref<32x64xbf16, #tpu.memory_space<vmem>>, %arg8: memref<1x64xf32, #tpu.memory_space<vmem>>, %arg9: memref<64x128xbf16, #tpu.memory_space<vmem>>, %arg10: memref<64x128xbf16, #tpu.memory_space<vmem>>, %arg11: memref<4x128xbf16, #tpu.memory_space<vmem>>, %arg12: memref<1x128xf32, #tpu.memory_space<vmem>>, %arg13: memref<1x128xf32, #tpu.memory_space<vmem>>, %arg14: memref<1x128xf32, #tpu.memory_space<vmem>>, %arg15: memref<128x4xbf16, #tpu.memory_space<vmem>>, %arg16: memref<1x4xf32, #tpu.memory_space<vmem>>, %arg17: memref<512x128xbf16, #tpu.memory_space<vmem>>, %arg18: memref<1x128xf32, #tpu.memory_space<vmem>>, %arg19: memref<128x128xbf16, #tpu.memory_space<vmem>>, %arg20: memref<1x128xf32, #tpu.memory_space<vmem>>, %arg21: memref<1x128xf32, #tpu.memory_space<vmem>>, %arg22: memref<1x128xf32, #tpu.memory_space<vmem>>, %arg23: memref<128x64xbf16, #tpu.memory_space<vmem>>, %arg24: memref<1x64xf32, #tpu.memory_space<vmem>>, %arg25: memref<64x32xbf16, #tpu.memory_space<vmem>>, %arg26: memref<1x32xf32, #tpu.memory_space<vmem>>, %arg27: memref<32x128xbf16, #tpu.memory_space<vmem>>, %arg28: memref<1x128xf32, #tpu.memory_space<vmem>>, %arg29: memref<2x128xf32, #tpu.memory_space<vmem>>) attributes {dimension_semantics = [#tpu.dimension_semantics<parallel>], iteration_bounds = array<i64: 1>, scalar_prefetch = 0 : i64, scratch_operands = 0 : i64, tpu.core_type = #tpu.core_type<tc>, window_params = [{transform_indices = @transform_0, window_bounds = array<i64: 512, 10>}, {transform_indices = @transform_1, window_bounds = array<i64: 16, 32, 1>}, {transform_indices = @transform_2, window_bounds = array<i64: 16, 4>}, {pipeline_mode = #tpu.pipeline_mode<synchronous>, transform_indices = @transform_3, window_bounds = array<i64: 8, 128>}, {pipeline_mode = #tpu.pipeline_mode<synchronous>, transform_indices = @transform_4, window_bounds = array<i64: 10, 32>}, {pipeline_mode = #tpu.pipeline_mode<synchronous>, transform_indices = @transform_5, window_bounds = array<i64: 1, 32>}, {pipeline_mode = #tpu.pipeline_mode<synchronous>, transform_indices = @transform_6, window_bounds = array<i64: 32, 64>}, {pipeline_mode = #tpu.pipeline_mode<synchronous>, transform_indices = @transform_7, window_bounds = array<i64: 1, 64>}, {pipeline_mode = #tpu.pipeline_mode<synchronous>, transform_indices = @transform_8, window_bounds = array<i64: 64, 128>}, {pipeline_mode = #tpu.pipeline_mode<synchronous>, transform_indices = @transform_9, window_bounds = array<i64: 64, 128>}, {pipeline_mode = #tpu.pipeline_mode<synchronous>, transform_indices = @transform_10, window_bounds = array<i64: 4, 128>}, {pipeline_mode = #tpu.pipeline_mode<synchronous>, transform_indices = @transform_11, window_bounds = array<i64: 1, 128>}, {pipeline_mode = #tpu.pipeline_mode<synchronous>, transform_indices = @transform_12, window_bounds = array<i64: 1, 128>}, {pipeline_mode = #tpu.pipeline_mode<synchronous>, transform_indices = @transform_13, window_bounds = array<i64: 1, 128>}, {pipeline_mode = #tpu.pipeline_mode<synchronous>, transform_indices = @transform_14, window_bounds = array<i64: 128, 4>}, {pipeline_mode = #tpu.pipeline_mode<synchronous>, transform_indices = @transform_15, window_bounds = array<i64: 1, 4>}, {pipeline_mode = #tpu.pipeline_mode<synchronous>, transform_indices = @transform_16, window_bounds = array<i64: 512, 128>}, {pipeline_mode = #tpu.pipeline_mode<synchronous>, transform_indices = @transform_17, window_bounds = array<i64: 1, 128>}, {pipeline_mode = #tpu.pipeline_mode<synchronous>, transform_indices = @transform_18, window_bounds = array<i64: 128, 128>}, {pipeline_mode = #tpu.pipeline_mode<synchronous>, transform_indices = @transform_19, window_bounds = array<i64: 1, 128>}, {pipeline_mode = #tpu.pipeline_mode<synchronous>, transform_indices = @transform_20, window_bounds = array<i64: 1, 128>}, {pipeline_mode = #tpu.pipeline_mode<synchronous>, transform_indices = @transform_21, window_bounds = array<i64: 1, 128>}, {pipeline_mode = #tpu.pipeline_mode<synchronous>, transform_indices = @transform_22, window_bounds = array<i64: 128, 64>}, {pipeline_mode = #tpu.pipeline_mode<synchronous>, transform_indices = @transform_23, window_bounds = array<i64: 1, 64>}, {pipeline_mode = #tpu.pipeline_mode<synchronous>, transform_indices = @transform_24, window_bounds = array<i64: 64, 32>}, {pipeline_mode = #tpu.pipeline_mode<synchronous>, transform_indices = @transform_25, window_bounds = array<i64: 1, 32>}, {pipeline_mode = #tpu.pipeline_mode<synchronous>, transform_indices = @transform_26, window_bounds = array<i64: 32, 128>}, {pipeline_mode = #tpu.pipeline_mode<synchronous>, transform_indices = @transform_27, window_bounds = array<i64: 1, 128>}, {transform_indices = @transform_28, window_bounds = array<i64: 2, 128>}]} {
    %c0 = arith.constant 0 : index
    %c0_0 = arith.constant 0 : index
    %0 = vector.load %arg1[%c0, %c0_0] : memref<512x10xbf16, #tpu.memory_space<vmem>>, vector<512x10xbf16>
    %c0_1 = arith.constant 0 : index
    %c0_2 = arith.constant 0 : index
    %1 = vector.load %arg5[%c0_1, %c0_2] : memref<10x32xbf16, #tpu.memory_space<vmem>>, vector<10x32xbf16>
    %cst = arith.constant dense<0.000000e+00> : vector<512x32xf32>
    %2 = tpu.matmul %0, %1, %cst {dimension_numbers = #tpu.dot_dimension_numbers<[1], [0], [0], [1], [0, 0, 1, 1], [], []>} : vector<512x10xbf16>, vector<10x32xbf16>, vector<512x32xf32> -> vector<512x32xf32>
    %c0_3 = arith.constant 0 : index
    %c0_4 = arith.constant 0 : index
    %3 = vector.load %arg6[%c0_3, %c0_4] : memref<1x32xf32, #tpu.memory_space<vmem>>, vector<1x32xf32>
    %4 = vector.broadcast %3 : vector<1x32xf32> to vector<512x32xf32>
    %5 = arith.addf %2, %4 : vector<512x32xf32>
    %cst_5 = arith.constant 0.000000e+00 : f32
    %6 = vector.broadcast %cst_5 : f32 to vector<512x32xf32>
    %7 = arith.maximumf %5, %6 : vector<512x32xf32>
    %8 = arith.truncf %7 : vector<512x32xf32> to vector<512x32xbf16>
    %c0_6 = arith.constant 0 : index
    %c0_7 = arith.constant 0 : index
    %9 = vector.load %arg7[%c0_6, %c0_7] : memref<32x64xbf16, #tpu.memory_space<vmem>>, vector<32x64xbf16>
    %cst_8 = arith.constant dense<0.000000e+00> : vector<512x64xf32>
    %10 = tpu.matmul %8, %9, %cst_8 {dimension_numbers = #tpu.dot_dimension_numbers<[1], [0], [0], [1], [0, 0, 1, 1], [], []>} : vector<512x32xbf16>, vector<32x64xbf16>, vector<512x64xf32> -> vector<512x64xf32>
    %c0_9 = arith.constant 0 : index
    %c0_10 = arith.constant 0 : index
    %11 = vector.load %arg8[%c0_9, %c0_10] : memref<1x64xf32, #tpu.memory_space<vmem>>, vector<1x64xf32>
    %12 = vector.broadcast %11 : vector<1x64xf32> to vector<512x64xf32>
    %13 = arith.addf %10, %12 : vector<512x64xf32>
    %cst_11 = arith.constant 0.000000e+00 : f32
    %14 = vector.broadcast %cst_11 : f32 to vector<512x64xf32>
    %15 = arith.maximumf %13, %14 : vector<512x64xf32>
    %16 = vector.shape_cast %15 : vector<512x64xf32> to vector<16x32x64xf32>
    %c0_12 = arith.constant 0 : index
    %c0_13 = arith.constant 0 : index
    %c0_14 = arith.constant 0 : index
    %17 = vector.load %arg2[%c0_12, %c0_13, %c0_14] : memref<16x32x1xf32, #tpu.memory_space<vmem>>, vector<16x32x1xf32>
    %cst_15 = arith.constant dense<0.000000e+00> : vector<16x1xf32>
    %18 = vector.multi_reduction <add>, %17, %cst_15 [1] : vector<16x32x1xf32> to vector<16x1xf32>
    %cst_16 = arith.constant 1.000000e+00 : f32
    %19 = vector.broadcast %cst_16 : f32 to vector<16x1xf32>
    %20 = arith.maximumf %18, %19 : vector<16x1xf32>
    %cst_17 = arith.constant 1.000000e+00 : f32
    %21 = vector.broadcast %cst_17 : f32 to vector<16x1xf32>
    %22 = arith.divf %21, %20 : vector<16x1xf32>
    %23 = vector.broadcast %17 : vector<16x32x1xf32> to vector<16x32x64xf32>
    %24 = arith.mulf %16, %23 : vector<16x32x64xf32>
    %cst_18 = arith.constant dense<0.000000e+00> : vector<16x64xf32>
    %25 = vector.multi_reduction <add>, %24, %cst_18 [1] : vector<16x32x64xf32> to vector<16x64xf32>
    %26 = arith.mulf %24, %16 : vector<16x32x64xf32>
    %cst_19 = arith.constant dense<0.000000e+00> : vector<16x64xf32>
    %27 = vector.multi_reduction <add>, %26, %cst_19 [1] : vector<16x32x64xf32> to vector<16x64xf32>
    %28 = vector.broadcast %22 : vector<16x1xf32> to vector<16x64xf32>
    %29 = arith.mulf %25, %28 : vector<16x64xf32>
    %cst_20 = arith.constant 2.000000e+00 : f32
    %30 = vector.broadcast %cst_20 : f32 to vector<16x1xf32>
    %31 = arith.maximumf %18, %30 : vector<16x1xf32>
    %32 = arith.mulf %29, %25 : vector<16x64xf32>
    %33 = arith.subf %27, %32 : vector<16x64xf32>
    %cst_21 = arith.constant 0.000000e+00 : f32
    %34 = vector.broadcast %cst_21 : f32 to vector<16x64xf32>
    %35 = arith.maximumf %33, %34 : vector<16x64xf32>
    %cst_22 = arith.constant 1.000000e+00 : f32
    %36 = vector.broadcast %cst_22 : f32 to vector<16x1xf32>
    %37 = arith.subf %31, %36 : vector<16x1xf32>
    %38 = vector.broadcast %37 : vector<16x1xf32> to vector<16x64xf32>
    %39 = arith.divf %35, %38 : vector<16x64xf32>
    %cst_23 = arith.constant 9.99999979E-32 : f32
    %40 = vector.broadcast %cst_23 : f32 to vector<16x64xf32>
    %41 = arith.addf %39, %40 : vector<16x64xf32>
    %42 = math.sqrt %41 : vector<16x64xf32>
    %c0_24 = arith.constant 0 : index
    %c0_25 = arith.constant 0 : index
    %43 = vector.load %arg3[%c0_24, %c0_25] : memref<16x4xbf16, #tpu.memory_space<vmem>>, vector<16x4xbf16>
    %44 = arith.truncf %29 : vector<16x64xf32> to vector<16x64xbf16>
    %c0_26 = arith.constant 0 : index
    %c0_27 = arith.constant 0 : index
    %45 = vector.load %arg9[%c0_26, %c0_27] : memref<64x128xbf16, #tpu.memory_space<vmem>>, vector<64x128xbf16>
    %cst_28 = arith.constant dense<0.000000e+00> : vector<16x128xf32>
    %46 = tpu.matmul %44, %45, %cst_28 {dimension_numbers = #tpu.dot_dimension_numbers<[1], [0], [0], [1], [0, 0, 1, 1], [], []>} : vector<16x64xbf16>, vector<64x128xbf16>, vector<16x128xf32> -> vector<16x128xf32>
    %47 = arith.truncf %42 : vector<16x64xf32> to vector<16x64xbf16>
    %c0_29 = arith.constant 0 : index
    %c0_30 = arith.constant 0 : index
    %48 = vector.load %arg10[%c0_29, %c0_30] : memref<64x128xbf16, #tpu.memory_space<vmem>>, vector<64x128xbf16>
    %cst_31 = arith.constant dense<0.000000e+00> : vector<16x128xf32>
    %49 = tpu.matmul %47, %48, %cst_31 {dimension_numbers = #tpu.dot_dimension_numbers<[1], [0], [0], [1], [0, 0, 1, 1], [], []>} : vector<16x64xbf16>, vector<64x128xbf16>, vector<16x128xf32> -> vector<16x128xf32>
    %50 = arith.addf %46, %49 : vector<16x128xf32>
    %c0_32 = arith.constant 0 : index
    %c0_33 = arith.constant 0 : index
    %51 = vector.load %arg11[%c0_32, %c0_33] : memref<4x128xbf16, #tpu.memory_space<vmem>>, vector<4x128xbf16>
    %cst_34 = arith.constant dense<0.000000e+00> : vector<16x128xf32>
    %52 = tpu.matmul %43, %51, %cst_34 {dimension_numbers = #tpu.dot_dimension_numbers<[1], [0], [0], [1], [0, 0, 1, 1], [], []>} : vector<16x4xbf16>, vector<4x128xbf16>, vector<16x128xf32> -> vector<16x128xf32>
    %53 = arith.addf %50, %52 : vector<16x128xf32>
    %c0_35 = arith.constant 0 : index
    %c0_36 = arith.constant 0 : index
    %54 = vector.load %arg12[%c0_35, %c0_36] : memref<1x128xf32, #tpu.memory_space<vmem>>, vector<1x128xf32>
    %55 = vector.broadcast %54 : vector<1x128xf32> to vector<16x128xf32>
    %56 = arith.addf %53, %55 : vector<16x128xf32>
    %57 = vector.shape_cast %56 : vector<16x128xf32> to vector<2x8x128xf32>
    %cst_37 = arith.constant dense<0.000000e+00> : vector<2x8xf32>
    %58 = vector.multi_reduction <add>, %57, %cst_37 [2] : vector<2x8x128xf32> to vector<2x8xf32>
    %59 = vector.shape_cast %58 : vector<2x8xf32> to vector<2x8x1xf32>
    %cst_38 = arith.constant 1.280000e+02 : f32
    %60 = vector.broadcast %cst_38 : f32 to vector<2x8x1xf32>
    %61 = arith.divf %59, %60 : vector<2x8x1xf32>
    %62 = vector.broadcast %61 : vector<2x8x1xf32> to vector<2x8x128xf32>
    %63 = arith.subf %57, %62 : vector<2x8x128xf32>
    %64 = arith.mulf %63, %63 : vector<2x8x128xf32>
    %cst_39 = arith.constant dense<0.000000e+00> : vector<2x8xf32>
    %65 = vector.multi_reduction <add>, %64, %cst_39 [2] : vector<2x8x128xf32> to vector<2x8xf32>
    %66 = vector.shape_cast %65 : vector<2x8xf32> to vector<2x8x1xf32>
    %cst_40 = arith.constant 1.280000e+02 : f32
    %67 = vector.broadcast %cst_40 : f32 to vector<2x8x1xf32>
    %68 = arith.divf %66, %67 : vector<2x8x1xf32>
    %69 = vector.broadcast %61 : vector<2x8x1xf32> to vector<2x8x128xf32>
    %70 = arith.subf %57, %69 : vector<2x8x128xf32>
    %cst_41 = arith.constant 9.99999974E-6 : f32
    %71 = vector.broadcast %cst_41 : f32 to vector<2x8x1xf32>
    %72 = arith.addf %68, %71 : vector<2x8x1xf32>
    %73 = math.rsqrt %72 : vector<2x8x1xf32>
    %74 = vector.broadcast %73 : vector<2x8x1xf32> to vector<2x8x128xf32>
    %75 = arith.mulf %70, %74 : vector<2x8x128xf32>
    %c0_42 = arith.constant 0 : index
    %c0_43 = arith.constant 0 : index
    %76 = vector.load %arg13[%c0_42, %c0_43] : memref<1x128xf32, #tpu.memory_space<vmem>>, vector<1x128xf32>
    %77 = vector.shape_cast %76 : vector<1x128xf32> to vector<1x1x128xf32>
    %78 = vector.broadcast %77 : vector<1x1x128xf32> to vector<2x8x128xf32>
    %79 = arith.mulf %75, %78 : vector<2x8x128xf32>
    %c0_44 = arith.constant 0 : index
    %c0_45 = arith.constant 0 : index
    %80 = vector.load %arg14[%c0_44, %c0_45] : memref<1x128xf32, #tpu.memory_space<vmem>>, vector<1x128xf32>
    %81 = vector.shape_cast %80 : vector<1x128xf32> to vector<1x1x128xf32>
    %82 = vector.broadcast %81 : vector<1x1x128xf32> to vector<2x8x128xf32>
    %83 = arith.addf %79, %82 : vector<2x8x128xf32>
    %c0_46 = arith.constant 0 : index
    %c0_47 = arith.constant 0 : index
    %84 = vector.load %arg4[%c0_46, %c0_47] : memref<8x128xf32, #tpu.memory_space<vmem>>, vector<8x128xf32>
    %85 = vector.shape_cast %84 : vector<8x128xf32> to vector<1x8x128xf32>
    %86 = vector.broadcast %85 : vector<1x8x128xf32> to vector<2x8x128xf32>
    %87 = arith.addf %83, %86 : vector<2x8x128xf32>
    %88 = vector.shape_cast %87 : vector<2x8x128xf32> to vector<16x128xf32>
    %89 = arith.truncf %88 : vector<16x128xf32> to vector<16x128xbf16>
    %c0_48 = arith.constant 0 : index
    %c0_49 = arith.constant 0 : index
    %90 = vector.load %arg15[%c0_48, %c0_49] : memref<128x4xbf16, #tpu.memory_space<vmem>>, vector<128x4xbf16>
    %cst_50 = arith.constant dense<0.000000e+00> : vector<16x4xf32>
    %91 = tpu.matmul %89, %90, %cst_50 {dimension_numbers = #tpu.dot_dimension_numbers<[1], [0], [0], [1], [0, 0, 1, 1], [], []>} : vector<16x128xbf16>, vector<128x4xbf16>, vector<16x4xf32> -> vector<16x4xf32>
    %c0_51 = arith.constant 0 : index
    %c0_52 = arith.constant 0 : index
    %92 = vector.load %arg16[%c0_51, %c0_52] : memref<1x4xf32, #tpu.memory_space<vmem>>, vector<1x4xf32>
    %93 = vector.broadcast %92 : vector<1x4xf32> to vector<16x4xf32>
    %94 = arith.addf %91, %93 : vector<16x4xf32>
    %cst_53 = arith.constant 0.176776692 : f32
    %95 = vector.broadcast %cst_53 : f32 to vector<16x4xf32>
    %96 = arith.mulf %94, %95 : vector<16x4xf32>
    %97 = vector.shape_cast %96 : vector<16x4xf32> to vector<2x8x4xf32>
    %cst_54 = arith.constant dense<0xFF800000> : vector<2x4xf32>
    %98 = vector.multi_reduction <maximumf>, %97, %cst_54 [1] : vector<2x8x4xf32> to vector<2x4xf32>
    %99 = vector.shape_cast %98 : vector<2x4xf32> to vector<2x1x4xf32>
    %100 = vector.broadcast %99 : vector<2x1x4xf32> to vector<2x8x4xf32>
    %101 = arith.subf %97, %100 : vector<2x8x4xf32>
    %102 = math.exp %101 : vector<2x8x4xf32>
    %cst_55 = arith.constant dense<0.000000e+00> : vector<2x4xf32>
    %103 = vector.multi_reduction <add>, %102, %cst_55 [1] : vector<2x8x4xf32> to vector<2x4xf32>
    %104 = vector.shape_cast %103 : vector<2x4xf32> to vector<2x1x4xf32>
    %105 = vector.broadcast %104 : vector<2x1x4xf32> to vector<2x8x4xf32>
    %106 = arith.divf %102, %105 : vector<2x8x4xf32>
    %107 = vector.extract_strided_slice %106 {offsets = [0, 0, 0], sizes = [2, 8, 1], strides = [1, 1, 1]} : vector<2x8x4xf32> to vector<2x8x1xf32>
    %108 = vector.broadcast %107 : vector<2x8x1xf32> to vector<2x8x128xf32>
    %109 = arith.mulf %108, %87 : vector<2x8x128xf32>
    %cst_56 = arith.constant dense<0.000000e+00> : vector<2x128xf32>
    %110 = vector.multi_reduction <add>, %109, %cst_56 [1] : vector<2x8x128xf32> to vector<2x128xf32>
    %111 = vector.extract_strided_slice %106 {offsets = [0, 0, 1], sizes = [2, 8, 1], strides = [1, 1, 1]} : vector<2x8x4xf32> to vector<2x8x1xf32>
    %112 = vector.broadcast %111 : vector<2x8x1xf32> to vector<2x8x128xf32>
    %113 = arith.mulf %112, %87 : vector<2x8x128xf32>
    %cst_57 = arith.constant dense<0.000000e+00> : vector<2x128xf32>
    %114 = vector.multi_reduction <add>, %113, %cst_57 [1] : vector<2x8x128xf32> to vector<2x128xf32>
    %115 = vector.extract_strided_slice %106 {offsets = [0, 0, 2], sizes = [2, 8, 1], strides = [1, 1, 1]} : vector<2x8x4xf32> to vector<2x8x1xf32>
    %116 = vector.broadcast %115 : vector<2x8x1xf32> to vector<2x8x128xf32>
    %117 = arith.mulf %116, %87 : vector<2x8x128xf32>
    %cst_58 = arith.constant dense<0.000000e+00> : vector<2x128xf32>
    %118 = vector.multi_reduction <add>, %117, %cst_58 [1] : vector<2x8x128xf32> to vector<2x128xf32>
    %119 = vector.extract_strided_slice %106 {offsets = [0, 0, 3], sizes = [2, 8, 1], strides = [1, 1, 1]} : vector<2x8x4xf32> to vector<2x8x1xf32>
    %120 = vector.broadcast %119 : vector<2x8x1xf32> to vector<2x8x128xf32>
    %121 = arith.mulf %120, %87 : vector<2x8x128xf32>
    %cst_59 = arith.constant dense<0.000000e+00> : vector<2x128xf32>
    %122 = vector.multi_reduction <add>, %121, %cst_59 [1] : vector<2x8x128xf32> to vector<2x128xf32>
    %123 = tpu.concatenate %110, %114, %118, %122 in 1 : vector<2x128xf32>, vector<2x128xf32>, vector<2x128xf32>, vector<2x128xf32> -> vector<2x512xf32>
    %124 = arith.truncf %123 : vector<2x512xf32> to vector<2x512xbf16>
    %c0_60 = arith.constant 0 : index
    %c0_61 = arith.constant 0 : index
    %125 = vector.load %arg17[%c0_60, %c0_61] : memref<512x128xbf16, #tpu.memory_space<vmem>>, vector<512x128xbf16>
    %cst_62 = arith.constant dense<0.000000e+00> : vector<2x128xf32>
    %126 = tpu.matmul %124, %125, %cst_62 {dimension_numbers = #tpu.dot_dimension_numbers<[1], [0], [0], [1], [0, 0, 1, 1], [], []>} : vector<2x512xbf16>, vector<512x128xbf16>, vector<2x128xf32> -> vector<2x128xf32>
    %c0_63 = arith.constant 0 : index
    %c0_64 = arith.constant 0 : index
    %127 = vector.load %arg18[%c0_63, %c0_64] : memref<1x128xf32, #tpu.memory_space<vmem>>, vector<1x128xf32>
    %128 = vector.broadcast %127 : vector<1x128xf32> to vector<2x128xf32>
    %129 = arith.addf %126, %128 : vector<2x128xf32>
    %cst_65 = arith.constant 0.000000e+00 : f32
    %130 = vector.broadcast %cst_65 : f32 to vector<2x128xf32>
    %131 = arith.maximumf %129, %130 : vector<2x128xf32>
    %132 = arith.truncf %131 : vector<2x128xf32> to vector<2x128xbf16>
    %c0_66 = arith.constant 0 : index
    %c0_67 = arith.constant 0 : index
    %133 = vector.load %arg19[%c0_66, %c0_67] : memref<128x128xbf16, #tpu.memory_space<vmem>>, vector<128x128xbf16>
    %cst_68 = arith.constant dense<0.000000e+00> : vector<2x128xf32>
    %134 = tpu.matmul %132, %133, %cst_68 {dimension_numbers = #tpu.dot_dimension_numbers<[1], [0], [0], [1], [0, 0, 1, 1], [], []>} : vector<2x128xbf16>, vector<128x128xbf16>, vector<2x128xf32> -> vector<2x128xf32>
    %c0_69 = arith.constant 0 : index
    %c0_70 = arith.constant 0 : index
    %135 = vector.load %arg20[%c0_69, %c0_70] : memref<1x128xf32, #tpu.memory_space<vmem>>, vector<1x128xf32>
    %136 = vector.broadcast %135 : vector<1x128xf32> to vector<2x128xf32>
    %137 = arith.addf %134, %136 : vector<2x128xf32>
    %cst_71 = arith.constant 0.000000e+00 : f32
    %138 = vector.broadcast %cst_71 : f32 to vector<2x128xf32>
    %139 = arith.maximumf %137, %138 : vector<2x128xf32>
    %cst_72 = arith.constant dense<0.000000e+00> : vector<2xf32>
    %140 = vector.multi_reduction <add>, %139, %cst_72 [1] : vector<2x128xf32> to vector<2xf32>
    %141 = vector.shape_cast %140 : vector<2xf32> to vector<2x1xf32>
    %cst_73 = arith.constant 1.280000e+02 : f32
    %142 = vector.broadcast %cst_73 : f32 to vector<2x1xf32>
    %143 = arith.divf %141, %142 : vector<2x1xf32>
    %144 = vector.broadcast %143 : vector<2x1xf32> to vector<2x128xf32>
    %145 = arith.subf %139, %144 : vector<2x128xf32>
    %146 = arith.mulf %145, %145 : vector<2x128xf32>
    %cst_74 = arith.constant dense<0.000000e+00> : vector<2xf32>
    %147 = vector.multi_reduction <add>, %146, %cst_74 [1] : vector<2x128xf32> to vector<2xf32>
    %148 = vector.shape_cast %147 : vector<2xf32> to vector<2x1xf32>
    %cst_75 = arith.constant 1.280000e+02 : f32
    %149 = vector.broadcast %cst_75 : f32 to vector<2x1xf32>
    %150 = arith.divf %148, %149 : vector<2x1xf32>
    %151 = vector.broadcast %143 : vector<2x1xf32> to vector<2x128xf32>
    %152 = arith.subf %139, %151 : vector<2x128xf32>
    %cst_76 = arith.constant 9.99999974E-6 : f32
    %153 = vector.broadcast %cst_76 : f32 to vector<2x1xf32>
    %154 = arith.addf %150, %153 : vector<2x1xf32>
    %155 = math.rsqrt %154 : vector<2x1xf32>
    %156 = vector.broadcast %155 : vector<2x1xf32> to vector<2x128xf32>
    %157 = arith.mulf %152, %156 : vector<2x128xf32>
    %c0_77 = arith.constant 0 : index
    %c0_78 = arith.constant 0 : index
    %158 = vector.load %arg21[%c0_77, %c0_78] : memref<1x128xf32, #tpu.memory_space<vmem>>, vector<1x128xf32>
    %159 = vector.broadcast %158 : vector<1x128xf32> to vector<2x128xf32>
    %160 = arith.mulf %157, %159 : vector<2x128xf32>
    %c0_79 = arith.constant 0 : index
    %c0_80 = arith.constant 0 : index
    %161 = vector.load %arg22[%c0_79, %c0_80] : memref<1x128xf32, #tpu.memory_space<vmem>>, vector<1x128xf32>
    %162 = vector.broadcast %161 : vector<1x128xf32> to vector<2x128xf32>
    %163 = arith.addf %160, %162 : vector<2x128xf32>
    %164 = arith.truncf %163 : vector<2x128xf32> to vector<2x128xbf16>
    %c0_81 = arith.constant 0 : index
    %c0_82 = arith.constant 0 : index
    %165 = vector.load %arg23[%c0_81, %c0_82] : memref<128x64xbf16, #tpu.memory_space<vmem>>, vector<128x64xbf16>
    %cst_83 = arith.constant dense<0.000000e+00> : vector<2x64xf32>
    %166 = tpu.matmul %164, %165, %cst_83 {dimension_numbers = #tpu.dot_dimension_numbers<[1], [0], [0], [1], [0, 0, 1, 1], [], []>} : vector<2x128xbf16>, vector<128x64xbf16>, vector<2x64xf32> -> vector<2x64xf32>
    %c0_84 = arith.constant 0 : index
    %c0_85 = arith.constant 0 : index
    %167 = vector.load %arg24[%c0_84, %c0_85] : memref<1x64xf32, #tpu.memory_space<vmem>>, vector<1x64xf32>
    %168 = vector.broadcast %167 : vector<1x64xf32> to vector<2x64xf32>
    %169 = arith.addf %166, %168 : vector<2x64xf32>
    %cst_86 = arith.constant 0.000000e+00 : f32
    %170 = vector.broadcast %cst_86 : f32 to vector<2x64xf32>
    %171 = arith.maximumf %169, %170 : vector<2x64xf32>
    %172 = arith.truncf %171 : vector<2x64xf32> to vector<2x64xbf16>
    %c0_87 = arith.constant 0 : index
    %c0_88 = arith.constant 0 : index
    %173 = vector.load %arg25[%c0_87, %c0_88] : memref<64x32xbf16, #tpu.memory_space<vmem>>, vector<64x32xbf16>
    %cst_89 = arith.constant dense<0.000000e+00> : vector<2x32xf32>
    %174 = tpu.matmul %172, %173, %cst_89 {dimension_numbers = #tpu.dot_dimension_numbers<[1], [0], [0], [1], [0, 0, 1, 1], [], []>} : vector<2x64xbf16>, vector<64x32xbf16>, vector<2x32xf32> -> vector<2x32xf32>
    %c0_90 = arith.constant 0 : index
    %c0_91 = arith.constant 0 : index
    %175 = vector.load %arg26[%c0_90, %c0_91] : memref<1x32xf32, #tpu.memory_space<vmem>>, vector<1x32xf32>
    %176 = vector.broadcast %175 : vector<1x32xf32> to vector<2x32xf32>
    %177 = arith.addf %174, %176 : vector<2x32xf32>
    %cst_92 = arith.constant 0.000000e+00 : f32
    %178 = vector.broadcast %cst_92 : f32 to vector<2x32xf32>
    %179 = arith.maximumf %177, %178 : vector<2x32xf32>
    %180 = arith.truncf %179 : vector<2x32xf32> to vector<2x32xbf16>
    %c0_93 = arith.constant 0 : index
    %c0_94 = arith.constant 0 : index
    %181 = vector.load %arg27[%c0_93, %c0_94] : memref<32x128xbf16, #tpu.memory_space<vmem>>, vector<32x128xbf16>
    %cst_95 = arith.constant dense<0.000000e+00> : vector<2x128xf32>
    %182 = tpu.matmul %180, %181, %cst_95 {dimension_numbers = #tpu.dot_dimension_numbers<[1], [0], [0], [1], [0, 0, 1, 1], [], []>} : vector<2x32xbf16>, vector<32x128xbf16>, vector<2x128xf32> -> vector<2x128xf32>
    %c0_96 = arith.constant 0 : index
    %c0_97 = arith.constant 0 : index
    %183 = vector.load %arg28[%c0_96, %c0_97] : memref<1x128xf32, #tpu.memory_space<vmem>>, vector<1x128xf32>
    %184 = vector.broadcast %183 : vector<1x128xf32> to vector<2x128xf32>
    %185 = arith.addf %182, %184 : vector<2x128xf32>
    %c0_98 = arith.constant 0 : index
    %c0_99 = arith.constant 0 : index
    %186 = vector.load %arg29[%c0_98, %c0_99] : memref<2x128xf32, #tpu.memory_space<vmem>>, vector<2x128xf32>
    tpu.vector_store %arg29[%c0_98, %c0_99], %185 {strides = array<i32>} : memref<2x128xf32, #tpu.memory_space<vmem>>, vector<2x128xf32>,
    return
  }
  func.func @transform_0(%arg0: i32) -> (i32, i32) {
    %c0_i32 = arith.constant 0 : i32
    %c0_i32_0 = arith.constant 0 : i32
    return %arg0, %c0_i32 : i32, i32
  }
  func.func @transform_1(%arg0: i32) -> (i32, i32, i32) {
    %c0_i32 = arith.constant 0 : i32
    %c0_i32_0 = arith.constant 0 : i32
    %c0_i32_1 = arith.constant 0 : i32
    return %arg0, %c0_i32, %c0_i32_0 : i32, i32, i32
  }
  func.func @transform_2(%arg0: i32) -> (i32, i32) {
    %c0_i32 = arith.constant 0 : i32
    %c0_i32_0 = arith.constant 0 : i32
    return %arg0, %c0_i32 : i32, i32
  }
  func.func @transform_3(%arg0: i32) -> (i32, i32) {
    %c0_i32 = arith.constant 0 : i32
    %c0_i32_0 = arith.constant 0 : i32
    %c0_i32_1 = arith.constant 0 : i32
    return %c0_i32, %c0_i32_0 : i32, i32
  }
  func.func @transform_4(%arg0: i32) -> (i32, i32) {
    %c0_i32 = arith.constant 0 : i32
    %c0_i32_0 = arith.constant 0 : i32
    %c0_i32_1 = arith.constant 0 : i32
    return %c0_i32, %c0_i32_0 : i32, i32
  }
  func.func @transform_5(%arg0: i32) -> (i32, i32) {
    %c0_i32 = arith.constant 0 : i32
    %c0_i32_0 = arith.constant 0 : i32
    %c0_i32_1 = arith.constant 0 : i32
    return %c0_i32, %c0_i32_0 : i32, i32
  }
  func.func @transform_6(%arg0: i32) -> (i32, i32) {
    %c0_i32 = arith.constant 0 : i32
    %c0_i32_0 = arith.constant 0 : i32
    %c0_i32_1 = arith.constant 0 : i32
    return %c0_i32, %c0_i32_0 : i32, i32
  }
  func.func @transform_7(%arg0: i32) -> (i32, i32) {
    %c0_i32 = arith.constant 0 : i32
    %c0_i32_0 = arith.constant 0 : i32
    %c0_i32_1 = arith.constant 0 : i32
    return %c0_i32, %c0_i32_0 : i32, i32
  }
  func.func @transform_8(%arg0: i32) -> (i32, i32) {
    %c0_i32 = arith.constant 0 : i32
    %c0_i32_0 = arith.constant 0 : i32
    %c0_i32_1 = arith.constant 0 : i32
    return %c0_i32, %c0_i32_0 : i32, i32
  }
  func.func @transform_9(%arg0: i32) -> (i32, i32) {
    %c0_i32 = arith.constant 0 : i32
    %c0_i32_0 = arith.constant 0 : i32
    %c0_i32_1 = arith.constant 0 : i32
    return %c0_i32, %c0_i32_0 : i32, i32
  }
  func.func @transform_10(%arg0: i32) -> (i32, i32) {
    %c0_i32 = arith.constant 0 : i32
    %c0_i32_0 = arith.constant 0 : i32
    %c0_i32_1 = arith.constant 0 : i32
    return %c0_i32, %c0_i32_0 : i32, i32
  }
  func.func @transform_11(%arg0: i32) -> (i32, i32) {
    %c0_i32 = arith.constant 0 : i32
    %c0_i32_0 = arith.constant 0 : i32
    %c0_i32_1 = arith.constant 0 : i32
    return %c0_i32, %c0_i32_0 : i32, i32
  }
  func.func @transform_12(%arg0: i32) -> (i32, i32) {
    %c0_i32 = arith.constant 0 : i32
    %c0_i32_0 = arith.constant 0 : i32
    %c0_i32_1 = arith.constant 0 : i32
    return %c0_i32, %c0_i32_0 : i32, i32
  }
  func.func @transform_13(%arg0: i32) -> (i32, i32) {
    %c0_i32 = arith.constant 0 : i32
    %c0_i32_0 = arith.constant 0 : i32
    %c0_i32_1 = arith.constant 0 : i32
    return %c0_i32, %c0_i32_0 : i32, i32
  }
  func.func @transform_14(%arg0: i32) -> (i32, i32) {
    %c0_i32 = arith.constant 0 : i32
    %c0_i32_0 = arith.constant 0 : i32
    %c0_i32_1 = arith.constant 0 : i32
    return %c0_i32, %c0_i32_0 : i32, i32
  }
  func.func @transform_15(%arg0: i32) -> (i32, i32) {
    %c0_i32 = arith.constant 0 : i32
    %c0_i32_0 = arith.constant 0 : i32
    %c0_i32_1 = arith.constant 0 : i32
    return %c0_i32, %c0_i32_0 : i32, i32
  }
  func.func @transform_16(%arg0: i32) -> (i32, i32) {
    %c0_i32 = arith.constant 0 : i32
    %c0_i32_0 = arith.constant 0 : i32
    %c0_i32_1 = arith.constant 0 : i32
    return %c0_i32, %c0_i32_0 : i32, i32
  }
  func.func @transform_17(%arg0: i32) -> (i32, i32) {
    %c0_i32 = arith.constant 0 : i32
    %c0_i32_0 = arith.constant 0 : i32
    %c0_i32_1 = arith.constant 0 : i32
    return %c0_i32, %c0_i32_0 : i32, i32
  }
  func.func @transform_18(%arg0: i32) -> (i32, i32) {
    %c0_i32 = arith.constant 0 : i32
    %c0_i32_0 = arith.constant 0 : i32
    %c0_i32_1 = arith.constant 0 : i32
    return %c0_i32, %c0_i32_0 : i32, i32
  }
  func.func @transform_19(%arg0: i32) -> (i32, i32) {
    %c0_i32 = arith.constant 0 : i32
    %c0_i32_0 = arith.constant 0 : i32
    %c0_i32_1 = arith.constant 0 : i32
    return %c0_i32, %c0_i32_0 : i32, i32
  }
  func.func @transform_20(%arg0: i32) -> (i32, i32) {
    %c0_i32 = arith.constant 0 : i32
    %c0_i32_0 = arith.constant 0 : i32
    %c0_i32_1 = arith.constant 0 : i32
    return %c0_i32, %c0_i32_0 : i32, i32
  }
  func.func @transform_21(%arg0: i32) -> (i32, i32) {
    %c0_i32 = arith.constant 0 : i32
    %c0_i32_0 = arith.constant 0 : i32
    %c0_i32_1 = arith.constant 0 : i32
    return %c0_i32, %c0_i32_0 : i32, i32
  }
  func.func @transform_22(%arg0: i32) -> (i32, i32) {
    %c0_i32 = arith.constant 0 : i32
    %c0_i32_0 = arith.constant 0 : i32
    %c0_i32_1 = arith.constant 0 : i32
    return %c0_i32, %c0_i32_0 : i32, i32
  }
  func.func @transform_23(%arg0: i32) -> (i32, i32) {
    %c0_i32 = arith.constant 0 : i32
    %c0_i32_0 = arith.constant 0 : i32
    %c0_i32_1 = arith.constant 0 : i32
    return %c0_i32, %c0_i32_0 : i32, i32
  }
  func.func @transform_24(%arg0: i32) -> (i32, i32) {
    %c0_i32 = arith.constant 0 : i32
    %c0_i32_0 = arith.constant 0 : i32
    %c0_i32_1 = arith.constant 0 : i32
    return %c0_i32, %c0_i32_0 : i32, i32
  }
  func.func @transform_25(%arg0: i32) -> (i32, i32) {
    %c0_i32 = arith.constant 0 : i32
    %c0_i32_0 = arith.constant 0 : i32
    %c0_i32_1 = arith.constant 0 : i32
    return %c0_i32, %c0_i32_0 : i32, i32
  }
  func.func @transform_26(%arg0: i32) -> (i32, i32) {
    %c0_i32 = arith.constant 0 : i32
    %c0_i32_0 = arith.constant 0 : i32
    %c0_i32_1 = arith.constant 0 : i32
    return %c0_i32, %c0_i32_0 : i32, i32
  }
  func.func @transform_27(%arg0: i32) -> (i32, i32) {
    %c0_i32 = arith.constant 0 : i32
    %c0_i32_0 = arith.constant 0 : i32
    %c0_i32_1 = arith.constant 0 : i32
    return %c0_i32, %c0_i32_0 : i32, i32
  }
  func.func @transform_28(%arg0: i32) -> (i32, i32) {
    %c0_i32 = arith.constant 0 : i32
    %c0_i32_0 = arith.constant 0 : i32
    return %arg0, %c0_i32 : i32, i32
  }
}

</mosaic_0001>

<llo_original>
// kernel: tpu_custom_call.1
$region0: #{tpu_custom_call.1}
  #allocation0 [shape = 'u32[]', space=smem, size = 0x4, offset = 0x4, fixed_abs, tag = 'smem constant byte address 0x4 - core index']
  #allocation1 [shape = 'u32[144,128]{1,0:T(1,128)}', space=vmem, size = 0x12000, scoped, tag = 'internal scratch']
  %s0 = inlined_call_operand.vmem [shape: bf16[512,10], index: 0, kind: input, shape index: {}]
  %s1 = inlined_call_operand.vmem [shape: f32[16,32,1], index: 1, kind: input, shape index: {}]
  %s2 = inlined_call_operand.vmem [shape: bf16[16,4], index: 2, kind: input, shape index: {}]
  %s3 = inlined_call_operand.vmem [shape: f32[8,128], index: 3, kind: input, shape index: {}]
  %s4 = inlined_call_operand.vmem [shape: bf16[10,32], index: 4, kind: input, shape index: {}]
  %s5 = inlined_call_operand.vmem [shape: f32[1,32], index: 5, kind: input, shape index: {}]
  %s6 = inlined_call_operand.vmem [shape: bf16[32,64], index: 6, kind: input, shape index: {}]
  %s7 = inlined_call_operand.vmem [shape: f32[1,64], index: 7, kind: input, shape index: {}]
  %s8 = inlined_call_operand.vmem [shape: bf16[64,128], index: 8, kind: input, shape index: {}]
  %s9 = inlined_call_operand.vmem [shape: bf16[64,128], index: 9, kind: input, shape index: {}]
  %s10 = inlined_call_operand.vmem [shape: bf16[4,128], index: 10, kind: input, shape index: {}]
  %s11 = inlined_call_operand.vmem [shape: f32[1,128], index: 11, kind: input, shape index: {}]
  %s12 = inlined_call_operand.vmem [shape: f32[1,128], index: 12, kind: input, shape index: {}]
  %s13 = inlined_call_operand.vmem [shape: f32[1,128], index: 13, kind: input, shape index: {}]
  %s14 = inlined_call_operand.vmem [shape: bf16[128,4], index: 14, kind: input, shape index: {}]
  %s15 = inlined_call_operand.vmem [shape: f32[1,4], index: 15, kind: input, shape index: {}]
  %s16 = inlined_call_operand.vmem [shape: bf16[512,128], index: 16, kind: input, shape index: {}]
  %s17 = inlined_call_operand.vmem [shape: f32[1,128], index: 17, kind: input, shape index: {}]
  %s18 = inlined_call_operand.vmem [shape: bf16[128,128], index: 18, kind: input, shape index: {}]
  %s19 = inlined_call_operand.vmem [shape: f32[1,128], index: 19, kind: input, shape index: {}]
  %s20 = inlined_call_operand.vmem [shape: f32[1,128], index: 20, kind: input, shape index: {}]
  %s21 = inlined_call_operand.vmem [shape: f32[1,128], index: 21, kind: input, shape index: {}]
  %s22 = inlined_call_operand.vmem [shape: bf16[128,64], index: 22, kind: input, shape index: {}]
  %s23 = inlined_call_operand.vmem [shape: f32[1,64], index: 23, kind: input, shape index: {}]
  %s24 = inlined_call_operand.vmem [shape: bf16[64,32], index: 24, kind: input, shape index: {}]
  %s25 = inlined_call_operand.vmem [shape: f32[1,32], index: 25, kind: input, shape index: {}]
  %s26 = inlined_call_operand.vmem [shape: bf16[32,128], index: 26, kind: input, shape index: {}]
  %s27 = inlined_call_operand.vmem [shape: f32[1,128], index: 27, kind: input, shape index: {}]
  %s28 = inlined_call_operand.hbm [shape: f32[2,128], index: 28, kind: output, shape index: {}]
  %s29 = sld [smem:[#allocation0]]
  $region122: #{tpu_custom_call.1} parent=0
    _
  %s31 = ssub.s32 1, %s29
  %s32 = scalar_select 0, %s31, %s29
  $region1: #{tpu_custom_call.1} parent=0
    #allocation2 [shape = 'u8[1024]{0}', space=vmem, size = 0x400, scoped, tag = 'output window, operand 0, single buffered']
    #allocation3 [shape = 's32[1]{0}', space=sflag, size = 0x4, scoped, tag = 'scoped memory for tpu_custom_call.1']
    %33 = vsyncpa [#allocation3], 0
    // Predicated region
    $region2: #{tpu_custom_call.1} parent=1 // pred_check
      _
    $region3: #{tpu_custom_call.1} parent=1 // pred_check_branch
      %35 = sbr.rel (0) target = $region5
    $region4: #{tpu_custom_call.1} parent=1 // pred_region
      _
    $region5: #{tpu_custom_call.1} parent=1 // pred_fallthru
      _
    // Predicated region
    $region6: #{tpu_custom_call.1} parent=1 // pred_check
      _
    $region7: #{tpu_custom_call.1} parent=1 // pred_check_branch
      %37 = sbr.rel (0) target = $region9
    $region8: #{tpu_custom_call.1} parent=1 // pred_region
      _
    $region9: #{tpu_custom_call.1} parent=1 // pred_fallthru
      _
    // Predicated region
    $region10: #{tpu_custom_call.1} parent=1 // pred_check
      _
    $region11: #{tpu_custom_call.1} parent=1 // pred_check_branch
      %39 = sbr.rel (0) target = $region13
    $region12: #{tpu_custom_call.1} parent=1 // pred_region
      _
    $region13: #{tpu_custom_call.1} parent=1 // pred_fallthru
      _
    // Predicated region
    $region14: #{tpu_custom_call.1} parent=1 // pred_check
      _
    $region15: #{tpu_custom_call.1} parent=1 // pred_check_branch
      %41 = sbr.rel (0) target = $region17
    $region16: #{tpu_custom_call.1} parent=1 // pred_region
      _
    $region17: #{tpu_custom_call.1} parent=1 // pred_fallthru
      _
    // Predicated region
    $region18: #{tpu_custom_call.1} parent=1 // pred_check
      _
    $region19: #{tpu_custom_call.1} parent=1 // pred_check_branch
      %43 = sbr.rel (0) target = $region21
    $region20: #{tpu_custom_call.1} parent=1 // pred_region
      _
    $region21: #{tpu_custom_call.1} parent=1 // pred_fallthru
      _
    // Predicated region
    $region22: #{tpu_custom_call.1} parent=1 // pred_check
      _
    $region23: #{tpu_custom_call.1} parent=1 // pred_check_branch
      %45 = sbr.rel (0) target = $region25
    $region24: #{tpu_custom_call.1} parent=1 // pred_region
      _
    $region25: #{tpu_custom_call.1} parent=1 // pred_fallthru
      _
    // Predicated region
    $region26: #{tpu_custom_call.1} parent=1 // pred_check
      _
    $region27: #{tpu_custom_call.1} parent=1 // pred_check_branch
      %47 = sbr.rel (0) target = $region29
    $region28: #{tpu_custom_call.1} parent=1 // pred_region
      _
    $region29: #{tpu_custom_call.1} parent=1 // pred_fallthru
      _
    // Predicated region
    $region30: #{tpu_custom_call.1} parent=1 // pred_check
      _
    $region31: #{tpu_custom_call.1} parent=1 // pred_check_branch
      %49 = sbr.rel (0) target = $region33
    $region32: #{tpu_custom_call.1} parent=1 // pred_region
      _
    $region33: #{tpu_custom_call.1} parent=1 // pred_fallthru
      _
    // Predicated region
    $region34: #{tpu_custom_call.1} parent=1 // pred_check
      _
    $region35: #{tpu_custom_call.1} parent=1 // pred_check_branch
      %51 = sbr.rel (0) target = $region37
    $region36: #{tpu_custom_call.1} parent=1 // pred_region
      _
    $region37: #{tpu_custom_call.1} parent=1 // pred_fallthru
      _
    // Predicated region
    $region38: #{tpu_custom_call.1} parent=1 // pred_check
      _
    $region39: #{tpu_custom_call.1} parent=1 // pred_check_branch
      %53 = sbr.rel (0) target = $region41
    $region40: #{tpu_custom_call.1} parent=1 // pred_region
      _
    $region41: #{tpu_custom_call.1} parent=1 // pred_fallthru
      _
    // Predicated region
    $region42: #{tpu_custom_call.1} parent=1 // pred_check
      _
    $region43: #{tpu_custom_call.1} parent=1 // pred_check_branch
      %55 = sbr.rel (0) target = $region45
    $region44: #{tpu_custom_call.1} parent=1 // pred_region
      _
    $region45: #{tpu_custom_call.1} parent=1 // pred_fallthru
      _
    // Predicated region
    $region46: #{tpu_custom_call.1} parent=1 // pred_check
      _
    $region47: #{tpu_custom_call.1} parent=1 // pred_check_branch
      %57 = sbr.rel (0) target = $region49
    $region48: #{tpu_custom_call.1} parent=1 // pred_region
      _
    $region49: #{tpu_custom_call.1} parent=1 // pred_fallthru
      _
    // Predicated region
    $region50: #{tpu_custom_call.1} parent=1 // pred_check
      _
    $region51: #{tpu_custom_call.1} parent=1 // pred_check_branch
      %59 = sbr.rel (0) target = $region53
    $region52: #{tpu_custom_call.1} parent=1 // pred_region
      _
    $region53: #{tpu_custom_call.1} parent=1 // pred_fallthru
      _
    // Predicated region
    $region54: #{tpu_custom_call.1} parent=1 // pred_check
      _
    $region55: #{tpu_custom_call.1} parent=1 // pred_check_branch
      %61 = sbr.rel (0) target = $region57
    $region56: #{tpu_custom_call.1} parent=1 // pred_region
      _
    $region57: #{tpu_custom_call.1} parent=1 // pred_fallthru
      _
    // Predicated region
    $region58: #{tpu_custom_call.1} parent=1 // pred_check
      _
    $region59: #{tpu_custom_call.1} parent=1 // pred_check_branch
      %63 = sbr.rel (0) target = $region61
    $region60: #{tpu_custom_call.1} parent=1 // pred_region
      _
    $region61: #{tpu_custom_call.1} parent=1 // pred_fallthru
      _
    // Predicated region
    $region62: #{tpu_custom_call.1} parent=1 // pred_check
      _
    $region63: #{tpu_custom_call.1} parent=1 // pred_check_branch
      %65 = sbr.rel (0) target = $region65
    $region64: #{tpu_custom_call.1} parent=1 // pred_region
      _
    $region65: #{tpu_custom_call.1} parent=1 // pred_fallthru
      _
    // Predicated region
    $region66: #{tpu_custom_call.1} parent=1 // pred_check
      _
    $region67: #{tpu_custom_call.1} parent=1 // pred_check_branch
      %67 = sbr.rel (0) target = $region69
    $region68: #{tpu_custom_call.1} parent=1 // pred_region
      _
    $region69: #{tpu_custom_call.1} parent=1 // pred_fallthru
      _
    // Predicated region
    $region70: #{tpu_custom_call.1} parent=1 // pred_check
      _
    $region71: #{tpu_custom_call.1} parent=1 // pred_check_branch
      %69 = sbr.rel (0) target = $region73
    $region72: #{tpu_custom_call.1} parent=1 // pred_region
      _
    $region73: #{tpu_custom_call.1} parent=1 // pred_fallthru
      _
    // Predicated region
    $region74: #{tpu_custom_call.1} parent=1 // pred_check
      _
    $region75: #{tpu_custom_call.1} parent=1 // pred_check_branch
      %71 = sbr.rel (0) target = $region77
    $region76: #{tpu_custom_call.1} parent=1 // pred_region
      _
    $region77: #{tpu_custom_call.1} parent=1 // pred_fallthru
      _
    // Predicated region
    $region78: #{tpu_custom_call.1} parent=1 // pred_check
      _
    $region79: #{tpu_custom_call.1} parent=1 // pred_check_branch
      %73 = sbr.rel (0) target = $region81
    $region80: #{tpu_custom_call.1} parent=1 // pred_region
      _
    $region81: #{tpu_custom_call.1} parent=1 // pred_fallthru
      _
    // Predicated region
    $region82: #{tpu_custom_call.1} parent=1 // pred_check
      _
    $region83: #{tpu_custom_call.1} parent=1 // pred_check_branch
      %75 = sbr.rel (0) target = $region85
    $region84: #{tpu_custom_call.1} parent=1 // pred_region
      _
    $region85: #{tpu_custom_call.1} parent=1 // pred_fallthru
      _
    // Predicated region
    $region86: #{tpu_custom_call.1} parent=1 // pred_check
      _
    $region87: #{tpu_custom_call.1} parent=1 // pred_check_branch
      %77 = sbr.rel (0) target = $region89
    $region88: #{tpu_custom_call.1} parent=1 // pred_region
      _
    $region89: #{tpu_custom_call.1} parent=1 // pred_fallthru
      _
    // Predicated region
    $region90: #{tpu_custom_call.1} parent=1 // pred_check
      _
    $region91: #{tpu_custom_call.1} parent=1 // pred_check_branch
      %79 = sbr.rel (0) target = $region93
    $region92: #{tpu_custom_call.1} parent=1 // pred_region
      _
    $region93: #{tpu_custom_call.1} parent=1 // pred_fallthru
      _
    // Predicated region
    $region94: #{tpu_custom_call.1} parent=1 // pred_check
      _
    $region95: #{tpu_custom_call.1} parent=1 // pred_check_branch
      %81 = sbr.rel (0) target = $region97
    $region96: #{tpu_custom_call.1} parent=1 // pred_region
      _
    $region97: #{tpu_custom_call.1} parent=1 // pred_fallthru
      _
    // Predicated region
    $region98: #{tpu_custom_call.1} parent=1 // pred_check
      _
    $region99: #{tpu_custom_call.1} parent=1 // pred_check_branch
      %83 = sbr.rel (0) target = $region101
    $region100: #{tpu_custom_call.1} parent=1 // pred_region
      _
    $region101: #{tpu_custom_call.1} parent=1 // pred_fallthru
      _
    // Predicated region
    $region102: #{tpu_custom_call.1} parent=1 // pred_check
      _
    $region103: #{tpu_custom_call.1} parent=1 // pred_check_branch
      %85 = sbr.rel (0) target = $region105
    $region104: #{tpu_custom_call.1} parent=1 // pred_region
      _
    $region105: #{tpu_custom_call.1} parent=1 // pred_fallthru
      _
    // Predicated region
    $region106: #{tpu_custom_call.1} parent=1 // pred_check
      _
    $region107: #{tpu_custom_call.1} parent=1 // pred_check_branch
      %87 = sbr.rel (0) target = $region109
    $region108: #{tpu_custom_call.1} parent=1 // pred_region
      _
    $region109: #{tpu_custom_call.1} parent=1 // pred_fallthru
      _
    // Predicated region
    $region110: #{tpu_custom_call.1} parent=1 // pred_check
      _
    $region111: #{tpu_custom_call.1} parent=1 // pred_check_branch
      %89 = sbr.rel (0) target = $region113
    $region112: #{tpu_custom_call.1} parent=1 // pred_region
      _
    $region113: #{tpu_custom_call.1} parent=1 // pred_fallthru
      _
    %v91 = vld [vmem:[%s0] sm:$0xf]
    %v92 = vld [vmem:[%s0 + $0x4] sm:$0xf]
    %v93 = vld [vmem:[%s0 + $0x8] sm:$0xf]
    %v94 = vld [vmem:[%s0 + $0xc] sm:$0xf]
    %v95 = vld [vmem:[%s0 + $0x10] sm:$0xf]
    %v96 = vld [vmem:[%s0 + $0x14] sm:$0xf]
    %v97 = vld [vmem:[%s0 + $0x18] sm:$0xf]
    %v98 = vld [vmem:[%s0 + $0x1c] sm:$0xf]
    %v99 = vld [vmem:[%s0 + $0x20] sm:$0xf]
    %v100 = vld [vmem:[%s0 + $0x24] sm:$0xf]
    %v101 = vld [vmem:[%s0 + $0x28] sm:$0xf]
    %v102 = vld [vmem:[%s0 + $0x2c] sm:$0xf]
    %v103 = vld [vmem:[%s0 + $0x30] sm:$0xf]
    %v104 = vld [vmem:[%s0 + $0x34] sm:$0xf]
    %v105 = vld [vmem:[%s0 + $0x38] sm:$0xf]
    %v106 = vld [vmem:[%s0 + $0x3c] sm:$0xf]
    %v107 = vld [vmem:[%s0 + $0x40] sm:$0xf]
    %v108 = vld [vmem:[%s0 + $0x44] sm:$0xf]
    %v109 = vld [vmem:[%s0 + $0x48] sm:$0xf]
    %v110 = vld [vmem:[%s0 + $0x4c] sm:$0xf]
    %v111 = vld [vmem:[%s0 + $0x50] sm:$0xf]
    %v112 = vld [vmem:[%s0 + $0x54] sm:$0xf]
    %v113 = vld [vmem:[%s0 + $0x58] sm:$0xf]
    %v114 = vld [vmem:[%s0 + $0x5c] sm:$0xf]
    %v115 = vld [vmem:[%s0 + $0x60] sm:$0xf]
    %v116 = vld [vmem:[%s0 + $0x64] sm:$0xf]
    %v117 = vld [vmem:[%s0 + $0x68] sm:$0xf]
    %v118 = vld [vmem:[%s0 + $0x6c] sm:$0xf]
    %v119 = vld [vmem:[%s0 + $0x70] sm:$0xf]
    %v120 = vld [vmem:[%s0 + $0x74] sm:$0xf]
    %v121 = vld [vmem:[%s0 + $0x78] sm:$0xf]
    %v122 = vld [vmem:[%s0 + $0x7c] sm:$0xf]
    %v123 = vld [vmem:[%s0 + $0x80] sm:$0xf]
    %v124 = vld [vmem:[%s0 + $0x84] sm:$0xf]
    %v125 = vld [vmem:[%s0 + $0x88] sm:$0xf]
    %v126 = vld [vmem:[%s0 + $0x8c] sm:$0xf]
    %v127 = vld [vmem:[%s0 + $0x90] sm:$0xf]
    %v128 = vld [vmem:[%s0 + $0x94] sm:$0xf]
    %v129 = vld [vmem:[%s0 + $0x98] sm:$0xf]
    %v130 = vld [vmem:[%s0 + $0x9c] sm:$0xf]
    %v131 = vld [vmem:[%s0 + $0xa0] sm:$0xf]
    %v132 = vld [vmem:[%s0 + $0xa4] sm:$0xf]
    %v133 = vld [vmem:[%s0 + $0xa8] sm:$0xf]
    %v134 = vld [vmem:[%s0 + $0xac] sm:$0xf]
    %v135 = vld [vmem:[%s0 + $0xb0] sm:$0xf]
    %v136 = vld [vmem:[%s0 + $0xb4] sm:$0xf]
    %v137 = vld [vmem:[%s0 + $0xb8] sm:$0xf]
    %v138 = vld [vmem:[%s0 + $0xbc] sm:$0xf]
    %v139 = vld [vmem:[%s0 + $0xc0] sm:$0xf]
    %v140 = vld [vmem:[%s0 + $0xc4] sm:$0xf]
    %v141 = vld [vmem:[%s0 + $0xc8] sm:$0xf]
    %v142 = vld [vmem:[%s0 + $0xcc] sm:$0xf]
    %v143 = vld [vmem:[%s0 + $0xd0] sm:$0xf]
    %v144 = vld [vmem:[%s0 + $0xd4] sm:$0xf]
    %v145 = vld [vmem:[%s0 + $0xd8] sm:$0xf]
    %v146 = vld [vmem:[%s0 + $0xdc] sm:$0xf]
    %v147 = vld [vmem:[%s0 + $0xe0] sm:$0xf]
    %v148 = vld [vmem:[%s0 + $0xe4] sm:$0xf]
    %v149 = vld [vmem:[%s0 + $0xe8] sm:$0xf]
    %v150 = vld [vmem:[%s0 + $0xec] sm:$0xf]
    %v151 = vld [vmem:[%s0 + $0xf0] sm:$0xf]
    %v152 = vld [vmem:[%s0 + $0xf4] sm:$0xf]
    %v153 = vld [vmem:[%s0 + $0xf8] sm:$0xf]
    %v154 = vld [vmem:[%s0 + $0xfc] sm:$0xf]
    %v155 = vld [vmem:[%s4] sm:$0xf]
    %v156 = vld [vmem:[%s4 + $0x4] sm:$0x1]
    %v157 = vld [vmem:[%s5] sm:$0x1]
    %v159 = vlaneseq
    %v160 = vshrl.u32 %v159, 7
    %v161 = vsub.s32 0, %v160
    %v162 = vrot.slane %v157, %v161
    %v228 = vunpack.c.l.b16 %v91
    %v229 = vunpack.c.l.b16 %v92
    %v230 = vunpack.c.l.b16 %v93
    %v231 = vunpack.c.l.b16 %v94
    %v232 = vunpack.c.l.b16 %v95
    %v233 = vunpack.c.l.b16 %v96
    %v234 = vunpack.c.l.b16 %v97
    %v235 = vunpack.c.l.b16 %v98
    %v236 = vunpack.c.l.b16 %v99
    %v237 = vunpack.c.l.b16 %v100
    %v238 = vunpack.c.l.b16 %v101
    %v239 = vunpack.c.l.b16 %v102
    %v240 = vunpack.c.l.b16 %v103
    %v241 = vunpack.c.l.b16 %v104
    %v242 = vunpack.c.l.b16 %v105
    %v243 = vunpack.c.l.b16 %v106
    %v244 = vunpack.c.l.b16 %v107
    %v245 = vunpack.c.l.b16 %v108
    %v246 = vunpack.c.l.b16 %v109
    %v247 = vunpack.c.l.b16 %v110
    %v248 = vunpack.c.l.b16 %v111
    %v249 = vunpack.c.l.b16 %v112
    %v250 = vunpack.c.l.b16 %v113
    %v251 = vunpack.c.l.b16 %v114
    %v252 = vunpack.c.l.b16 %v115
    %v253 = vunpack.c.l.b16 %v116
    %v254 = vunpack.c.l.b16 %v117
    %v255 = vunpack.c.l.b16 %v118
    %v256 = vunpack.c.l.b16 %v119
    %v257 = vunpack.c.l.b16 %v120
    %v258 = vunpack.c.l.b16 %v121
    %v259 = vunpack.c.l.b16 %v122
    %v260 = vunpack.c.l.b16 %v123
    %v261 = vunpack.c.l.b16 %v124
    %v262 = vunpack.c.l.b16 %v125
    %v263 = vunpack.c.l.b16 %v126
    %v264 = vunpack.c.l.b16 %v127
    %v265 = vunpack.c.l.b16 %v128
    %v266 = vunpack.c.l.b16 %v129
    %v267 = vunpack.c.l.b16 %v130
    %v268 = vunpack.c.l.b16 %v131
    %v269 = vunpack.c.l.b16 %v132
    %v270 = vunpack.c.l.b16 %v133
    %v271 = vunpack.c.l.b16 %v134
    %v272 = vunpack.c.l.b16 %v135
    %v273 = vunpack.c.l.b16 %v136
    %v274 = vunpack.c.l.b16 %v137
    %v275 = vunpack.c.l.b16 %v138
    %v276 = vunpack.c.l.b16 %v139
    %v277 = vunpack.c.l.b16 %v140
    %v278 = vunpack.c.l.b16 %v141
    %v279 = vunpack.c.l.b16 %v142
    %v280 = vunpack.c.l.b16 %v143
    %v281 = vunpack.c.l.b16 %v144
    %v282 = vunpack.c.l.b16 %v145
    %v283 = vunpack.c.l.b16 %v146
    %v284 = vunpack.c.l.b16 %v147
    %v285 = vunpack.c.l.b16 %v148
    %v286 = vunpack.c.l.b16 %v149
    %v287 = vunpack.c.l.b16 %v150
    %v288 = vunpack.c.l.b16 %v151
    %v289 = vunpack.c.l.b16 %v152
    %v290 = vunpack.c.l.b16 %v153
    %v291 = vunpack.c.l.b16 %v154
    %v292 = vpack.c.b16 %v229, %v228
    %v293 = vpack.c.b16 %v231, %v230
    %v294 = vpack.c.b16 %v233, %v232
    %v295 = vpack.c.b16 %v235, %v234
    %v296 = vpack.c.b16 %v237, %v236
    %v297 = vpack.c.b16 %v239, %v238
    %v298 = vpack.c.b16 %v241, %v240
    %v299 = vpack.c.b16 %v243, %v242
    %v300 = vpack.c.b16 %v245, %v244
    %v301 = vpack.c.b16 %v247, %v246
    %v302 = vpack.c.b16 %v249, %v248
    %v303 = vpack.c.b16 %v251, %v250
    %v304 = vpack.c.b16 %v253, %v252
    %v305 = vpack.c.b16 %v255, %v254
    %v306 = vpack.c.b16 %v257, %v256
    %v307 = vpack.c.b16 %v259, %v258
    %v308 = vpack.c.b16 %v261, %v260
    %v309 = vpack.c.b16 %v263, %v262
    %v310 = vpack.c.b16 %v265, %v264
    %v311 = vpack.c.b16 %v267, %v266
    %v312 = vpack.c.b16 %v269, %v268
    %v313 = vpack.c.b16 %v271, %v270
    %v314 = vpack.c.b16 %v273, %v272
    %v315 = vpack.c.b16 %v275, %v274
    %v316 = vpack.c.b16 %v277, %v276
    %v317 = vpack.c.b16 %v279, %v278
    %v318 = vpack.c.b16 %v281, %v280
    %v319 = vpack.c.b16 %v283, %v282
    %v320 = vpack.c.b16 %v285, %v284
    %v321 = vpack.c.b16 %v287, %v286
    %v322 = vpack.c.b16 %v289, %v288
    %v323 = vpack.c.b16 %v291, %v290
    %v326 = vunpack.c.l.b16 %v155
    %v327 = vunpack.c.l.b16 %v156
    %v328 = vpack.c.b16 %v327, %v326
    %vm329 = vcmask 80896
    %v331 = vsel %vm329, %v292, 0
    %v334 = vsel %vm329, %v293, 0
    %v337 = vsel %vm329, %v294, 0
    %v340 = vsel %vm329, %v295, 0
    %v343 = vsel %vm329, %v296, 0
    %v346 = vsel %vm329, %v297, 0
    %v349 = vsel %vm329, %v298, 0
    %v352 = vsel %vm329, %v299, 0
    %v355 = vsel %vm329, %v300, 0
    %v358 = vsel %vm329, %v301, 0
    %v361 = vsel %vm329, %v302, 0
    %v364 = vsel %vm329, %v303, 0
    %v367 = vsel %vm329, %v304, 0
    %v370 = vsel %vm329, %v305, 0
    %v373 = vsel %vm329, %v306, 0
    %v376 = vsel %vm329, %v307, 0
    %v379 = vsel %vm329, %v308, 0
    %v382 = vsel %vm329, %v309, 0
    %v385 = vsel %vm329, %v310, 0
    %v388 = vsel %vm329, %v311, 0
    %v391 = vsel %vm329, %v312, 0
    %v394 = vsel %vm329, %v313, 0
    %v397 = vsel %vm329, %v314, 0
    %v400 = vsel %vm329, %v315, 0
    %v403 = vsel %vm329, %v316, 0
    %v406 = vsel %vm329, %v317, 0
    %v409 = vsel %vm329, %v318, 0
    %v412 = vsel %vm329, %v319, 0
    %v415 = vsel %vm329, %v320, 0
    %v418 = vsel %vm329, %v321, 0
    %v421 = vsel %vm329, %v322, 0
    %v424 = vsel %vm329, %v323, 0
    %vm426 = vcmask 1044480
    %v428 = vsel %vm426, %v328, 0
    %430 = vmatprep.subr.bf16.mxu0 0
    %431 = vmatpush1.bf16.msra.mxu0 %v428
    %432 = vmatprep.subr.bf16.mxu0 0
    %433 = vmatpush1.bf16.msra.mxu0 0
    %434 = vmatprep.subr.bf16.mxu0 0
    %435 = vmatpush1.bf16.msra.mxu0 0
    %436 = vmatprep.subr.bf16.mxu0 0
    %437 = vmatpush1.bf16.msra.mxu0 0
    %438 = vmatprep.subr.bf16.mxu0 0
    %439 = vmatpush1.bf16.msra.mxu0 0
    %440 = vmatprep.subr.bf16.mxu0 0
    %441 = vmatpush1.bf16.msra.mxu0 0
    %442 = vmatprep.subr.bf16.mxu0 0
    %443 = vmatpush1.bf16.msra.mxu0 0
    %444 = vmatprep.subr.bf16.mxu0 0
    %445 = vmatpush1.bf16.msra.mxu0 0
    %446 = vmatprep.subr.bf16.mxu0 0
    %447 = vmatpush1.bf16.msra.mxu0 0
    %448 = vmatprep.subr.bf16.mxu0 0
    %449 = vmatpush1.bf16.msra.mxu0 0
    %450 = vmatprep.subr.bf16.mxu0 0
    %451 = vmatpush1.bf16.msra.mxu0 0
    %452 = vmatprep.subr.bf16.mxu0 0
    %453 = vmatpush1.bf16.msra.mxu0 0
    %454 = vmatprep.subr.bf16.mxu0 0
    %455 = vmatpush1.bf16.msra.mxu0 0
    %456 = vmatprep.subr.bf16.mxu0 0
    %457 = vmatpush1.bf16.msra.mxu0 0
    %458 = vmatprep.subr.bf16.mxu0 0
    %459 = vmatpush1.bf16.msra.mxu0 0
    %460 = vmatprep.subr.bf16.mxu0 0
    %461 = vmatpush1.bf16.msra.mxu0 0
    %462 = vmatprep.mubr.bf16.mxu0 0
    %463 = vmatmul.mubr.bf16.gmra.mrb[0].mxu0 %v331
    %v464 = vpop.f32.mrb[0].mxu0
    %v465 = vadd.f32 %v162, %v464
    %v466 = vpop.f32.mrb[0].mxu0
    %v467 = vpop.f32.mrb[0].mxu0
    %v468 = vadd.f32 %v162, %v467
    %v469 = vpop.f32.mrb[0].mxu0
    %470 = vmatprep.mubr.bf16.mxu0 0
    %471 = vmatmul.mubr.bf16.gmra.mrb[0].mxu0 %v334
    %v472 = vpop.f32.mrb[0].mxu0
    %v473 = vadd.f32 %v162, %v472
    %v474 = vpop.f32.mrb[0].mxu0
    %v475 = vpop.f32.mrb[0].mxu0
    %v476 = vadd.f32 %v162, %v475
    %v477 = vpop.f32.mrb[0].mxu0
    %478 = vmatprep.mubr.bf16.mxu0 0
    %479 = vmatmul.mubr.bf16.gmra.mrb[0].mxu0 %v337
    %v480 = vpop.f32.mrb[0].mxu0
    %v481 = vadd.f32 %v162, %v480
    %v482 = vpop.f32.mrb[0].mxu0
    %v483 = vpop.f32.mrb[0].mxu0
    %v484 = vadd.f32 %v162, %v483
    %v485 = vpop.f32.mrb[0].mxu0
    %486 = vmatprep.mubr.bf16.mxu0 0
    %487 = vmatmul.mubr.bf16.gmra.mrb[0].mxu0 %v340
    %v488 = vpop.f32.mrb[0].mxu0
    %v489 = vadd.f32 %v162, %v488
    %v490 = vpop.f32.mrb[0].mxu0
    %v491 = vpop.f32.mrb[0].mxu0
    %v492 = vadd.f32 %v162, %v491
    %v493 = vpop.f32.mrb[0].mxu0
    %494 = vmatprep.mubr.bf16.mxu0 0
    %495 = vmatmul.mubr.bf16.gmra.mrb[0].mxu0 %v343
    %v496 = vpop.f32.mrb[0].mxu0
    %v497 = vadd.f32 %v162, %v496
    %v498 = vpop.f32.mrb[0].mxu0
    %v499 = vpop.f32.mrb[0].mxu0
    %v500 = vadd.f32 %v162, %v499
    %v501 = vpop.f32.mrb[0].mxu0
    %502 = vmatprep.mubr.bf16.mxu0 0
    %503 = vmatmul.mubr.bf16.gmra.mrb[0].mxu0 %v346
    %v504 = vpop.f32.mrb[0].mxu0
    %v505 = vadd.f32 %v162, %v504
    %v506 = vpop.f32.mrb[0].mxu0
    %v507 = vpop.f32.mrb[0].mxu0
    %v508 = vadd.f32 %v162, %v507
    %v509 = vpop.f32.mrb[0].mxu0
    %510 = vmatprep.mubr.bf16.mxu0 0
    %511 = vmatmul.mubr.bf16.gmra.mrb[0].mxu0 %v349
    %v512 = vpop.f32.mrb[0].mxu0
    %v513 = vadd.f32 %v162, %v512
    %v514 = vpop.f32.mrb[0].mxu0
    %v515 = vpop.f32.mrb[0].mxu0
    %v516 = vadd.f32 %v162, %v515
    %v517 = vpop.f32.mrb[0].mxu0
    %518 = vmatprep.mubr.bf16.mxu0 0
    %519 = vmatmul.mubr.bf16.gmra.mrb[0].mxu0 %v352
    %v520 = vpop.f32.mrb[0].mxu0
    %v521 = vadd.f32 %v162, %v520
    %v522 = vpop.f32.mrb[0].mxu0
    %v523 = vpop.f32.mrb[0].mxu0
    %v524 = vadd.f32 %v162, %v523
    %v525 = vpop.f32.mrb[0].mxu0
    %526 = vmatprep.mubr.bf16.mxu0 0
    %527 = vmatmul.mubr.bf16.gmra.mrb[0].mxu0 %v355
    %v528 = vpop.f32.mrb[0].mxu0
    %v529 = vadd.f32 %v162, %v528
    %v530 = vpop.f32.mrb[0].mxu0
    %v531 = vpop.f32.mrb[0].mxu0
    %v532 = vadd.f32 %v162, %v531
    %v533 = vpop.f32.mrb[0].mxu0
    %534 = vmatprep.mubr.bf16.mxu0 0
    %535 = vmatmul.mubr.bf16.gmra.mrb[0].mxu0 %v358
    %v536 = vpop.f32.mrb[0].mxu0
    %v537 = vadd.f32 %v162, %v536
    %v538 = vpop.f32.mrb[0].mxu0
    %v539 = vpop.f32.mrb[0].mxu0
    %v540 = vadd.f32 %v162, %v539
    %v541 = vpop.f32.mrb[0].mxu0
    %542 = vmatprep.mubr.bf16.mxu0 0
    %543 = vmatmul.mubr.bf16.gmra.mrb[0].mxu0 %v361
    %v544 = vpop.f32.mrb[0].mxu0
    %v545 = vadd.f32 %v162, %v544
    %v546 = vpop.f32.mrb[0].mxu0
    %v547 = vpop.f32.mrb[0].mxu0
    %v548 = vadd.f32 %v162, %v547
    %v549 = vpop.f32.mrb[0].mxu0
    %550 = vmatprep.mubr.bf16.mxu0 0
    %551 = vmatmul.mubr.bf16.gmra.mrb[0].mxu0 %v364
    %v552 = vpop.f32.mrb[0].mxu0
    %v553 = vadd.f32 %v162, %v552
    %v554 = vpop.f32.mrb[0].mxu0
    %v555 = vpop.f32.mrb[0].mxu0
    %v556 = vadd.f32 %v162, %v555
    %v557 = vpop.f32.mrb[0].mxu0
    %558 = vmatprep.mubr.bf16.mxu0 0
    %559 = vmatmul.mubr.bf16.gmra.mrb[0].mxu0 %v367
    %v560 = vpop.f32.mrb[0].mxu0
    %v561 = vadd.f32 %v162, %v560
    %v562 = vpop.f32.mrb[0].mxu0
    %v563 = vpop.f32.mrb[0].mxu0
    %v564 = vadd.f32 %v162, %v563
    %v565 = vpop.f32.mrb[0].mxu0
    %566 = vmatprep.mubr.bf16.mxu0 0
    %567 = vmatmul.mubr.bf16.gmra.mrb[0].mxu0 %v370
    %v568 = vpop.f32.mrb[0].mxu0
    %v569 = vadd.f32 %v162, %v568
    %v570 = vpop.f32.mrb[0].mxu0
    %v571 = vpop.f32.mrb[0].mxu0
    %v572 = vadd.f32 %v162, %v571
    %v573 = vpop.f32.mrb[0].mxu0
    %574 = vmatprep.mubr.bf16.mxu0 0
    %575 = vmatmul.mubr.bf16.gmra.mrb[0].mxu0 %v373
    %v576 = vpop.f32.mrb[0].mxu0
    %v577 = vadd.f32 %v162, %v576
    %v578 = vpop.f32.mrb[0].mxu0
    %v579 = vpop.f32.mrb[0].mxu0
    %v580 = vadd.f32 %v162, %v579
    %v581 = vpop.f32.mrb[0].mxu0
    %582 = vmatprep.mubr.bf16.mxu0 0
    %583 = vmatmul.mubr.bf16.gmra.mrb[0].mxu0 %v376
    %v584 = vpop.f32.mrb[0].mxu0
    %v585 = vadd.f32 %v162, %v584
    %v586 = vpop.f32.mrb[0].mxu0
    %v587 = vpop.f32.mrb[0].mxu0
    %v588 = vadd.f32 %v162, %v587
    %v589 = vpop.f32.mrb[0].mxu0
    %590 = vmatprep.mubr.bf16.mxu0 0
    %591 = vmatmul.mubr.bf16.gmra.mrb[0].mxu0 %v379
    %v592 = vpop.f32.mrb[0].mxu0
    %v593 = vadd.f32 %v162, %v592
    %v594 = vpop.f32.mrb[0].mxu0
    %v595 = vpop.f32.mrb[0].mxu0
    %v596 = vadd.f32 %v162, %v595
    %v597 = vpop.f32.mrb[0].mxu0
    %598 = vmatprep.mubr.bf16.mxu0 0
    %599 = vmatmul.mubr.bf16.gmra.mrb[0].mxu0 %v382
    %v600 = vpop.f32.mrb[0].mxu0
    %v601 = vadd.f32 %v162, %v600
    %v602 = vpop.f32.mrb[0].mxu0
    %v603 = vpop.f32.mrb[0].mxu0
    %v604 = vadd.f32 %v162, %v603
    %v605 = vpop.f32.mrb[0].mxu0
    %606 = vmatprep.mubr.bf16.mxu0 0
    %607 = vmatmul.mubr.bf16.gmra.mrb[0].mxu0 %v385
    %v608 = vpop.f32.mrb[0].mxu0
    %v609 = vadd.f32 %v162, %v608
    %v610 = vpop.f32.mrb[0].mxu0
    %v611 = vpop.f32.mrb[0].mxu0
    %v612 = vadd.f32 %v162, %v611
    %v613 = vpop.f32.mrb[0].mxu0
    %614 = vmatprep.mubr.bf16.mxu0 0
    %615 = vmatmul.mubr.bf16.gmra.mrb[0].mxu0 %v388
    %v616 = vpop.f32.mrb[0].mxu0
    %v617 = vadd.f32 %v162, %v616
    %v618 = vpop.f32.mrb[0].mxu0
    %v619 = vpop.f32.mrb[0].mxu0
    %v620 = vadd.f32 %v162, %v619
    %v621 = vpop.f32.mrb[0].mxu0
    %622 = vmatprep.mubr.bf16.mxu0 0
    %623 = vmatmul.mubr.bf16.gmra.mrb[0].mxu0 %v391
    %v624 = vpop.f32.mrb[0].mxu0
    %v625 = vadd.f32 %v162, %v624
    %v626 = vpop.f32.mrb[0].mxu0
    %v627 = vpop.f32.mrb[0].mxu0
    %v628 = vadd.f32 %v162, %v627
    %v629 = vpop.f32.mrb[0].mxu0
    %630 = vmatprep.mubr.bf16.mxu0 0
    %631 = vmatmul.mubr.bf16.gmra.mrb[0].mxu0 %v394
    %v632 = vpop.f32.mrb[0].mxu0
    %v633 = vadd.f32 %v162, %v632
    %v634 = vpop.f32.mrb[0].mxu0
    %v635 = vpop.f32.mrb[0].mxu0
    %v636 = vadd.f32 %v162, %v635
    %v637 = vpop.f32.mrb[0].mxu0
    %638 = vmatprep.mubr.bf16.mxu0 0
    %639 = vmatmul.mubr.bf16.gmra.mrb[0].mxu0 %v397
    %v640 = vpop.f32.mrb[0].mxu0
    %v641 = vadd.f32 %v162, %v640
    %v642 = vpop.f32.mrb[0].mxu0
    %v643 = vpop.f32.mrb[0].mxu0
    %v644 = vadd.f32 %v162, %v643
    %v645 = vpop.f32.mrb[0].mxu0
    %646 = vmatprep.mubr.bf16.mxu0 0
    %647 = vmatmul.mubr.bf16.gmra.mrb[0].mxu0 %v400
    %v648 = vpop.f32.mrb[0].mxu0
    %v649 = vadd.f32 %v162, %v648
    %v650 = vpop.f32.mrb[0].mxu0
    %v651 = vpop.f32.mrb[0].mxu0
    %v652 = vadd.f32 %v162, %v651
    %v653 = vpop.f32.mrb[0].mxu0
    %654 = vmatprep.mubr.bf16.mxu0 0
    %655 = vmatmul.mubr.bf16.gmra.mrb[0].mxu0 %v403
    %v656 = vpop.f32.mrb[0].mxu0
    %v657 = vadd.f32 %v162, %v656
    %v658 = vpop.f32.mrb[0].mxu0
    %v659 = vpop.f32.mrb[0].mxu0
    %v660 = vadd.f32 %v162, %v659
    %v661 = vpop.f32.mrb[0].mxu0
    %662 = vmatprep.mubr.bf16.mxu0 0
    %663 = vmatmul.mubr.bf16.gmra.mrb[0].mxu0 %v406
    %v664 = vpop.f32.mrb[0].mxu0
    %v665 = vadd.f32 %v162, %v664
    %v666 = vpop.f32.mrb[0].mxu0
    %v667 = vpop.f32.mrb[0].mxu0
    %v668 = vadd.f32 %v162, %v667
    %v669 = vpop.f32.mrb[0].mxu0
    %670 = vmatprep.mubr.bf16.mxu0 0
    %671 = vmatmul.mubr.bf16.gmra.mrb[0].mxu0 %v409
    %v672 = vpop.f32.mrb[0].mxu0
    %v673 = vadd.f32 %v162, %v672
    %v674 = vpop.f32.mrb[0].mxu0
    %v675 = vpop.f32.mrb[0].mxu0
    %v676 = vadd.f32 %v162, %v675
    %v677 = vpop.f32.mrb[0].mxu0
    %678 = vmatprep.mubr.bf16.mxu0 0
    %679 = vmatmul.mubr.bf16.gmra.mrb[0].mxu0 %v412
    %v680 = vpop.f32.mrb[0].mxu0
    %v681 = vadd.f32 %v162, %v680
    %v682 = vpop.f32.mrb[0].mxu0
    %v683 = vpop.f32.mrb[0].mxu0
    %v684 = vadd.f32 %v162, %v683
    %v685 = vpop.f32.mrb[0].mxu0
    %686 = vmatprep.mubr.bf16.mxu0 0
    %687 = vmatmul.mubr.bf16.gmra.mrb[0].mxu0 %v415
    %v688 = vpop.f32.mrb[0].mxu0
    %v689 = vadd.f32 %v162, %v688
    %v690 = vpop.f32.mrb[0].mxu0
    %v691 = vpop.f32.mrb[0].mxu0
    %v692 = vadd.f32 %v162, %v691
    %v693 = vpop.f32.mrb[0].mxu0
    %694 = vmatprep.mubr.bf16.mxu0 0
    %695 = vmatmul.mubr.bf16.gmra.mrb[0].mxu0 %v418
    %v696 = vpop.f32.mrb[0].mxu0
    %v697 = vadd.f32 %v162, %v696
    %v698 = vpop.f32.mrb[0].mxu0
    %v699 = vpop.f32.mrb[0].mxu0
    %v700 = vadd.f32 %v162, %v699
    %v701 = vpop.f32.mrb[0].mxu0
    %702 = vmatprep.mubr.bf16.mxu0 0
    %703 = vmatmul.mubr.bf16.gmra.mrb[0].mxu0 %v421
    %v704 = vpop.f32.mrb[0].mxu0
    %v705 = vadd.f32 %v162, %v704
    %v706 = vpop.f32.mrb[0].mxu0
    %v707 = vpop.f32.mrb[0].mxu0
    %v708 = vadd.f32 %v162, %v707
    %v709 = vpop.f32.mrb[0].mxu0
    %710 = vmatprep.mubr.bf16.mxu0 0
    %711 = vmatmul.mubr.bf16.gmra.mrb[0].mxu0 %v424
    %v712 = vpop.f32.mrb[0].mxu0
    %v713 = vadd.f32 %v162, %v712
    %v714 = vpop.f32.mrb[0].mxu0
    %v715 = vpop.f32.mrb[0].mxu0
    %v716 = vadd.f32 %v162, %v715
    %v717 = vpop.f32.mrb[0].mxu0
    %718 = vdwg.mxu0
    %v719 = vmax.f32 %v465, 0.0
    %v720 = vmax.f32 %v468, 0.0
    %v721 = vmax.f32 %v473, 0.0
    %v722 = vmax.f32 %v476, 0.0
    %v723 = vmax.f32 %v481, 0.0
    %v724 = vmax.f32 %v484, 0.0
    %v725 = vmax.f32 %v489, 0.0
    %v726 = vmax.f32 %v492, 0.0
    %v727 = vmax.f32 %v497, 0.0
    %v728 = vmax.f32 %v500, 0.0
    %v729 = vmax.f32 %v505, 0.0
    %v730 = vmax.f32 %v508, 0.0
    %v731 = vmax.f32 %v513, 0.0
    %v732 = vmax.f32 %v516, 0.0
    %v733 = vmax.f32 %v521, 0.0
    %v734 = vmax.f32 %v524, 0.0
    %v735 = vmax.f32 %v529, 0.0
    %v736 = vmax.f32 %v532, 0.0
    %v737 = vmax.f32 %v537, 0.0
    %v738 = vmax.f32 %v540, 0.0
    %v739 = vmax.f32 %v545, 0.0
    %v740 = vmax.f32 %v548, 0.0
    %v741 = vmax.f32 %v553, 0.0
    %v742 = vmax.f32 %v556, 0.0
    %v743 = vmax.f32 %v561, 0.0
    %v744 = vmax.f32 %v564, 0.0
    %v745 = vmax.f32 %v569, 0.0
    %v746 = vmax.f32 %v572, 0.0
    %v747 = vmax.f32 %v577, 0.0
    %v748 = vmax.f32 %v580, 0.0
    %v749 = vmax.f32 %v585, 0.0
    %v750 = vmax.f32 %v588, 0.0
    %v751 = vmax.f32 %v593, 0.0
    %v752 = vmax.f32 %v596, 0.0
    %v753 = vmax.f32 %v601, 0.0
    %v754 = vmax.f32 %v604, 0.0
    %v755 = vmax.f32 %v609, 0.0
    %v756 = vmax.f32 %v612, 0.0
    %v757 = vmax.f32 %v617, 0.0
    %v758 = vmax.f32 %v620, 0.0
    %v759 = vmax.f32 %v625, 0.0
    %v760 = vmax.f32 %v628, 0.0
    %v761 = vmax.f32 %v633, 0.0
    %v762 = vmax.f32 %v636, 0.0
    %v763 = vmax.f32 %v641, 0.0
    %v764 = vmax.f32 %v644, 0.0
    %v765 = vmax.f32 %v649, 0.0
    %v766 = vmax.f32 %v652, 0.0
    %v767 = vmax.f32 %v657, 0.0
    %v768 = vmax.f32 %v660, 0.0
    %v769 = vmax.f32 %v665, 0.0
    %v770 = vmax.f32 %v668, 0.0
    %v771 = vmax.f32 %v673, 0.0
    %v772 = vmax.f32 %v676, 0.0
    %v773 = vmax.f32 %v681, 0.0
    %v774 = vmax.f32 %v684, 0.0
    %v775 = vmax.f32 %v689, 0.0
    %v776 = vmax.f32 %v692, 0.0
    %v777 = vmax.f32 %v697, 0.0
    %v778 = vmax.f32 %v700, 0.0
    %v779 = vmax.f32 %v705, 0.0
    %v780 = vmax.f32 %v708, 0.0
    %v781 = vmax.f32 %v713, 0.0
    %v782 = vmax.f32 %v716, 0.0
    %v783 = vpack.c.bf16 %v720, %v719
    %v784 = vpack.c.bf16 %v722, %v721
    %v785 = vpack.c.bf16 %v724, %v723
    %v786 = vpack.c.bf16 %v726, %v725
    %v787 = vpack.c.bf16 %v728, %v727
    %v788 = vpack.c.bf16 %v730, %v729
    %v789 = vpack.c.bf16 %v732, %v731
    %v790 = vpack.c.bf16 %v734, %v733
    %v791 = vpack.c.bf16 %v736, %v735
    %v792 = vpack.c.bf16 %v738, %v737
    %v793 = vpack.c.bf16 %v740, %v739
    %v794 = vpack.c.bf16 %v742, %v741
    %v795 = vpack.c.bf16 %v744, %v743
    %v796 = vpack.c.bf16 %v746, %v745
    %v797 = vpack.c.bf16 %v748, %v747
    %v798 = vpack.c.bf16 %v750, %v749
    %v799 = vpack.c.bf16 %v752, %v751
    %v800 = vpack.c.bf16 %v754, %v753
    %v801 = vpack.c.bf16 %v756, %v755
    %v802 = vpack.c.bf16 %v758, %v757
    %v803 = vpack.c.bf16 %v760, %v759
    %v804 = vpack.c.bf16 %v762, %v761
    %v805 = vpack.c.bf16 %v764, %v763
    %v806 = vpack.c.bf16 %v766, %v765
    %v807 = vpack.c.bf16 %v768, %v767
    %v808 = vpack.c.bf16 %v770, %v769
    %v809 = vpack.c.bf16 %v772, %v771
    %v810 = vpack.c.bf16 %v774, %v773
    %v811 = vpack.c.bf16 %v776, %v775
    %v812 = vpack.c.bf16 %v778, %v777
    %v813 = vpack.c.bf16 %v780, %v779
    %v814 = vpack.c.bf16 %v782, %v781
    %v815 = vld [vmem:[%s6] sm:$0xf]
    %v816 = vld [vmem:[%s6 + $0x4] sm:$0xf]
    %v817 = vld [vmem:[%s6 + $0x8] sm:$0xf]
    %v818 = vld [vmem:[%s6 + $0xc] sm:$0xf]
    %v819 = vld [vmem:[%s7] sm:$0x1]
    %v821 = vlaneseq
    %v822 = vshrl.u32 %v821, 7
    %v823 = vsub.s32 0, %v822
    %v824 = vrot.slane %v819, %v823
    %v830 = vunpack.c.l.b16 %v815
    %v831 = vunpack.c.l.b16 %v816
    %v832 = vunpack.c.l.b16 %v817
    %v833 = vunpack.c.l.b16 %v818
    %v834 = vpack.c.b16 %v831, %v830
    %v835 = vpack.c.b16 %v833, %v832
    %vm838 = vcmask 261120
    %v840 = vsel %vm838, %v783, 0
    %v843 = vsel %vm838, %v784, 0
    %v846 = vsel %vm838, %v785, 0
    %v849 = vsel %vm838, %v786, 0
    %v852 = vsel %vm838, %v787, 0
    %v855 = vsel %vm838, %v788, 0
    %v858 = vsel %vm838, %v789, 0
    %v861 = vsel %vm838, %v790, 0
    %v864 = vsel %vm838, %v791, 0
    %v867 = vsel %vm838, %v792, 0
    %v870 = vsel %vm838, %v793, 0
    %v873 = vsel %vm838, %v794, 0
    %v876 = vsel %vm838, %v795, 0
    %v879 = vsel %vm838, %v796, 0
    %v882 = vsel %vm838, %v797, 0
    %v885 = vsel %vm838, %v798, 0
    %v888 = vsel %vm838, %v799, 0
    %v891 = vsel %vm838, %v800, 0
    %v894 = vsel %vm838, %v801, 0
    %v897 = vsel %vm838, %v802, 0
    %v900 = vsel %vm838, %v803, 0
    %v903 = vsel %vm838, %v804, 0
    %v906 = vsel %vm838, %v805, 0
    %v909 = vsel %vm838, %v806, 0
    %v912 = vsel %vm838, %v807, 0
    %v915 = vsel %vm838, %v808, 0
    %v918 = vsel %vm838, %v809, 0
    %v921 = vsel %vm838, %v810, 0
    %v924 = vsel %vm838, %v811, 0
    %v927 = vsel %vm838, %v812, 0
    %v930 = vsel %vm838, %v813, 0
    %v933 = vsel %vm838, %v814, 0
    %935 = vmatprep.subr.bf16.mxu0 0
    %936 = vmatpush1.bf16.msra.mxu0 %v834
    %937 = vmatprep.subr.bf16.mxu0 0
    %938 = vmatpush1.bf16.msra.mxu0 %v835
    %939 = vmatprep.subr.bf16.mxu0 0
    %940 = vmatpush1.bf16.msra.mxu0 0
    %941 = vmatprep.subr.bf16.mxu0 0
    %942 = vmatpush1.bf16.msra.mxu0 0
    %943 = vmatprep.subr.bf16.mxu0 0
    %944 = vmatpush1.bf16.msra.mxu0 0
    %945 = vmatprep.subr.bf16.mxu0 0
    %946 = vmatpush1.bf16.msra.mxu0 0
    %947 = vmatprep.subr.bf16.mxu0 0
    %948 = vmatpush1.bf16.msra.mxu0 0
    %949 = vmatprep.subr.bf16.mxu0 0
    %950 = vmatpush1.bf16.msra.mxu0 0
    %951 = vmatprep.subr.bf16.mxu0 0
    %952 = vmatpush1.bf16.msra.mxu0 0
    %953 = vmatprep.subr.bf16.mxu0 0
    %954 = vmatpush1.bf16.msra.mxu0 0
    %955 = vmatprep.subr.bf16.mxu0 0
    %956 = vmatpush1.bf16.msra.mxu0 0
    %957 = vmatprep.subr.bf16.mxu0 0
    %958 = vmatpush1.bf16.msra.mxu0 0
    %959 = vmatprep.subr.bf16.mxu0 0
    %960 = vmatpush1.bf16.msra.mxu0 0
    %961 = vmatprep.subr.bf16.mxu0 0
    %962 = vmatpush1.bf16.msra.mxu0 0
    %963 = vmatprep.subr.bf16.mxu0 0
    %964 = vmatpush1.bf16.msra.mxu0 0
    %965 = vmatprep.subr.bf16.mxu0 0
    %966 = vmatpush1.bf16.msra.mxu0 0
    %967 = vmatprep.mubr.bf16.mxu0 0
    %968 = vmatmul.mubr.bf16.gmra.mrb[0].mxu0 %v840
    %v969 = vpop.f32.mrb[0].mxu0
    %v970 = vadd.f32 %v824, %v969
    %v971 = vpop.f32.mrb[0].mxu0
    %v972 = vpop.f32.mrb[0].mxu0
    %v973 = vadd.f32 %v824, %v972
    %v974 = vpop.f32.mrb[0].mxu0
    %975 = vmatprep.mubr.bf16.mxu0 0
    %976 = vmatmul.mubr.bf16.gmra.mrb[0].mxu0 %v843
    %v977 = vpop.f32.mrb[0].mxu0
    %v978 = vadd.f32 %v824, %v977
    %v979 = vpop.f32.mrb[0].mxu0
    %v980 = vpop.f32.mrb[0].mxu0
    %v981 = vadd.f32 %v824, %v980
    %v982 = vpop.f32.mrb[0].mxu0
    %983 = vmatprep.mubr.bf16.mxu0 0
    %984 = vmatmul.mubr.bf16.gmra.mrb[0].mxu0 %v846
    %v985 = vpop.f32.mrb[0].mxu0
    %v986 = vadd.f32 %v824, %v985
    %v987 = vpop.f32.mrb[0].mxu0
    %v988 = vpop.f32.mrb[0].mxu0
    %v989 = vadd.f32 %v824, %v988
    %v990 = vpop.f32.mrb[0].mxu0
    %991 = vmatprep.mubr.bf16.mxu0 0
    %992 = vmatmul.mubr.bf16.gmra.mrb[0].mxu0 %v849
    %v993 = vpop.f32.mrb[0].mxu0
    %v994 = vadd.f32 %v824, %v993
    %v995 = vpop.f32.mrb[0].mxu0
    %v996 = vpop.f32.mrb[0].mxu0
    %v997 = vadd.f32 %v824, %v996
    %v998 = vpop.f32.mrb[0].mxu0
    %999 = vmatprep.mubr.bf16.mxu0 0
    %1000 = vmatmul.mubr.bf16.gmra.mrb[0].mxu0 %v852
    %v1001 = vpop.f32.mrb[0].mxu0
    %v1002 = vadd.f32 %v824, %v1001
    %v1003 = vpop.f32.mrb[0].mxu0
    %v1004 = vpop.f32.mrb[0].mxu0
    %v1005 = vadd.f32 %v824, %v1004
    %v1006 = vpop.f32.mrb[0].mxu0
    %1007 = vmatprep.mubr.bf16.mxu0 0
    %1008 = vmatmul.mubr.bf16.gmra.mrb[0].mxu0 %v855
    %v1009 = vpop.f32.mrb[0].mxu0
    %v1010 = vadd.f32 %v824, %v1009
    %v1011 = vpop.f32.mrb[0].mxu0
    %v1012 = vpop.f32.mrb[0].mxu0
    %v1013 = vadd.f32 %v824, %v1012
    %v1014 = vpop.f32.mrb[0].mxu0
    %1015 = vmatprep.mubr.bf16.mxu0 0
    %1016 = vmatmul.mubr.bf16.gmra.mrb[0].mxu0 %v858
    %v1017 = vpop.f32.mrb[0].mxu0
    %v1018 = vadd.f32 %v824, %v1017
    %v1019 = vpop.f32.mrb[0].mxu0
    %v1020 = vpop.f32.mrb[0].mxu0
    %v1021 = vadd.f32 %v824, %v1020
    %v1022 = vpop.f32.mrb[0].mxu0
    %1023 = vmatprep.mubr.bf16.mxu0 0
    %1024 = vmatmul.mubr.bf16.gmra.mrb[0].mxu0 %v861
    %v1025 = vpop.f32.mrb[0].mxu0
    %v1026 = vadd.f32 %v824, %v1025
    %v1027 = vpop.f32.mrb[0].mxu0
    %v1028 = vpop.f32.mrb[0].mxu0
    %v1029 = vadd.f32 %v824, %v1028
    %v1030 = vpop.f32.mrb[0].mxu0
    %1031 = vmatprep.mubr.bf16.mxu0 0
    %1032 = vmatmul.mubr.bf16.gmra.mrb[0].mxu0 %v864
    %v1033 = vpop.f32.mrb[0].mxu0
    %v1034 = vadd.f32 %v824, %v1033
    %v1035 = vpop.f32.mrb[0].mxu0
    %v1036 = vpop.f32.mrb[0].mxu0
    %v1037 = vadd.f32 %v824, %v1036
    %v1038 = vpop.f32.mrb[0].mxu0
    %1039 = vmatprep.mubr.bf16.mxu0 0
    %1040 = vmatmul.mubr.bf16.gmra.mrb[0].mxu0 %v867
    %v1041 = vpop.f32.mrb[0].mxu0
    %v1042 = vadd.f32 %v824, %v1041
    %v1043 = vpop.f32.mrb[0].mxu0
    %v1044 = vpop.f32.mrb[0].mxu0
    %v1045 = vadd.f32 %v824, %v1044
    %v1046 = vpop.f32.mrb[0].mxu0
    %1047 = vmatprep.mubr.bf16.mxu0 0
    %1048 = vmatmul.mubr.bf16.gmra.mrb[0].mxu0 %v870
    %v1049 = vpop.f32.mrb[0].mxu0
    %v1050 = vadd.f32 %v824, %v1049
    %v1051 = vpop.f32.mrb[0].mxu0
    %v1052 = vpop.f32.mrb[0].mxu0
    %v1053 = vadd.f32 %v824, %v1052
    %v1054 = vpop.f32.mrb[0].mxu0
    %1055 = vmatprep.mubr.bf16.mxu0 0
    %1056 = vmatmul.mubr.bf16.gmra.mrb[0].mxu0 %v873
    %v1057 = vpop.f32.mrb[0].mxu0
    %v1058 = vadd.f32 %v824, %v1057
    %v1059 = vpop.f32.mrb[0].mxu0
    %v1060 = vpop.f32.mrb[0].mxu0
    %v1061 = vadd.f32 %v824, %v1060
    %v1062 = vpop.f32.mrb[0].mxu0
    %1063 = vmatprep.mubr.bf16.mxu0 0
    %1064 = vmatmul.mubr.bf16.gmra.mrb[0].mxu0 %v876
    %v1065 = vpop.f32.mrb[0].mxu0
    %v1066 = vadd.f32 %v824, %v1065
    %v1067 = vpop.f32.mrb[0].mxu0
    %v1068 = vpop.f32.mrb[0].mxu0
    %v1069 = vadd.f32 %v824, %v1068
    %v1070 = vpop.f32.mrb[0].mxu0
    %1071 = vmatprep.mubr.bf16.mxu0 0
    %1072 = vmatmul.mubr.bf16.gmra.mrb[0].mxu0 %v879
    %v1073 = vpop.f32.mrb[0].mxu0
    %v1074 = vadd.f32 %v824, %v1073
    %v1075 = vpop.f32.mrb[0].mxu0
    %v1076 = vpop.f32.mrb[0].mxu0
    %v1077 = vadd.f32 %v824, %v1076
    %v1078 = vpop.f32.mrb[0].mxu0
    %1079 = vmatprep.mubr.bf16.mxu0 0
    %1080 = vmatmul.mubr.bf16.gmra.mrb[0].mxu0 %v882
    %v1081 = vpop.f32.mrb[0].mxu0
    %v1082 = vadd.f32 %v824, %v1081
    %v1083 = vpop.f32.mrb[0].mxu0
    %v1084 = vpop.f32.mrb[0].mxu0
    %v1085 = vadd.f32 %v824, %v1084
    %v1086 = vpop.f32.mrb[0].mxu0
    %1087 = vmatprep.mubr.bf16.mxu0 0
    %1088 = vmatmul.mubr.bf16.gmra.mrb[0].mxu0 %v885
    %v1089 = vpop.f32.mrb[0].mxu0
    %v1090 = vadd.f32 %v824, %v1089
    %v1091 = vpop.f32.mrb[0].mxu0
    %v1092 = vpop.f32.mrb[0].mxu0
    %v1093 = vadd.f32 %v824, %v1092
    %v1094 = vpop.f32.mrb[0].mxu0
    %1095 = vmatprep.mubr.bf16.mxu0 0
    %1096 = vmatmul.mubr.bf16.gmra.mrb[0].mxu0 %v888
    %v1097 = vpop.f32.mrb[0].mxu0
    %v1098 = vadd.f32 %v824, %v1097
    %v1099 = vpop.f32.mrb[0].mxu0
    %v1100 = vpop.f32.mrb[0].mxu0
    %v1101 = vadd.f32 %v824, %v1100
    %v1102 = vpop.f32.mrb[0].mxu0
    %1103 = vmatprep.mubr.bf16.mxu0 0
    %1104 = vmatmul.mubr.bf16.gmra.mrb[0].mxu0 %v891
    %v1105 = vpop.f32.mrb[0].mxu0
    %v1106 = vadd.f32 %v824, %v1105
    %v1107 = vpop.f32.mrb[0].mxu0
    %v1108 = vpop.f32.mrb[0].mxu0
    %v1109 = vadd.f32 %v824, %v1108
    %v1110 = vpop.f32.mrb[0].mxu0
    %1111 = vmatprep.mubr.bf16.mxu0 0
    %1112 = vmatmul.mubr.bf16.gmra.mrb[0].mxu0 %v894
    %v1113 = vpop.f32.mrb[0].mxu0
    %v1114 = vadd.f32 %v824, %v1113
    %v1115 = vpop.f32.mrb[0].mxu0
    %v1116 = vpop.f32.mrb[0].mxu0
    %v1117 = vadd.f32 %v824, %v1116
    %v1118 = vpop.f32.mrb[0].mxu0
    %1119 = vmatprep.mubr.bf16.mxu0 0
    %1120 = vmatmul.mubr.bf16.gmra.mrb[0].mxu0 %v897
    %v1121 = vpop.f32.mrb[0].mxu0
    %v1122 = vadd.f32 %v824, %v1121
    %v1123 = vpop.f32.mrb[0].mxu0
    %v1124 = vpop.f32.mrb[0].mxu0
    %v1125 = vadd.f32 %v824, %v1124
    %v1126 = vpop.f32.mrb[0].mxu0
    %1127 = vmatprep.mubr.bf16.mxu0 0
    %1128 = vmatmul.mubr.bf16.gmra.mrb[0].mxu0 %v900
    %v1129 = vpop.f32.mrb[0].mxu0
    %v1130 = vadd.f32 %v824, %v1129
    %v1131 = vpop.f32.mrb[0].mxu0
    %v1132 = vpop.f32.mrb[0].mxu0
    %v1133 = vadd.f32 %v824, %v1132
    %v1134 = vpop.f32.mrb[0].mxu0
    %1135 = vmatprep.mubr.bf16.mxu0 0
    %1136 = vmatmul.mubr.bf16.gmra.mrb[0].mxu0 %v903
    %v1137 = vpop.f32.mrb[0].mxu0
    %v1138 = vadd.f32 %v824, %v1137
    %v1139 = vpop.f32.mrb[0].mxu0
    %v1140 = vpop.f32.mrb[0].mxu0
    %v1141 = vadd.f32 %v824, %v1140
    %v1142 = vpop.f32.mrb[0].mxu0
    %1143 = vmatprep.mubr.bf16.mxu0 0
    %1144 = vmatmul.mubr.bf16.gmra.mrb[0].mxu0 %v906
    %v1145 = vpop.f32.mrb[0].mxu0
    %v1146 = vadd.f32 %v824, %v1145
    %v1147 = vpop.f32.mrb[0].mxu0
    %v1148 = vpop.f32.mrb[0].mxu0
    %v1149 = vadd.f32 %v824, %v1148
    %v1150 = vpop.f32.mrb[0].mxu0
    %1151 = vmatprep.mubr.bf16.mxu0 0
    %1152 = vmatmul.mubr.bf16.gmra.mrb[0].mxu0 %v909
    %v1153 = vpop.f32.mrb[0].mxu0
    %v1154 = vadd.f32 %v824, %v1153
    %v1155 = vpop.f32.mrb[0].mxu0
    %v1156 = vpop.f32.mrb[0].mxu0
    %v1157 = vadd.f32 %v824, %v1156
    %v1158 = vpop.f32.mrb[0].mxu0
    %1159 = vmatprep.mubr.bf16.mxu0 0
    %1160 = vmatmul.mubr.bf16.gmra.mrb[0].mxu0 %v912
    %v1161 = vpop.f32.mrb[0].mxu0
    %v1162 = vadd.f32 %v824, %v1161
    %v1163 = vpop.f32.mrb[0].mxu0
    %v1164 = vpop.f32.mrb[0].mxu0
    %v1165 = vadd.f32 %v824, %v1164
    %v1166 = vpop.f32.mrb[0].mxu0
    %1167 = vmatprep.mubr.bf16.mxu0 0
    %1168 = vmatmul.mubr.bf16.gmra.mrb[0].mxu0 %v915
    %v1169 = vpop.f32.mrb[0].mxu0
    %v1170 = vadd.f32 %v824, %v1169
    %v1171 = vpop.f32.mrb[0].mxu0
    %v1172 = vpop.f32.mrb[0].mxu0
    %v1173 = vadd.f32 %v824, %v1172
    %v1174 = vpop.f32.mrb[0].mxu0
    %1175 = vmatprep.mubr.bf16.mxu0 0
    %1176 = vmatmul.mubr.bf16.gmra.mrb[0].mxu0 %v918
    %v1177 = vpop.f32.mrb[0].mxu0
    %v1178 = vadd.f32 %v824, %v1177
    %v1179 = vpop.f32.mrb[0].mxu0
    %v1180 = vpop.f32.mrb[0].mxu0
    %v1181 = vadd.f32 %v824, %v1180
    %v1182 = vpop.f32.mrb[0].mxu0
    %1183 = vmatprep.mubr.bf16.mxu0 0
    %1184 = vmatmul.mubr.bf16.gmra.mrb[0].mxu0 %v921
    %v1185 = vpop.f32.mrb[0].mxu0
    %v1186 = vadd.f32 %v824, %v1185
    %v1187 = vpop.f32.mrb[0].mxu0
    %v1188 = vpop.f32.mrb[0].mxu0
    %v1189 = vadd.f32 %v824, %v1188
    %v1190 = vpop.f32.mrb[0].mxu0
    %1191 = vmatprep.mubr.bf16.mxu0 0
    %1192 = vmatmul.mubr.bf16.gmra.mrb[0].mxu0 %v924
    %v1193 = vpop.f32.mrb[0].mxu0
    %v1194 = vadd.f32 %v824, %v1193
    %v1195 = vpop.f32.mrb[0].mxu0
    %v1196 = vpop.f32.mrb[0].mxu0
    %v1197 = vadd.f32 %v824, %v1196
    %v1198 = vpop.f32.mrb[0].mxu0
    %1199 = vmatprep.mubr.bf16.mxu0 0
    %1200 = vmatmul.mubr.bf16.gmra.mrb[0].mxu0 %v927
    %v1201 = vpop.f32.mrb[0].mxu0
    %v1202 = vadd.f32 %v824, %v1201
    %v1203 = vpop.f32.mrb[0].mxu0
    %v1204 = vpop.f32.mrb[0].mxu0
    %v1205 = vadd.f32 %v824, %v1204
    %v1206 = vpop.f32.mrb[0].mxu0
    %1207 = vmatprep.mubr.bf16.mxu0 0
    %1208 = vmatmul.mubr.bf16.gmra.mrb[0].mxu0 %v930
    %v1209 = vpop.f32.mrb[0].mxu0
    %v1210 = vadd.f32 %v824, %v1209
    %v1211 = vpop.f32.mrb[0].mxu0
    %v1212 = vpop.f32.mrb[0].mxu0
    %v1213 = vadd.f32 %v824, %v1212
    %v1214 = vpop.f32.mrb[0].mxu0
    %1215 = vmatprep.mubr.bf16.mxu0 0
    %1216 = vmatmul.mubr.bf16.gmra.mrb[0].mxu0 %v933
    %v1217 = vpop.f32.mrb[0].mxu0
    %v1218 = vadd.f32 %v824, %v1217
    %v1219 = vpop.f32.mrb[0].mxu0
    %v1220 = vpop.f32.mrb[0].mxu0
    %v1221 = vadd.f32 %v824, %v1220
    %v1222 = vpop.f32.mrb[0].mxu0
    %1223 = vdwg.mxu0
    %v1224 = vmax.f32 %v970, 0.0
    %v1225 = vmax.f32 %v973, 0.0
    %v1226 = vmax.f32 %v978, 0.0
    %v1227 = vmax.f32 %v981, 0.0
    %v1228 = vmax.f32 %v986, 0.0
    %v1229 = vmax.f32 %v989, 0.0
    %v1230 = vmax.f32 %v994, 0.0
    %v1231 = vmax.f32 %v997, 0.0
    %v1232 = vmax.f32 %v1002, 0.0
    %v1233 = vmax.f32 %v1005, 0.0
    %v1234 = vmax.f32 %v1010, 0.0
    %v1235 = vmax.f32 %v1013, 0.0
    %v1236 = vmax.f32 %v1018, 0.0
    %v1237 = vmax.f32 %v1021, 0.0
    %v1238 = vmax.f32 %v1026, 0.0
    %v1239 = vmax.f32 %v1029, 0.0
    %v1240 = vmax.f32 %v1034, 0.0
    %v1241 = vmax.f32 %v1037, 0.0
    %v1242 = vmax.f32 %v1042, 0.0
    %v1243 = vmax.f32 %v1045, 0.0
    %v1244 = vmax.f32 %v1050, 0.0
    %v1245 = vmax.f32 %v1053, 0.0
    %v1246 = vmax.f32 %v1058, 0.0
    %v1247 = vmax.f32 %v1061, 0.0
    %v1248 = vmax.f32 %v1066, 0.0
    %v1249 = vmax.f32 %v1069, 0.0
    %v1250 = vmax.f32 %v1074, 0.0
    %v1251 = vmax.f32 %v1077, 0.0
    %v1252 = vmax.f32 %v1082, 0.0
    %v1253 = vmax.f32 %v1085, 0.0
    %v1254 = vmax.f32 %v1090, 0.0
    %v1255 = vmax.f32 %v1093, 0.0
    %v1256 = vmax.f32 %v1098, 0.0
    %v1257 = vmax.f32 %v1101, 0.0
    %v1258 = vmax.f32 %v1106, 0.0
    %v1259 = vmax.f32 %v1109, 0.0
    %v1260 = vmax.f32 %v1114, 0.0
    %v1261 = vmax.f32 %v1117, 0.0
    %v1262 = vmax.f32 %v1122, 0.0
    %v1263 = vmax.f32 %v1125, 0.0
    %v1264 = vmax.f32 %v1130, 0.0
    %v1265 = vmax.f32 %v1133, 0.0
    %v1266 = vmax.f32 %v1138, 0.0
    %v1267 = vmax.f32 %v1141, 0.0
    %v1268 = vmax.f32 %v1146, 0.0
    %v1269 = vmax.f32 %v1149, 0.0
    %v1270 = vmax.f32 %v1154, 0.0
    %v1271 = vmax.f32 %v1157, 0.0
    %v1272 = vmax.f32 %v1162, 0.0
    %v1273 = vmax.f32 %v1165, 0.0
    %v1274 = vmax.f32 %v1170, 0.0
    %v1275 = vmax.f32 %v1173, 0.0
    %v1276 = vmax.f32 %v1178, 0.0
    %v1277 = vmax.f32 %v1181, 0.0
    %v1278 = vmax.f32 %v1186, 0.0
    %v1279 = vmax.f32 %v1189, 0.0
    %v1280 = vmax.f32 %v1194, 0.0
    %v1281 = vmax.f32 %v1197, 0.0
    %v1282 = vmax.f32 %v1202, 0.0
    %v1283 = vmax.f32 %v1205, 0.0
    %v1284 = vmax.f32 %v1210, 0.0
    %v1285 = vmax.f32 %v1213, 0.0
    %v1286 = vmax.f32 %v1218, 0.0
    %v1287 = vmax.f32 %v1221, 0.0
    %v1288 = vld [vmem:[%s1] sm:$0xff]
    %v1289 = vld [vmem:[%s1 + $0x8] sm:$0xff]
    %v1290 = vld [vmem:[%s1 + $0x10] sm:$0xff]
    %v1291 = vld [vmem:[%s1 + $0x18] sm:$0xff]
    %v1292 = vld [vmem:[%s1 + $0x20] sm:$0xff]
    %v1293 = vld [vmem:[%s1 + $0x28] sm:$0xff]
    %v1294 = vld [vmem:[%s1 + $0x30] sm:$0xff]
    %v1295 = vld [vmem:[%s1 + $0x38] sm:$0xff]
    %v1296 = vld [vmem:[%s1 + $0x40] sm:$0xff]
    %v1297 = vld [vmem:[%s1 + $0x48] sm:$0xff]
    %v1298 = vld [vmem:[%s1 + $0x50] sm:$0xff]
    %v1299 = vld [vmem:[%s1 + $0x58] sm:$0xff]
    %v1300 = vld [vmem:[%s1 + $0x60] sm:$0xff]
    %v1301 = vld [vmem:[%s1 + $0x68] sm:$0xff]
    %v1302 = vld [vmem:[%s1 + $0x70] sm:$0xff]
    %v1303 = vld [vmem:[%s1 + $0x78] sm:$0xff]
    %v1304 = vld [vmem:[%s1 + $0x80] sm:$0xff]
    %v1305 = vld [vmem:[%s1 + $0x88] sm:$0xff]
    %v1306 = vld [vmem:[%s1 + $0x90] sm:$0xff]
    %v1307 = vld [vmem:[%s1 + $0x98] sm:$0xff]
    %v1308 = vld [vmem:[%s1 + $0xa0] sm:$0xff]
    %v1309 = vld [vmem:[%s1 + $0xa8] sm:$0xff]
    %v1310 = vld [vmem:[%s1 + $0xb0] sm:$0xff]
    %v1311 = vld [vmem:[%s1 + $0xb8] sm:$0xff]
    %v1312 = vld [vmem:[%s1 + $0xc0] sm:$0xff]
    %v1313 = vld [vmem:[%s1 + $0xc8] sm:$0xff]
    %v1314 = vld [vmem:[%s1 + $0xd0] sm:$0xff]
    %v1315 = vld [vmem:[%s1 + $0xd8] sm:$0xff]
    %v1316 = vld [vmem:[%s1 + $0xe0] sm:$0xff]
    %v1317 = vld [vmem:[%s1 + $0xe8] sm:$0xff]
    %v1318 = vld [vmem:[%s1 + $0xf0] sm:$0xff]
    %v1319 = vld [vmem:[%s1 + $0xf8] sm:$0xff]
    %v1320 = vld [vmem:[%s1 + $0x100] sm:$0xff]
    %v1321 = vld [vmem:[%s1 + $0x108] sm:$0xff]
    %v1322 = vld [vmem:[%s1 + $0x110] sm:$0xff]
    %v1323 = vld [vmem:[%s1 + $0x118] sm:$0xff]
    %v1324 = vld [vmem:[%s1 + $0x120] sm:$0xff]
    %v1325 = vld [vmem:[%s1 + $0x128] sm:$0xff]
    %v1326 = vld [vmem:[%s1 + $0x130] sm:$0xff]
    %v1327 = vld [vmem:[%s1 + $0x138] sm:$0xff]
    %v1328 = vld [vmem:[%s1 + $0x140] sm:$0xff]
    %v1329 = vld [vmem:[%s1 + $0x148] sm:$0xff]
    %v1330 = vld [vmem:[%s1 + $0x150] sm:$0xff]
    %v1331 = vld [vmem:[%s1 + $0x158] sm:$0xff]
    %v1332 = vld [vmem:[%s1 + $0x160] sm:$0xff]
    %v1333 = vld [vmem:[%s1 + $0x168] sm:$0xff]
    %v1334 = vld [vmem:[%s1 + $0x170] sm:$0xff]
    %v1335 = vld [vmem:[%s1 + $0x178] sm:$0xff]
    %v1336 = vld [vmem:[%s1 + $0x180] sm:$0xff]
    %v1337 = vld [vmem:[%s1 + $0x188] sm:$0xff]
    %v1338 = vld [vmem:[%s1 + $0x190] sm:$0xff]
    %v1339 = vld [vmem:[%s1 + $0x198] sm:$0xff]
    %v1340 = vld [vmem:[%s1 + $0x1a0] sm:$0xff]
    %v1341 = vld [vmem:[%s1 + $0x1a8] sm:$0xff]
    %v1342 = vld [vmem:[%s1 + $0x1b0] sm:$0xff]
    %v1343 = vld [vmem:[%s1 + $0x1b8] sm:$0xff]
    %v1344 = vld [vmem:[%s1 + $0x1c0] sm:$0xff]
    %v1345 = vld [vmem:[%s1 + $0x1c8] sm:$0xff]
    %v1346 = vld [vmem:[%s1 + $0x1d0] sm:$0xff]
    %v1347 = vld [vmem:[%s1 + $0x1d8] sm:$0xff]
    %v1348 = vld [vmem:[%s1 + $0x1e0] sm:$0xff]
    %v1349 = vld [vmem:[%s1 + $0x1e8] sm:$0xff]
    %v1350 = vld [vmem:[%s1 + $0x1f0] sm:$0xff]
    %v1351 = vld [vmem:[%s1 + $0x1f8] sm:$0xff]
    %vm1352 = vcmask 7168
    %v1353 = vsel %vm1352, %v1288, 0.0
    %v1354 = vsel %vm1352, %v1289, 0.0
    %v1355 = vadd.f32 %v1353, %v1354
    %v1356 = vsel %vm1352, %v1290, 0.0
    %v1357 = vadd.f32 %v1355, %v1356
    %v1358 = vsel %vm1352, %v1291, 0.0
    %v1359 = vadd.f32 %v1357, %v1358
    %v1360 = vrot.slane %v1359, 4
    %v1361 = vadd.f32 %v1359, %v1360
    %v1362 = vrot.slane %v1361, 2
    %v1363 = vadd.f32 %v1361, %v1362
    %v1364 = vrot.slane %v1363, 1
    %v1365 = vadd.f32 %v1363, %v1364
    %v1366 = vsel %vm1352, %v1292, 0.0
    %v1367 = vsel %vm1352, %v1293, 0.0
    %v1368 = vadd.f32 %v1366, %v1367
    %v1369 = vsel %vm1352, %v1294, 0.0
    %v1370 = vadd.f32 %v1368, %v1369
    %v1371 = vsel %vm1352, %v1295, 0.0
    %v1372 = vadd.f32 %v1370, %v1371
    %v1373 = vrot.slane %v1372, 4
    %v1374 = vadd.f32 %v1372, %v1373
    %v1375 = vrot.slane %v1374, 2
    %v1376 = vadd.f32 %v1374, %v1375
    %v1377 = vrot.slane %v1376, 1
    %v1378 = vadd.f32 %v1376, %v1377
    %v1379 = vsel %vm1352, %v1296, 0.0
    %v1380 = vsel %vm1352, %v1297, 0.0
    %v1381 = vadd.f32 %v1379, %v1380
    %v1382 = vsel %vm1352, %v1298, 0.0
    %v1383 = vadd.f32 %v1381, %v1382
    %v1384 = vsel %vm1352, %v1299, 0.0
    %v1385 = vadd.f32 %v1383, %v1384
    %v1386 = vrot.slane %v1385, 4
    %v1387 = vadd.f32 %v1385, %v1386
    %v1388 = vrot.slane %v1387, 2
    %v1389 = vadd.f32 %v1387, %v1388
    %v1390 = vrot.slane %v1389, 1
    %v1391 = vadd.f32 %v1389, %v1390
    %v1392 = vsel %vm1352, %v1300, 0.0
    %v1393 = vsel %vm1352, %v1301, 0.0
    %v1394 = vadd.f32 %v1392, %v1393
    %v1395 = vsel %vm1352, %v1302, 0.0
    %v1396 = vadd.f32 %v1394, %v1395
    %v1397 = vsel %vm1352, %v1303, 0.0
    %v1398 = vadd.f32 %v1396, %v1397
    %v1399 = vrot.slane %v1398, 4
    %v1400 = vadd.f32 %v1398, %v1399
    %v1401 = vrot.slane %v1400, 2
    %v1402 = vadd.f32 %v1400, %v1401
    %v1403 = vrot.slane %v1402, 1
    %v1404 = vadd.f32 %v1402, %v1403
    %v1405 = vsel %vm1352, %v1304, 0.0
    %v1406 = vsel %vm1352, %v1305, 0.0
    %v1407 = vadd.f32 %v1405, %v1406
    %v1408 = vsel %vm1352, %v1306, 0.0
    %v1409 = vadd.f32 %v1407, %v1408
    %v1410 = vsel %vm1352, %v1307, 0.0
    %v1411 = vadd.f32 %v1409, %v1410
    %v1412 = vrot.slane %v1411, 4
    %v1413 = vadd.f32 %v1411, %v1412
    %v1414 = vrot.slane %v1413, 2
    %v1415 = vadd.f32 %v1413, %v1414
    %v1416 = vrot.slane %v1415, 1
    %v1417 = vadd.f32 %v1415, %v1416
    %v1418 = vsel %vm1352, %v1308, 0.0
    %v1419 = vsel %vm1352, %v1309, 0.0
    %v1420 = vadd.f32 %v1418, %v1419
    %v1421 = vsel %vm1352, %v1310, 0.0
    %v1422 = vadd.f32 %v1420, %v1421
    %v1423 = vsel %vm1352, %v1311, 0.0
    %v1424 = vadd.f32 %v1422, %v1423
    %v1425 = vrot.slane %v1424, 4
    %v1426 = vadd.f32 %v1424, %v1425
    %v1427 = vrot.slane %v1426, 2
    %v1428 = vadd.f32 %v1426, %v1427
    %v1429 = vrot.slane %v1428, 1
    %v1430 = vadd.f32 %v1428, %v1429
    %v1431 = vsel %vm1352, %v1312, 0.0
    %v1432 = vsel %vm1352, %v1313, 0.0
    %v1433 = vadd.f32 %v1431, %v1432
    %v1434 = vsel %vm1352, %v1314, 0.0
    %v1435 = vadd.f32 %v1433, %v1434
    %v1436 = vsel %vm1352, %v1315, 0.0
    %v1437 = vadd.f32 %v1435, %v1436
    %v1438 = vrot.slane %v1437, 4
    %v1439 = vadd.f32 %v1437, %v1438
    %v1440 = vrot.slane %v1439, 2
    %v1441 = vadd.f32 %v1439, %v1440
    %v1442 = vrot.slane %v1441, 1
    %v1443 = vadd.f32 %v1441, %v1442
    %v1444 = vsel %vm1352, %v1316, 0.0
    %v1445 = vsel %vm1352, %v1317, 0.0
    %v1446 = vadd.f32 %v1444, %v1445
    %v1447 = vsel %vm1352, %v1318, 0.0
    %v1448 = vadd.f32 %v1446, %v1447
    %v1449 = vsel %vm1352, %v1319, 0.0
    %v1450 = vadd.f32 %v1448, %v1449
    %v1451 = vrot.slane %v1450, 4
    %v1452 = vadd.f32 %v1450, %v1451
    %v1453 = vrot.slane %v1452, 2
    %v1454 = vadd.f32 %v1452, %v1453
    %v1455 = vrot.slane %v1454, 1
    %v1456 = vadd.f32 %v1454, %v1455
    %v1457 = vsel %vm1352, %v1320, 0.0
    %v1458 = vsel %vm1352, %v1321, 0.0
    %v1459 = vadd.f32 %v1457, %v1458
    %v1460 = vsel %vm1352, %v1322, 0.0
    %v1461 = vadd.f32 %v1459, %v1460
    %v1462 = vsel %vm1352, %v1323, 0.0
    %v1463 = vadd.f32 %v1461, %v1462
    %v1464 = vrot.slane %v1463, 4
    %v1465 = vadd.f32 %v1463, %v1464
    %v1466 = vrot.slane %v1465, 2
    %v1467 = vadd.f32 %v1465, %v1466
    %v1468 = vrot.slane %v1467, 1
    %v1469 = vadd.f32 %v1467, %v1468
    %v1470 = vsel %vm1352, %v1324, 0.0
    %v1471 = vsel %vm1352, %v1325, 0.0
    %v1472 = vadd.f32 %v1470, %v1471
    %v1473 = vsel %vm1352, %v1326, 0.0
    %v1474 = vadd.f32 %v1472, %v1473
    %v1475 = vsel %vm1352, %v1327, 0.0
    %v1476 = vadd.f32 %v1474, %v1475
    %v1477 = vrot.slane %v1476, 4
    %v1478 = vadd.f32 %v1476, %v1477
    %v1479 = vrot.slane %v1478, 2
    %v1480 = vadd.f32 %v1478, %v1479
    %v1481 = vrot.slane %v1480, 1
    %v1482 = vadd.f32 %v1480, %v1481
    %v1483 = vsel %vm1352, %v1328, 0.0
    %v1484 = vsel %vm1352, %v1329, 0.0
    %v1485 = vadd.f32 %v1483, %v1484
    %v1486 = vsel %vm1352, %v1330, 0.0
    %v1487 = vadd.f32 %v1485, %v1486
    %v1488 = vsel %vm1352, %v1331, 0.0
    %v1489 = vadd.f32 %v1487, %v1488
    %v1490 = vrot.slane %v1489, 4
    %v1491 = vadd.f32 %v1489, %v1490
    %v1492 = vrot.slane %v1491, 2
    %v1493 = vadd.f32 %v1491, %v1492
    %v1494 = vrot.slane %v1493, 1
    %v1495 = vadd.f32 %v1493, %v1494
    %v1496 = vsel %vm1352, %v1332, 0.0
    %v1497 = vsel %vm1352, %v1333, 0.0
    %v1498 = vadd.f32 %v1496, %v1497
    %v1499 = vsel %vm1352, %v1334, 0.0
    %v1500 = vadd.f32 %v1498, %v1499
    %v1501 = vsel %vm1352, %v1335, 0.0
    %v1502 = vadd.f32 %v1500, %v1501
    %v1503 = vrot.slane %v1502, 4
    %v1504 = vadd.f32 %v1502, %v1503
    %v1505 = vrot.slane %v1504, 2
    %v1506 = vadd.f32 %v1504, %v1505
    %v1507 = vrot.slane %v1506, 1
    %v1508 = vadd.f32 %v1506, %v1507
    %v1509 = vsel %vm1352, %v1336, 0.0
    %v1510 = vsel %vm1352, %v1337, 0.0
    %v1511 = vadd.f32 %v1509, %v1510
    %v1512 = vsel %vm1352, %v1338, 0.0
    %v1513 = vadd.f32 %v1511, %v1512
    %v1514 = vsel %vm1352, %v1339, 0.0
    %v1515 = vadd.f32 %v1513, %v1514
    %v1516 = vrot.slane %v1515, 4
    %v1517 = vadd.f32 %v1515, %v1516
    %v1518 = vrot.slane %v1517, 2
    %v1519 = vadd.f32 %v1517, %v1518
    %v1520 = vrot.slane %v1519, 1
    %v1521 = vadd.f32 %v1519, %v1520
    %v1522 = vsel %vm1352, %v1340, 0.0
    %v1523 = vsel %vm1352, %v1341, 0.0
    %v1524 = vadd.f32 %v1522, %v1523
    %v1525 = vsel %vm1352, %v1342, 0.0
    %v1526 = vadd.f32 %v1524, %v1525
    %v1527 = vsel %vm1352, %v1343, 0.0
    %v1528 = vadd.f32 %v1526, %v1527
    %v1529 = vrot.slane %v1528, 4
    %v1530 = vadd.f32 %v1528, %v1529
    %v1531 = vrot.slane %v1530, 2
    %v1532 = vadd.f32 %v1530, %v1531
    %v1533 = vrot.slane %v1532, 1
    %v1534 = vadd.f32 %v1532, %v1533
    %v1535 = vsel %vm1352, %v1344, 0.0
    %v1536 = vsel %vm1352, %v1345, 0.0
    %v1537 = vadd.f32 %v1535, %v1536
    %v1538 = vsel %vm1352, %v1346, 0.0
    %v1539 = vadd.f32 %v1537, %v1538
    %v1540 = vsel %vm1352, %v1347, 0.0
    %v1541 = vadd.f32 %v1539, %v1540
    %v1542 = vrot.slane %v1541, 4
    %v1543 = vadd.f32 %v1541, %v1542
    %v1544 = vrot.slane %v1543, 2
    %v1545 = vadd.f32 %v1543, %v1544
    %v1546 = vrot.slane %v1545, 1
    %v1547 = vadd.f32 %v1545, %v1546
    %v1548 = vsel %vm1352, %v1348, 0.0
    %v1549 = vsel %vm1352, %v1349, 0.0
    %v1550 = vadd.f32 %v1548, %v1549
    %v1551 = vsel %vm1352, %v1350, 0.0
    %v1552 = vadd.f32 %v1550, %v1551
    %v1553 = vsel %vm1352, %v1351, 0.0
    %v1554 = vadd.f32 %v1552, %v1553
    %v1555 = vrot.slane %v1554, 4
    %v1556 = vadd.f32 %v1554, %v1555
    %v1557 = vrot.slane %v1556, 2
    %v1558 = vadd.f32 %v1556, %v1557
    %v1559 = vrot.slane %v1558, 1
    %v1560 = vadd.f32 %v1558, %v1559
    %v1561 = vmax.f32 %v1365, 1.0
    %v1562 = vmax.f32 %v1378, 1.0
    %v1563 = vmax.f32 %v1391, 1.0
    %v1564 = vmax.f32 %v1404, 1.0
    %v1565 = vmax.f32 %v1417, 1.0
    %v1566 = vmax.f32 %v1430, 1.0
    %v1567 = vmax.f32 %v1443, 1.0
    %v1568 = vmax.f32 %v1456, 1.0
    %v1569 = vmax.f32 %v1469, 1.0
    %v1570 = vmax.f32 %v1482, 1.0
    %v1571 = vmax.f32 %v1495, 1.0
    %v1572 = vmax.f32 %v1508, 1.0
    %v1573 = vmax.f32 %v1521, 1.0
    %v1574 = vmax.f32 %v1534, 1.0
    %v1575 = vmax.f32 %v1547, 1.0
    %v1576 = vmax.f32 %v1560, 1.0
    %v1577 = vrcp.pop %v1561
    %v1578 = vmul.f32 1.0, %v1577
    %v1579 = vrcp.pop %v1562
    %v1580 = vmul.f32 1.0, %v1579
    %v1581 = vrcp.pop %v1563
    %v1582 = vmul.f32 1.0, %v1581
    %v1583 = vrcp.pop %v1564
    %v1584 = vmul.f32 1.0, %v1583
    %v1585 = vrcp.pop %v1565
    %v1586 = vmul.f32 1.0, %v1585
    %v1587 = vrcp.pop %v1566
    %v1588 = vmul.f32 1.0, %v1587
    %v1589 = vrcp.pop %v1567
    %v1590 = vmul.f32 1.0, %v1589
    %v1591 = vrcp.pop %v1568
    %v1592 = vmul.f32 1.0, %v1591
    %v1593 = vrcp.pop %v1569
    %v1594 = vmul.f32 1.0, %v1593
    %v1595 = vrcp.pop %v1570
    %v1596 = vmul.f32 1.0, %v1595
    %v1597 = vrcp.pop %v1571
    %v1598 = vmul.f32 1.0, %v1597
    %v1599 = vrcp.pop %v1572
    %v1600 = vmul.f32 1.0, %v1599
    %v1601 = vrcp.pop %v1573
    %v1602 = vmul.f32 1.0, %v1601
    %v1603 = vrcp.pop %v1574
    %v1604 = vmul.f32 1.0, %v1603
    %v1605 = vrcp.pop %v1575
    %v1606 = vmul.f32 1.0, %v1605
    %v1607 = vrcp.pop %v1576
    %v1608 = vmul.f32 1.0, %v1607
    %1610 = vset.pattern.permute.xlu0 0
    %1611 = vperm.xlu0 %1610, %v1288
    %v1612 = vpop.permute.xlu0 %1611
    %1615 = vset.pattern.permute.xlu0 0
    %1616 = vperm.xlu0 %1615, %v1289
    %v1617 = vpop.permute.xlu0 %1616
    %1620 = vset.pattern.permute.xlu0 0
    %1621 = vperm.xlu0 %1620, %v1290
    %v1622 = vpop.permute.xlu0 %1621
    %1625 = vset.pattern.permute.xlu0 0
    %1626 = vperm.xlu0 %1625, %v1291
    %v1627 = vpop.permute.xlu0 %1626
    %1630 = vset.pattern.permute.xlu0 0
    %1631 = vperm.xlu0 %1630, %v1292
    %v1632 = vpop.permute.xlu0 %1631
    %1635 = vset.pattern.permute.xlu0 0
    %1636 = vperm.xlu0 %1635, %v1293
    %v1637 = vpop.permute.xlu0 %1636
    %1640 = vset.pattern.permute.xlu0 0
    %1641 = vperm.xlu0 %1640, %v1294
    %v1642 = vpop.permute.xlu0 %1641
    %1645 = vset.pattern.permute.xlu0 0
    %1646 = vperm.xlu0 %1645, %v1295
    %v1647 = vpop.permute.xlu0 %1646
    %1650 = vset.pattern.permute.xlu0 0
    %1651 = vperm.xlu0 %1650, %v1296
    %v1652 = vpop.permute.xlu0 %1651
    %1655 = vset.pattern.permute.xlu0 0
    %1656 = vperm.xlu0 %1655, %v1297
    %v1657 = vpop.permute.xlu0 %1656
    %1660 = vset.pattern.permute.xlu0 0
    %1661 = vperm.xlu0 %1660, %v1298
    %v1662 = vpop.permute.xlu0 %1661
    %1665 = vset.pattern.permute.xlu0 0
    %1666 = vperm.xlu0 %1665, %v1299
    %v1667 = vpop.permute.xlu0 %1666
    %1670 = vset.pattern.permute.xlu0 0
    %1671 = vperm.xlu0 %1670, %v1300
    %v1672 = vpop.permute.xlu0 %1671
    %1675 = vset.pattern.permute.xlu0 0
    %1676 = vperm.xlu0 %1675, %v1301
    %v1677 = vpop.permute.xlu0 %1676
    %1680 = vset.pattern.permute.xlu0 0
    %1681 = vperm.xlu0 %1680, %v1302
    %v1682 = vpop.permute.xlu0 %1681
    %1685 = vset.pattern.permute.xlu0 0
    %1686 = vperm.xlu0 %1685, %v1303
    %v1687 = vpop.permute.xlu0 %1686
    %1690 = vset.pattern.permute.xlu0 0
    %1691 = vperm.xlu0 %1690, %v1304
    %v1692 = vpop.permute.xlu0 %1691
    %1695 = vset.pattern.permute.xlu0 0
    %1696 = vperm.xlu0 %1695, %v1305
    %v1697 = vpop.permute.xlu0 %1696
    %1700 = vset.pattern.permute.xlu0 0
    %1701 = vperm.xlu0 %1700, %v1306
    %v1702 = vpop.permute.xlu0 %1701
    %1705 = vset.pattern.permute.xlu0 0
    %1706 = vperm.xlu0 %1705, %v1307
    %v1707 = vpop.permute.xlu0 %1706
    %1710 = vset.pattern.permute.xlu0 0
    %1711 = vperm.xlu0 %1710, %v1308
    %v1712 = vpop.permute.xlu0 %1711
    %1715 = vset.pattern.permute.xlu0 0
    %1716 = vperm.xlu0 %1715, %v1309
    %v1717 = vpop.permute.xlu0 %1716
    %1720 = vset.pattern.permute.xlu0 0
    %1721 = vperm.xlu0 %1720, %v1310
    %v1722 = vpop.permute.xlu0 %1721
    %1725 = vset.pattern.permute.xlu0 0
    %1726 = vperm.xlu0 %1725, %v1311
    %v1727 = vpop.permute.xlu0 %1726
    %1730 = vset.pattern.permute.xlu0 0
    %1731 = vperm.xlu0 %1730, %v1312
    %v1732 = vpop.permute.xlu0 %1731
    %1735 = vset.pattern.permute.xlu0 0
    %1736 = vperm.xlu0 %1735, %v1313
    %v1737 = vpop.permute.xlu0 %1736
    %1740 = vset.pattern.permute.xlu0 0
    %1741 = vperm.xlu0 %1740, %v1314
    %v1742 = vpop.permute.xlu0 %1741
    %1745 = vset.pattern.permute.xlu0 0
    %1746 = vperm.xlu0 %1745, %v1315
    %v1747 = vpop.permute.xlu0 %1746
    %1750 = vset.pattern.permute.xlu0 0
    %1751 = vperm.xlu0 %1750, %v1316
    %v1752 = vpop.permute.xlu0 %1751
    %1755 = vset.pattern.permute.xlu0 0
    %1756 = vperm.xlu0 %1755, %v1317
    %v1757 = vpop.permute.xlu0 %1756
    %1760 = vset.pattern.permute.xlu0 0
    %1761 = vperm.xlu0 %1760, %v1318
    %v1762 = vpop.permute.xlu0 %1761
    %1765 = vset.pattern.permute.xlu0 0
    %1766 = vperm.xlu0 %1765, %v1319
    %v1767 = vpop.permute.xlu0 %1766
    %1770 = vset.pattern.permute.xlu0 0
    %1771 = vperm.xlu0 %1770, %v1320
    %v1772 = vpop.permute.xlu0 %1771
    %1775 = vset.pattern.permute.xlu0 0
    %1776 = vperm.xlu0 %1775, %v1321
    %v1777 = vpop.permute.xlu0 %1776
    %1780 = vset.pattern.permute.xlu0 0
    %1781 = vperm.xlu0 %1780, %v1322
    %v1782 = vpop.permute.xlu0 %1781
    %1785 = vset.pattern.permute.xlu0 0
    %1786 = vperm.xlu0 %1785, %v1323
    %v1787 = vpop.permute.xlu0 %1786
    %1790 = vset.pattern.permute.xlu0 0
    %1791 = vperm.xlu0 %1790, %v1324
    %v1792 = vpop.permute.xlu0 %1791
    %1795 = vset.pattern.permute.xlu0 0
    %1796 = vperm.xlu0 %1795, %v1325
    %v1797 = vpop.permute.xlu0 %1796
    %1800 = vset.pattern.permute.xlu0 0
    %1801 = vperm.xlu0 %1800, %v1326
    %v1802 = vpop.permute.xlu0 %1801
    %1805 = vset.pattern.permute.xlu0 0
    %1806 = vperm.xlu0 %1805, %v1327
    %v1807 = vpop.permute.xlu0 %1806
    %1810 = vset.pattern.permute.xlu0 0
    %1811 = vperm.xlu0 %1810, %v1328
    %v1812 = vpop.permute.xlu0 %1811
    %1815 = vset.pattern.permute.xlu0 0
    %1816 = vperm.xlu0 %1815, %v1329
    %v1817 = vpop.permute.xlu0 %1816
    %1820 = vset.pattern.permute.xlu0 0
    %1821 = vperm.xlu0 %1820, %v1330
    %v1822 = vpop.permute.xlu0 %1821
    %1825 = vset.pattern.permute.xlu0 0
    %1826 = vperm.xlu0 %1825, %v1331
    %v1827 = vpop.permute.xlu0 %1826
    %1830 = vset.pattern.permute.xlu0 0
    %1831 = vperm.xlu0 %1830, %v1332
    %v1832 = vpop.permute.xlu0 %1831
    %1835 = vset.pattern.permute.xlu0 0
    %1836 = vperm.xlu0 %1835, %v1333
    %v1837 = vpop.permute.xlu0 %1836
    %1840 = vset.pattern.permute.xlu0 0
    %1841 = vperm.xlu0 %1840, %v1334
    %v1842 = vpop.permute.xlu0 %1841
    %1845 = vset.pattern.permute.xlu0 0
    %1846 = vperm.xlu0 %1845, %v1335
    %v1847 = vpop.permute.xlu0 %1846
    %1850 = vset.pattern.permute.xlu0 0
    %1851 = vperm.xlu0 %1850, %v1336
    %v1852 = vpop.permute.xlu0 %1851
    %1855 = vset.pattern.permute.xlu0 0
    %1856 = vperm.xlu0 %1855, %v1337
    %v1857 = vpop.permute.xlu0 %1856
    %1860 = vset.pattern.permute.xlu0 0
    %1861 = vperm.xlu0 %1860, %v1338
    %v1862 = vpop.permute.xlu0 %1861
    %1865 = vset.pattern.permute.xlu0 0
    %1866 = vperm.xlu0 %1865, %v1339
    %v1867 = vpop.permute.xlu0 %1866
    %1870 = vset.pattern.permute.xlu0 0
    %1871 = vperm.xlu0 %1870, %v1340
    %v1872 = vpop.permute.xlu0 %1871
    %1875 = vset.pattern.permute.xlu0 0
    %1876 = vperm.xlu0 %1875, %v1341
    %v1877 = vpop.permute.xlu0 %1876
    %1880 = vset.pattern.permute.xlu0 0
    %1881 = vperm.xlu0 %1880, %v1342
    %v1882 = vpop.permute.xlu0 %1881
    %1885 = vset.pattern.permute.xlu0 0
    %1886 = vperm.xlu0 %1885, %v1343
    %v1887 = vpop.permute.xlu0 %1886
    %1890 = vset.pattern.permute.xlu0 0
    %1891 = vperm.xlu0 %1890, %v1344
    %v1892 = vpop.permute.xlu0 %1891
    %1895 = vset.pattern.permute.xlu0 0
    %1896 = vperm.xlu0 %1895, %v1345
    %v1897 = vpop.permute.xlu0 %1896
    %1900 = vset.pattern.permute.xlu0 0
    %1901 = vperm.xlu0 %1900, %v1346
    %v1902 = vpop.permute.xlu0 %1901
    %1905 = vset.pattern.permute.xlu0 0
    %1906 = vperm.xlu0 %1905, %v1347
    %v1907 = vpop.permute.xlu0 %1906
    %1910 = vset.pattern.permute.xlu0 0
    %1911 = vperm.xlu0 %1910, %v1348
    %v1912 = vpop.permute.xlu0 %1911
    %1915 = vset.pattern.permute.xlu0 0
    %1916 = vperm.xlu0 %1915, %v1349
    %v1917 = vpop.permute.xlu0 %1916
    %1920 = vset.pattern.permute.xlu0 0
    %1921 = vperm.xlu0 %1920, %v1350
    %v1922 = vpop.permute.xlu0 %1921
    %1925 = vset.pattern.permute.xlu0 0
    %1926 = vperm.xlu0 %1925, %v1351
    %v1927 = vpop.permute.xlu0 %1926
    %v1929 = vmul.f32 %v1224, %v1612
    %v1930 = vmul.f32 %v1225, %v1617
    %v1931 = vmul.f32 %v1226, %v1622
    %v1932 = vmul.f32 %v1227, %v1627
    %v1933 = vmul.f32 %v1228, %v1632
    %v1934 = vmul.f32 %v1229, %v1637
    %v1935 = vmul.f32 %v1230, %v1642
    %v1936 = vmul.f32 %v1231, %v1647
    %v1937 = vmul.f32 %v1232, %v1652
    %v1938 = vmul.f32 %v1233, %v1657
    %v1939 = vmul.f32 %v1234, %v1662
    %v1940 = vmul.f32 %v1235, %v1667
    %v1941 = vmul.f32 %v1236, %v1672
    %v1942 = vmul.f32 %v1237, %v1677
    %v1943 = vmul.f32 %v1238, %v1682
    %v1944 = vmul.f32 %v1239, %v1687
    %v1945 = vmul.f32 %v1240, %v1692
    %v1946 = vmul.f32 %v1241, %v1697
    %v1947 = vmul.f32 %v1242, %v1702
    %v1948 = vmul.f32 %v1243, %v1707
    %v1949 = vmul.f32 %v1244, %v1712
    %v1950 = vmul.f32 %v1245, %v1717
    %v1951 = vmul.f32 %v1246, %v1722
    %v1952 = vmul.f32 %v1247, %v1727
    %v1953 = vmul.f32 %v1248, %v1732
    %v1954 = vmul.f32 %v1249, %v1737
    %v1955 = vmul.f32 %v1250, %v1742
    %v1956 = vmul.f32 %v1251, %v1747
    %v1957 = vmul.f32 %v1252, %v1752
    %v1958 = vmul.f32 %v1253, %v1757
    %v1959 = vmul.f32 %v1254, %v1762
    %v1960 = vmul.f32 %v1255, %v1767
    %v1961 = vmul.f32 %v1256, %v1772
    %v1962 = vmul.f32 %v1257, %v1777
    %v1963 = vmul.f32 %v1258, %v1782
    %v1964 = vmul.f32 %v1259, %v1787
    %v1965 = vmul.f32 %v1260, %v1792
    %v1966 = vmul.f32 %v1261, %v1797
    %v1967 = vmul.f32 %v1262, %v1802
    %v1968 = vmul.f32 %v1263, %v1807
    %v1969 = vmul.f32 %v1264, %v1812
    %v1970 = vmul.f32 %v1265, %v1817
    %v1971 = vmul.f32 %v1266, %v1822
    %v1972 = vmul.f32 %v1267, %v1827
    %v1973 = vmul.f32 %v1268, %v1832
    %v1974 = vmul.f32 %v1269, %v1837
    %v1975 = vmul.f32 %v1270, %v1842
    %v1976 = vmul.f32 %v1271, %v1847
    %v1977 = vmul.f32 %v1272, %v1852
    %v1978 = vmul.f32 %v1273, %v1857
    %v1979 = vmul.f32 %v1274, %v1862
    %v1980 = vmul.f32 %v1275, %v1867
    %v1981 = vmul.f32 %v1276, %v1872
    %v1982 = vmul.f32 %v1277, %v1877
    %v1983 = vmul.f32 %v1278, %v1882
    %v1984 = vmul.f32 %v1279, %v1887
    %v1985 = vmul.f32 %v1280, %v1892
    %v1986 = vmul.f32 %v1281, %v1897
    %v1987 = vmul.f32 %v1282, %v1902
    %v1988 = vmul.f32 %v1283, %v1907
    %v1989 = vmul.f32 %v1284, %v1912
    %v1990 = vmul.f32 %v1285, %v1917
    %v1991 = vmul.f32 %v1286, %v1922
    %v1992 = vmul.f32 %v1287, %v1927
    %vm1993 = vcmask 523264
    %v1994 = vsel %vm1993, %v1929, 0.0
    %v1995 = vsel %vm1993, %v1930, 0.0
    %v1996 = vadd.f32 %v1994, %v1995
    %v1997 = vsel %vm1993, %v1931, 0.0
    %v1998 = vadd.f32 %v1996, %v1997
    %v1999 = vsel %vm1993, %v1932, 0.0
    %v2000 = vadd.f32 %v1998, %v1999
    %v2001 = vrot.slane %v2000, 4
    %v2002 = vadd.f32 %v2000, %v2001
    %v2003 = vrot.slane %v2002, 2
    %v2004 = vadd.f32 %v2002, %v2003
    %v2005 = vrot.slane %v2004, 1
    %v2006 = vadd.f32 %v2004, %v2005
    %v2007 = vsel %vm1993, %v1933, 0.0
    %v2008 = vsel %vm1993, %v1934, 0.0
    %v2009 = vadd.f32 %v2007, %v2008
    %v2010 = vsel %vm1993, %v1935, 0.0
    %v2011 = vadd.f32 %v2009, %v2010
    %v2012 = vsel %vm1993, %v1936, 0.0
    %v2013 = vadd.f32 %v2011, %v2012
    %v2014 = vrot.slane %v2013, 4
    %v2015 = vadd.f32 %v2013, %v2014
    %v2016 = vrot.slane %v2015, 2
    %v2017 = vadd.f32 %v2015, %v2016
    %v2018 = vrot.slane %v2017, 1
    %v2019 = vadd.f32 %v2017, %v2018
    %v2020 = vsel %vm1993, %v1937, 0.0
    %v2021 = vsel %vm1993, %v1938, 0.0
    %v2022 = vadd.f32 %v2020, %v2021
    %v2023 = vsel %vm1993, %v1939, 0.0
    %v2024 = vadd.f32 %v2022, %v2023
    %v2025 = vsel %vm1993, %v1940, 0.0
    %v2026 = vadd.f32 %v2024, %v2025
    %v2027 = vrot.slane %v2026, 4
    %v2028 = vadd.f32 %v2026, %v2027
    %v2029 = vrot.slane %v2028, 2
    %v2030 = vadd.f32 %v2028, %v2029
    %v2031 = vrot.slane %v2030, 1
    %v2032 = vadd.f32 %v2030, %v2031
    %v2033 = vsel %vm1993, %v1941, 0.0
    %v2034 = vsel %vm1993, %v1942, 0.0
    %v2035 = vadd.f32 %v2033, %v2034
    %v2036 = vsel %vm1993, %v1943, 0.0
    %v2037 = vadd.f32 %v2035, %v2036
    %v2038 = vsel %vm1993, %v1944, 0.0
    %v2039 = vadd.f32 %v2037, %v2038
    %v2040 = vrot.slane %v2039, 4
    %v2041 = vadd.f32 %v2039, %v2040
    %v2042 = vrot.slane %v2041, 2
    %v2043 = vadd.f32 %v2041, %v2042
    %v2044 = vrot.slane %v2043, 1
    %v2045 = vadd.f32 %v2043, %v2044
    %v2046 = vsel %vm1993, %v1945, 0.0
    %v2047 = vsel %vm1993, %v1946, 0.0
    %v2048 = vadd.f32 %v2046, %v2047
    %v2049 = vsel %vm1993, %v1947, 0.0
    %v2050 = vadd.f32 %v2048, %v2049
    %v2051 = vsel %vm1993, %v1948, 0.0
    %v2052 = vadd.f32 %v2050, %v2051
    %v2053 = vrot.slane %v2052, 4
    %v2054 = vadd.f32 %v2052, %v2053
    %v2055 = vrot.slane %v2054, 2
    %v2056 = vadd.f32 %v2054, %v2055
    %v2057 = vrot.slane %v2056, 1
    %v2058 = vadd.f32 %v2056, %v2057
    %v2059 = vsel %vm1993, %v1949, 0.0
    %v2060 = vsel %vm1993, %v1950, 0.0
    %v2061 = vadd.f32 %v2059, %v2060
    %v2062 = vsel %vm1993, %v1951, 0.0
    %v2063 = vadd.f32 %v2061, %v2062
    %v2064 = vsel %vm1993, %v1952, 0.0
    %v2065 = vadd.f32 %v2063, %v2064
    %v2066 = vrot.slane %v2065, 4
    %v2067 = vadd.f32 %v2065, %v2066
    %v2068 = vrot.slane %v2067, 2
    %v2069 = vadd.f32 %v2067, %v2068
    %v2070 = vrot.slane %v2069, 1
    %v2071 = vadd.f32 %v2069, %v2070
    %v2072 = vsel %vm1993, %v1953, 0.0
    %v2073 = vsel %vm1993, %v1954, 0.0
    %v2074 = vadd.f32 %v2072, %v2073
    %v2075 = vsel %vm1993, %v1955, 0.0
    %v2076 = vadd.f32 %v2074, %v2075
    %v2077 = vsel %vm1993, %v1956, 0.0
    %v2078 = vadd.f32 %v2076, %v2077
    %v2079 = vrot.slane %v2078, 4
    %v2080 = vadd.f32 %v2078, %v2079
    %v2081 = vrot.slane %v2080, 2
    %v2082 = vadd.f32 %v2080, %v2081
    %v2083 = vrot.slane %v2082, 1
    %v2084 = vadd.f32 %v2082, %v2083
    %v2085 = vsel %vm1993, %v1957, 0.0
    %v2086 = vsel %vm1993, %v1958, 0.0
    %v2087 = vadd.f32 %v2085, %v2086
    %v2088 = vsel %vm1993, %v1959, 0.0
    %v2089 = vadd.f32 %v2087, %v2088
    %v2090 = vsel %vm1993, %v1960, 0.0
    %v2091 = vadd.f32 %v2089, %v2090
    %v2092 = vrot.slane %v2091, 4
    %v2093 = vadd.f32 %v2091, %v2092
    %v2094 = vrot.slane %v2093, 2
    %v2095 = vadd.f32 %v2093, %v2094
    %v2096 = vrot.slane %v2095, 1
    %v2097 = vadd.f32 %v2095, %v2096
    %v2098 = vsel %vm1993, %v1961, 0.0
    %v2099 = vsel %vm1993, %v1962, 0.0
    %v2100 = vadd.f32 %v2098, %v2099
    %v2101 = vsel %vm1993, %v1963, 0.0
    %v2102 = vadd.f32 %v2100, %v2101
    %v2103 = vsel %vm1993, %v1964, 0.0
    %v2104 = vadd.f32 %v2102, %v2103
    %v2105 = vrot.slane %v2104, 4
    %v2106 = vadd.f32 %v2104, %v2105
    %v2107 = vrot.slane %v2106, 2
    %v2108 = vadd.f32 %v2106, %v2107
    %v2109 = vrot.slane %v2108, 1
    %v2110 = vadd.f32 %v2108, %v2109
    %v2111 = vsel %vm1993, %v1965, 0.0
    %v2112 = vsel %vm1993, %v1966, 0.0
    %v2113 = vadd.f32 %v2111, %v2112
    %v2114 = vsel %vm1993, %v1967, 0.0
    %v2115 = vadd.f32 %v2113, %v2114
    %v2116 = vsel %vm1993, %v1968, 0.0
    %v2117 = vadd.f32 %v2115, %v2116
    %v2118 = vrot.slane %v2117, 4
    %v2119 = vadd.f32 %v2117, %v2118
    %v2120 = vrot.slane %v2119, 2
    %v2121 = vadd.f32 %v2119, %v2120
    %v2122 = vrot.slane %v2121, 1
    %v2123 = vadd.f32 %v2121, %v2122
    %v2124 = vsel %vm1993, %v1969, 0.0
    %v2125 = vsel %vm1993, %v1970, 0.0
    %v2126 = vadd.f32 %v2124, %v2125
    %v2127 = vsel %vm1993, %v1971, 0.0
    %v2128 = vadd.f32 %v2126, %v2127
    %v2129 = vsel %vm1993, %v1972, 0.0
    %v2130 = vadd.f32 %v2128, %v2129
    %v2131 = vrot.slane %v2130, 4
    %v2132 = vadd.f32 %v2130, %v2131
    %v2133 = vrot.slane %v2132, 2
    %v2134 = vadd.f32 %v2132, %v2133
    %v2135 = vrot.slane %v2134, 1
    %v2136 = vadd.f32 %v2134, %v2135
    %v2137 = vsel %vm1993, %v1973, 0.0
    %v2138 = vsel %vm1993, %v1974, 0.0
    %v2139 = vadd.f32 %v2137, %v2138
    %v2140 = vsel %vm1993, %v1975, 0.0
    %v2141 = vadd.f32 %v2139, %v2140
    %v2142 = vsel %vm1993, %v1976, 0.0
    %v2143 = vadd.f32 %v2141, %v2142
    %v2144 = vrot.slane %v2143, 4
    %v2145 = vadd.f32 %v2143, %v2144
    %v2146 = vrot.slane %v2145, 2
    %v2147 = vadd.f32 %v2145, %v2146
    %v2148 = vrot.slane %v2147, 1
    %v2149 = vadd.f32 %v2147, %v2148
    %v2150 = vsel %vm1993, %v1977, 0.0
    %v2151 = vsel %vm1993, %v1978, 0.0
    %v2152 = vadd.f32 %v2150, %v2151
    %v2153 = vsel %vm1993, %v1979, 0.0
    %v2154 = vadd.f32 %v2152, %v2153
    %v2155 = vsel %vm1993, %v1980, 0.0
    %v2156 = vadd.f32 %v2154, %v2155
    %v2157 = vrot.slane %v2156, 4
    %v2158 = vadd.f32 %v2156, %v2157
    %v2159 = vrot.slane %v2158, 2
    %v2160 = vadd.f32 %v2158, %v2159
    %v2161 = vrot.slane %v2160, 1
    %v2162 = vadd.f32 %v2160, %v2161
    %v2163 = vsel %vm1993, %v1981, 0.0
    %v2164 = vsel %vm1993, %v1982, 0.0
    %v2165 = vadd.f32 %v2163, %v2164
    %v2166 = vsel %vm1993, %v1983, 0.0
    %v2167 = vadd.f32 %v2165, %v2166
    %v2168 = vsel %vm1993, %v1984, 0.0
    %v2169 = vadd.f32 %v2167, %v2168
    %v2170 = vrot.slane %v2169, 4
    %v2171 = vadd.f32 %v2169, %v2170
    %v2172 = vrot.slane %v2171, 2
    %v2173 = vadd.f32 %v2171, %v2172
    %v2174 = vrot.slane %v2173, 1
    %v2175 = vadd.f32 %v2173, %v2174
    %v2176 = vsel %vm1993, %v1985, 0.0
    %v2177 = vsel %vm1993, %v1986, 0.0
    %v2178 = vadd.f32 %v2176, %v2177
    %v2179 = vsel %vm1993, %v1987, 0.0
    %v2180 = vadd.f32 %v2178, %v2179
    %v2181 = vsel %vm1993, %v1988, 0.0
    %v2182 = vadd.f32 %v2180, %v2181
    %v2183 = vrot.slane %v2182, 4
    %v2184 = vadd.f32 %v2182, %v2183
    %v2185 = vrot.slane %v2184, 2
    %v2186 = vadd.f32 %v2184, %v2185
    %v2187 = vrot.slane %v2186, 1
    %v2188 = vadd.f32 %v2186, %v2187
    %v2189 = vsel %vm1993, %v1989, 0.0
    %v2190 = vsel %vm1993, %v1990, 0.0
    %v2191 = vadd.f32 %v2189, %v2190
    %v2192 = vsel %vm1993, %v1991, 0.0
    %v2193 = vadd.f32 %v2191, %v2192
    %v2194 = vsel %vm1993, %v1992, 0.0
    %v2195 = vadd.f32 %v2193, %v2194
    %v2196 = vrot.slane %v2195, 4
    %v2197 = vadd.f32 %v2195, %v2196
    %v2198 = vrot.slane %v2197, 2
    %v2199 = vadd.f32 %v2197, %v2198
    %v2200 = vrot.slane %v2199, 1
    %v2201 = vadd.f32 %v2199, %v2200
    %v2202 = vmul.f32 %v1929, %v1224
    %v2203 = vmul.f32 %v1930, %v1225
    %v2204 = vmul.f32 %v1931, %v1226
    %v2205 = vmul.f32 %v1932, %v1227
    %v2206 = vmul.f32 %v1933, %v1228
    %v2207 = vmul.f32 %v1934, %v1229
    %v2208 = vmul.f32 %v1935, %v1230
    %v2209 = vmul.f32 %v1936, %v1231
    %v2210 = vmul.f32 %v1937, %v1232
    %v2211 = vmul.f32 %v1938, %v1233
    %v2212 = vmul.f32 %v1939, %v1234
    %v2213 = vmul.f32 %v1940, %v1235
    %v2214 = vmul.f32 %v1941, %v1236
    %v2215 = vmul.f32 %v1942, %v1237
    %v2216 = vmul.f32 %v1943, %v1238
    %v2217 = vmul.f32 %v1944, %v1239
    %v2218 = vmul.f32 %v1945, %v1240
    %v2219 = vmul.f32 %v1946, %v1241
    %v2220 = vmul.f32 %v1947, %v1242
    %v2221 = vmul.f32 %v1948, %v1243
    %v2222 = vmul.f32 %v1949, %v1244
    %v2223 = vmul.f32 %v1950, %v1245
    %v2224 = vmul.f32 %v1951, %v1246
    %v2225 = vmul.f32 %v1952, %v1247
    %v2226 = vmul.f32 %v1953, %v1248
    %v2227 = vmul.f32 %v1954, %v1249
    %v2228 = vmul.f32 %v1955, %v1250
    %v2229 = vmul.f32 %v1956, %v1251
    %v2230 = vmul.f32 %v1957, %v1252
    %v2231 = vmul.f32 %v1958, %v1253
    %v2232 = vmul.f32 %v1959, %v1254
    %v2233 = vmul.f32 %v1960, %v1255
    %v2234 = vmul.f32 %v1961, %v1256
    %v2235 = vmul.f32 %v1962, %v1257
    %v2236 = vmul.f32 %v1963, %v1258
    %v2237 = vmul.f32 %v1964, %v1259
    %v2238 = vmul.f32 %v1965, %v1260
    %v2239 = vmul.f32 %v1966, %v1261
    %v2240 = vmul.f32 %v1967, %v1262
    %v2241 = vmul.f32 %v1968, %v1263
    %v2242 = vmul.f32 %v1969, %v1264
    %v2243 = vmul.f32 %v1970, %v1265
    %v2244 = vmul.f32 %v1971, %v1266
    %v2245 = vmul.f32 %v1972, %v1267
    %v2246 = vmul.f32 %v1973, %v1268
    %v2247 = vmul.f32 %v1974, %v1269
    %v2248 = vmul.f32 %v1975, %v1270
    %v2249 = vmul.f32 %v1976, %v1271
    %v2250 = vmul.f32 %v1977, %v1272
    %v2251 = vmul.f32 %v1978, %v1273
    %v2252 = vmul.f32 %v1979, %v1274
    %v2253 = vmul.f32 %v1980, %v1275
    %v2254 = vmul.f32 %v1981, %v1276
    %v2255 = vmul.f32 %v1982, %v1277
    %v2256 = vmul.f32 %v1983, %v1278
    %v2257 = vmul.f32 %v1984, %v1279
    %v2258 = vmul.f32 %v1985, %v1280
    %v2259 = vmul.f32 %v1986, %v1281
    %v2260 = vmul.f32 %v1987, %v1282
    %v2261 = vmul.f32 %v1988, %v1283
    %v2262 = vmul.f32 %v1989, %v1284
    %v2263 = vmul.f32 %v1990, %v1285
    %v2264 = vmul.f32 %v1991, %v1286
    %v2265 = vmul.f32 %v1992, %v1287
    %v2266 = vsel %vm1993, %v2202, 0.0
    %v2267 = vsel %vm1993, %v2203, 0.0
    %v2268 = vadd.f32 %v2266, %v2267
    %v2269 = vsel %vm1993, %v2204, 0.0
    %v2270 = vadd.f32 %v2268, %v2269
    %v2271 = vsel %vm1993, %v2205, 0.0
    %v2272 = vadd.f32 %v2270, %v2271
    %v2273 = vrot.slane %v2272, 4
    %v2274 = vadd.f32 %v2272, %v2273
    %v2275 = vrot.slane %v2274, 2
    %v2276 = vadd.f32 %v2274, %v2275
    %v2277 = vrot.slane %v2276, 1
    %v2278 = vadd.f32 %v2276, %v2277
    %v2279 = vsel %vm1993, %v2206, 0.0
    %v2280 = vsel %vm1993, %v2207, 0.0
    %v2281 = vadd.f32 %v2279, %v2280
    %v2282 = vsel %vm1993, %v2208, 0.0
    %v2283 = vadd.f32 %v2281, %v2282
    %v2284 = vsel %vm1993, %v2209, 0.0
    %v2285 = vadd.f32 %v2283, %v2284
    %v2286 = vrot.slane %v2285, 4
    %v2287 = vadd.f32 %v2285, %v2286
    %v2288 = vrot.slane %v2287, 2
    %v2289 = vadd.f32 %v2287, %v2288
    %v2290 = vrot.slane %v2289, 1
    %v2291 = vadd.f32 %v2289, %v2290
    %v2292 = vsel %vm1993, %v2210, 0.0
    %v2293 = vsel %vm1993, %v2211, 0.0
    %v2294 = vadd.f32 %v2292, %v2293
    %v2295 = vsel %vm1993, %v2212, 0.0
    %v2296 = vadd.f32 %v2294, %v2295
    %v2297 = vsel %vm1993, %v2213, 0.0
    %v2298 = vadd.f32 %v2296, %v2297
    %v2299 = vrot.slane %v2298, 4
    %v2300 = vadd.f32 %v2298, %v2299
    %v2301 = vrot.slane %v2300, 2
    %v2302 = vadd.f32 %v2300, %v2301
    %v2303 = vrot.slane %v2302, 1
    %v2304 = vadd.f32 %v2302, %v2303
    %v2305 = vsel %vm1993, %v2214, 0.0
    %v2306 = vsel %vm1993, %v2215, 0.0
    %v2307 = vadd.f32 %v2305, %v2306
    %v2308 = vsel %vm1993, %v2216, 0.0
    %v2309 = vadd.f32 %v2307, %v2308
    %v2310 = vsel %vm1993, %v2217, 0.0
    %v2311 = vadd.f32 %v2309, %v2310
    %v2312 = vrot.slane %v2311, 4
    %v2313 = vadd.f32 %v2311, %v2312
    %v2314 = vrot.slane %v2313, 2
    %v2315 = vadd.f32 %v2313, %v2314
    %v2316 = vrot.slane %v2315, 1
    %v2317 = vadd.f32 %v2315, %v2316
    %v2318 = vsel %vm1993, %v2218, 0.0
    %v2319 = vsel %vm1993, %v2219, 0.0
    %v2320 = vadd.f32 %v2318, %v2319
    %v2321 = vsel %vm1993, %v2220, 0.0
    %v2322 = vadd.f32 %v2320, %v2321
    %v2323 = vsel %vm1993, %v2221, 0.0
    %v2324 = vadd.f32 %v2322, %v2323
    %v2325 = vrot.slane %v2324, 4
    %v2326 = vadd.f32 %v2324, %v2325
    %v2327 = vrot.slane %v2326, 2
    %v2328 = vadd.f32 %v2326, %v2327
    %v2329 = vrot.slane %v2328, 1
    %v2330 = vadd.f32 %v2328, %v2329
    %v2331 = vsel %vm1993, %v2222, 0.0
    %v2332 = vsel %vm1993, %v2223, 0.0
    %v2333 = vadd.f32 %v2331, %v2332
    %v2334 = vsel %vm1993, %v2224, 0.0
    %v2335 = vadd.f32 %v2333, %v2334
    %v2336 = vsel %vm1993, %v2225, 0.0
    %v2337 = vadd.f32 %v2335, %v2336
    %v2338 = vrot.slane %v2337, 4
    %v2339 = vadd.f32 %v2337, %v2338
    %v2340 = vrot.slane %v2339, 2
    %v2341 = vadd.f32 %v2339, %v2340
    %v2342 = vrot.slane %v2341, 1
    %v2343 = vadd.f32 %v2341, %v2342
    %v2344 = vsel %vm1993, %v2226, 0.0
    %v2345 = vsel %vm1993, %v2227, 0.0
    %v2346 = vadd.f32 %v2344, %v2345
    %v2347 = vsel %vm1993, %v2228, 0.0
    %v2348 = vadd.f32 %v2346, %v2347
    %v2349 = vsel %vm1993, %v2229, 0.0
    %v2350 = vadd.f32 %v2348, %v2349
    %v2351 = vrot.slane %v2350, 4
    %v2352 = vadd.f32 %v2350, %v2351
    %v2353 = vrot.slane %v2352, 2
    %v2354 = vadd.f32 %v2352, %v2353
    %v2355 = vrot.slane %v2354, 1
    %v2356 = vadd.f32 %v2354, %v2355
    %v2357 = vsel %vm1993, %v2230, 0.0
    %v2358 = vsel %vm1993, %v2231, 0.0
    %v2359 = vadd.f32 %v2357, %v2358
    %v2360 = vsel %vm1993, %v2232, 0.0
    %v2361 = vadd.f32 %v2359, %v2360
    %v2362 = vsel %vm1993, %v2233, 0.0
    %v2363 = vadd.f32 %v2361, %v2362
    %v2364 = vrot.slane %v2363, 4
    %v2365 = vadd.f32 %v2363, %v2364
    %v2366 = vrot.slane %v2365, 2
    %v2367 = vadd.f32 %v2365, %v2366
    %v2368 = vrot.slane %v2367, 1
    %v2369 = vadd.f32 %v2367, %v2368
    %v2370 = vsel %vm1993, %v2234, 0.0
    %v2371 = vsel %vm1993, %v2235, 0.0
    %v2372 = vadd.f32 %v2370, %v2371
    %v2373 = vsel %vm1993, %v2236, 0.0
    %v2374 = vadd.f32 %v2372, %v2373
    %v2375 = vsel %vm1993, %v2237, 0.0
    %v2376 = vadd.f32 %v2374, %v2375
    %v2377 = vrot.slane %v2376, 4
    %v2378 = vadd.f32 %v2376, %v2377
    %v2379 = vrot.slane %v2378, 2
    %v2380 = vadd.f32 %v2378, %v2379
    %v2381 = vrot.slane %v2380, 1
    %v2382 = vadd.f32 %v2380, %v2381
    %v2383 = vsel %vm1993, %v2238, 0.0
    %v2384 = vsel %vm1993, %v2239, 0.0
    %v2385 = vadd.f32 %v2383, %v2384
    %v2386 = vsel %vm1993, %v2240, 0.0
    %v2387 = vadd.f32 %v2385, %v2386
    %v2388 = vsel %vm1993, %v2241, 0.0
    %v2389 = vadd.f32 %v2387, %v2388
    %v2390 = vrot.slane %v2389, 4
    %v2391 = vadd.f32 %v2389, %v2390
    %v2392 = vrot.slane %v2391, 2
    %v2393 = vadd.f32 %v2391, %v2392
    %v2394 = vrot.slane %v2393, 1
    %v2395 = vadd.f32 %v2393, %v2394
    %v2396 = vsel %vm1993, %v2242, 0.0
    %v2397 = vsel %vm1993, %v2243, 0.0
    %v2398 = vadd.f32 %v2396, %v2397
    %v2399 = vsel %vm1993, %v2244, 0.0
    %v2400 = vadd.f32 %v2398, %v2399
    %v2401 = vsel %vm1993, %v2245, 0.0
    %v2402 = vadd.f32 %v2400, %v2401
    %v2403 = vrot.slane %v2402, 4
    %v2404 = vadd.f32 %v2402, %v2403
    %v2405 = vrot.slane %v2404, 2
    %v2406 = vadd.f32 %v2404, %v2405
    %v2407 = vrot.slane %v2406, 1
    %v2408 = vadd.f32 %v2406, %v2407
    %v2409 = vsel %vm1993, %v2246, 0.0
    %v2410 = vsel %vm1993, %v2247, 0.0
    %v2411 = vadd.f32 %v2409, %v2410
    %v2412 = vsel %vm1993, %v2248, 0.0
    %v2413 = vadd.f32 %v2411, %v2412
    %v2414 = vsel %vm1993, %v2249, 0.0
    %v2415 = vadd.f32 %v2413, %v2414
    %v2416 = vrot.slane %v2415, 4
    %v2417 = vadd.f32 %v2415, %v2416
    %v2418 = vrot.slane %v2417, 2
    %v2419 = vadd.f32 %v2417, %v2418
    %v2420 = vrot.slane %v2419, 1
    %v2421 = vadd.f32 %v2419, %v2420
    %v2422 = vsel %vm1993, %v2250, 0.0
    %v2423 = vsel %vm1993, %v2251, 0.0
    %v2424 = vadd.f32 %v2422, %v2423
    %v2425 = vsel %vm1993, %v2252, 0.0
    %v2426 = vadd.f32 %v2424, %v2425
    %v2427 = vsel %vm1993, %v2253, 0.0
    %v2428 = vadd.f32 %v2426, %v2427
    %v2429 = vrot.slane %v2428, 4
    %v2430 = vadd.f32 %v2428, %v2429
    %v2431 = vrot.slane %v2430, 2
    %v2432 = vadd.f32 %v2430, %v2431
    %v2433 = vrot.slane %v2432, 1
    %v2434 = vadd.f32 %v2432, %v2433
    %v2435 = vsel %vm1993, %v2254, 0.0
    %v2436 = vsel %vm1993, %v2255, 0.0
    %v2437 = vadd.f32 %v2435, %v2436
    %v2438 = vsel %vm1993, %v2256, 0.0
    %v2439 = vadd.f32 %v2437, %v2438
    %v2440 = vsel %vm1993, %v2257, 0.0
    %v2441 = vadd.f32 %v2439, %v2440
    %v2442 = vrot.slane %v2441, 4
    %v2443 = vadd.f32 %v2441, %v2442
    %v2444 = vrot.slane %v2443, 2
    %v2445 = vadd.f32 %v2443, %v2444
    %v2446 = vrot.slane %v2445, 1
    %v2447 = vadd.f32 %v2445, %v2446
    %v2448 = vsel %vm1993, %v2258, 0.0
    %v2449 = vsel %vm1993, %v2259, 0.0
    %v2450 = vadd.f32 %v2448, %v2449
    %v2451 = vsel %vm1993, %v2260, 0.0
    %v2452 = vadd.f32 %v2450, %v2451
    %v2453 = vsel %vm1993, %v2261, 0.0
    %v2454 = vadd.f32 %v2452, %v2453
    %v2455 = vrot.slane %v2454, 4
    %v2456 = vadd.f32 %v2454, %v2455
    %v2457 = vrot.slane %v2456, 2
    %v2458 = vadd.f32 %v2456, %v2457
    %v2459 = vrot.slane %v2458, 1
    %v2460 = vadd.f32 %v2458, %v2459
    %v2461 = vsel %vm1993, %v2262, 0.0
    %v2462 = vsel %vm1993, %v2263, 0.0
    %v2463 = vadd.f32 %v2461, %v2462
    %v2464 = vsel %vm1993, %v2264, 0.0
    %v2465 = vadd.f32 %v2463, %v2464
    %v2466 = vsel %vm1993, %v2265, 0.0
    %v2467 = vadd.f32 %v2465, %v2466
    %v2468 = vrot.slane %v2467, 4
    %v2469 = vadd.f32 %v2467, %v2468
    %v2470 = vrot.slane %v2469, 2
    %v2471 = vadd.f32 %v2469, %v2470
    %v2472 = vrot.slane %v2471, 1
    %v2473 = vadd.f32 %v2471, %v2472
    %2475 = vset.pattern.permute.xlu0 0
    %2476 = vperm.xlu0 %2475, %v1578
    %v2477 = vpop.permute.xlu0 %2476
    %2480 = vset.pattern.permute.xlu0 0
    %2481 = vperm.xlu0 %2480, %v1580
    %v2482 = vpop.permute.xlu0 %2481
    %2485 = vset.pattern.permute.xlu0 0
    %2486 = vperm.xlu0 %2485, %v1582
    %v2487 = vpop.permute.xlu0 %2486
    %2490 = vset.pattern.permute.xlu0 0
    %2491 = vperm.xlu0 %2490, %v1584
    %v2492 = vpop.permute.xlu0 %2491
    %2495 = vset.pattern.permute.xlu0 0
    %2496 = vperm.xlu0 %2495, %v1586
    %v2497 = vpop.permute.xlu0 %2496
    %2500 = vset.pattern.permute.xlu0 0
    %2501 = vperm.xlu0 %2500, %v1588
    %v2502 = vpop.permute.xlu0 %2501
    %2505 = vset.pattern.permute.xlu0 0
    %2506 = vperm.xlu0 %2505, %v1590
    %v2507 = vpop.permute.xlu0 %2506
    %2510 = vset.pattern.permute.xlu0 0
    %2511 = vperm.xlu0 %2510, %v1592
    %v2512 = vpop.permute.xlu0 %2511
    %2515 = vset.pattern.permute.xlu0 0
    %2516 = vperm.xlu0 %2515, %v1594
    %v2517 = vpop.permute.xlu0 %2516
    %2520 = vset.pattern.permute.xlu0 0
    %2521 = vperm.xlu0 %2520, %v1596
    %v2522 = vpop.permute.xlu0 %2521
    %2525 = vset.pattern.permute.xlu0 0
    %2526 = vperm.xlu0 %2525, %v1598
    %v2527 = vpop.permute.xlu0 %2526
    %2530 = vset.pattern.permute.xlu0 0
    %2531 = vperm.xlu0 %2530, %v1600
    %v2532 = vpop.permute.xlu0 %2531
    %2535 = vset.pattern.permute.xlu0 0
    %2536 = vperm.xlu0 %2535, %v1602
    %v2537 = vpop.permute.xlu0 %2536
    %2540 = vset.pattern.permute.xlu0 0
    %2541 = vperm.xlu0 %2540, %v1604
    %v2542 = vpop.permute.xlu0 %2541
    %2545 = vset.pattern.permute.xlu0 0
    %2546 = vperm.xlu0 %2545, %v1606
    %v2547 = vpop.permute.xlu0 %2546
    %2550 = vset.pattern.permute.xlu0 0
    %2551 = vperm.xlu0 %2550, %v1608
    %v2552 = vpop.permute.xlu0 %2551
    %v2554 = vmul.f32 %v2006, %v2477
    %v2555 = vmul.f32 %v2019, %v2482
    %v2556 = vmul.f32 %v2032, %v2487
    %v2557 = vmul.f32 %v2045, %v2492
    %v2558 = vmul.f32 %v2058, %v2497
    %v2559 = vmul.f32 %v2071, %v2502
    %v2560 = vmul.f32 %v2084, %v2507
    %v2561 = vmul.f32 %v2097, %v2512
    %v2562 = vmul.f32 %v2110, %v2517
    %v2563 = vmul.f32 %v2123, %v2522
    %v2564 = vmul.f32 %v2136, %v2527
    %v2565 = vmul.f32 %v2149, %v2532
    %v2566 = vmul.f32 %v2162, %v2537
    %v2567 = vmul.f32 %v2175, %v2542
    %v2568 = vmul.f32 %v2188, %v2547
    %v2569 = vmul.f32 %v2201, %v2552
    %v2570 = vmax.f32 %v1365, 2.0
    %v2571 = vmax.f32 %v1378, 2.0
    %v2572 = vmax.f32 %v1391, 2.0
    %v2573 = vmax.f32 %v1404, 2.0
    %v2574 = vmax.f32 %v1417, 2.0
    %v2575 = vmax.f32 %v1430, 2.0
    %v2576 = vmax.f32 %v1443, 2.0
    %v2577 = vmax.f32 %v1456, 2.0
    %v2578 = vmax.f32 %v1469, 2.0
    %v2579 = vmax.f32 %v1482, 2.0
    %v2580 = vmax.f32 %v1495, 2.0
    %v2581 = vmax.f32 %v1508, 2.0
    %v2582 = vmax.f32 %v1521, 2.0
    %v2583 = vmax.f32 %v1534, 2.0
    %v2584 = vmax.f32 %v1547, 2.0
    %v2585 = vmax.f32 %v1560, 2.0
    %v2586 = vmul.f32 %v2554, %v2006
    %v2587 = vmul.f32 %v2555, %v2019
    %v2588 = vmul.f32 %v2556, %v2032
    %v2589 = vmul.f32 %v2557, %v2045
    %v2590 = vmul.f32 %v2558, %v2058
    %v2591 = vmul.f32 %v2559, %v2071
    %v2592 = vmul.f32 %v2560, %v2084
    %v2593 = vmul.f32 %v2561, %v2097
    %v2594 = vmul.f32 %v2562, %v2110
    %v2595 = vmul.f32 %v2563, %v2123
    %v2596 = vmul.f32 %v2564, %v2136
    %v2597 = vmul.f32 %v2565, %v2149
    %v2598 = vmul.f32 %v2566, %v2162
    %v2599 = vmul.f32 %v2567, %v2175
    %v2600 = vmul.f32 %v2568, %v2188
    %v2601 = vmul.f32 %v2569, %v2201
    %v2602 = vsub.f32 %v2278, %v2586
    %v2603 = vsub.f32 %v2291, %v2587
    %v2604 = vsub.f32 %v2304, %v2588
    %v2605 = vsub.f32 %v2317, %v2589
    %v2606 = vsub.f32 %v2330, %v2590
    %v2607 = vsub.f32 %v2343, %v2591
    %v2608 = vsub.f32 %v2356, %v2592
    %v2609 = vsub.f32 %v2369, %v2593
    %v2610 = vsub.f32 %v2382, %v2594
    %v2611 = vsub.f32 %v2395, %v2595
    %v2612 = vsub.f32 %v2408, %v2596
    %v2613 = vsub.f32 %v2421, %v2597
    %v2614 = vsub.f32 %v2434, %v2598
    %v2615 = vsub.f32 %v2447, %v2599
    %v2616 = vsub.f32 %v2460, %v2600
    %v2617 = vsub.f32 %v2473, %v2601
    %v2618 = vmax.f32 %v2602, 0.0
    %v2619 = vmax.f32 %v2603, 0.0
    %v2620 = vmax.f32 %v2604, 0.0
    %v2621 = vmax.f32 %v2605, 0.0
    %v2622 = vmax.f32 %v2606, 0.0
    %v2623 = vmax.f32 %v2607, 0.0
    %v2624 = vmax.f32 %v2608, 0.0
    %v2625 = vmax.f32 %v2609, 0.0
    %v2626 = vmax.f32 %v2610, 0.0
    %v2627 = vmax.f32 %v2611, 0.0
    %v2628 = vmax.f32 %v2612, 0.0
    %v2629 = vmax.f32 %v2613, 0.0
    %v2630 = vmax.f32 %v2614, 0.0
    %v2631 = vmax.f32 %v2615, 0.0
    %v2632 = vmax.f32 %v2616, 0.0
    %v2633 = vmax.f32 %v2617, 0.0
    %v2634 = vsub.f32 %v2570, 1.0
    %v2635 = vsub.f32 %v2571, 1.0
    %v2636 = vsub.f32 %v2572, 1.0
    %v2637 = vsub.f32 %v2573, 1.0
    %v2638 = vsub.f32 %v2574, 1.0
    %v2639 = vsub.f32 %v2575, 1.0
    %v2640 = vsub.f32 %v2576, 1.0
    %v2641 = vsub.f32 %v2577, 1.0
    %v2642 = vsub.f32 %v2578, 1.0
    %v2643 = vsub.f32 %v2579, 1.0
    %v2644 = vsub.f32 %v2580, 1.0
    %v2645 = vsub.f32 %v2581, 1.0
    %v2646 = vsub.f32 %v2582, 1.0
    %v2647 = vsub.f32 %v2583, 1.0
    %v2648 = vsub.f32 %v2584, 1.0
    %v2649 = vsub.f32 %v2585, 1.0
    %2651 = vset.pattern.permute.xlu0 0
    %2652 = vperm.xlu0 %2651, %v2634
    %v2653 = vpop.permute.xlu0 %2652
    %2656 = vset.pattern.permute.xlu0 0
    %2657 = vperm.xlu0 %2656, %v2635
    %v2658 = vpop.permute.xlu0 %2657
    %2661 = vset.pattern.permute.xlu0 0
    %2662 = vperm.xlu0 %2661, %v2636
    %v2663 = vpop.permute.xlu0 %2662
    %2666 = vset.pattern.permute.xlu0 0
    %2667 = vperm.xlu0 %2666, %v2637
    %v2668 = vpop.permute.xlu0 %2667
    %2671 = vset.pattern.permute.xlu0 0
    %2672 = vperm.xlu0 %2671, %v2638
    %v2673 = vpop.permute.xlu0 %2672
    %2676 = vset.pattern.permute.xlu0 0
    %2677 = vperm.xlu0 %2676, %v2639
    %v2678 = vpop.permute.xlu0 %2677
    %2681 = vset.pattern.permute.xlu0 0
    %2682 = vperm.xlu0 %2681, %v2640
    %v2683 = vpop.permute.xlu0 %2682
    %2686 = vset.pattern.permute.xlu0 0
    %2687 = vperm.xlu0 %2686, %v2641
    %v2688 = vpop.permute.xlu0 %2687
    %2691 = vset.pattern.permute.xlu0 0
    %2692 = vperm.xlu0 %2691, %v2642
    %v2693 = vpop.permute.xlu0 %2692
    %2696 = vset.pattern.permute.xlu0 0
    %2697 = vperm.xlu0 %2696, %v2643
    %v2698 = vpop.permute.xlu0 %2697
    %2701 = vset.pattern.permute.xlu0 0
    %2702 = vperm.xlu0 %2701, %v2644
    %v2703 = vpop.permute.xlu0 %2702
    %2706 = vset.pattern.permute.xlu0 0
    %2707 = vperm.xlu0 %2706, %v2645
    %v2708 = vpop.permute.xlu0 %2707
    %2711 = vset.pattern.permute.xlu0 0
    %2712 = vperm.xlu0 %2711, %v2646
    %v2713 = vpop.permute.xlu0 %2712
    %2716 = vset.pattern.permute.xlu0 0
    %2717 = vperm.xlu0 %2716, %v2647
    %v2718 = vpop.permute.xlu0 %2717
    %2721 = vset.pattern.permute.xlu0 0
    %2722 = vperm.xlu0 %2721, %v2648
    %v2723 = vpop.permute.xlu0 %2722
    %2726 = vset.pattern.permute.xlu0 0
    %2727 = vperm.xlu0 %2726, %v2649
    %v2728 = vpop.permute.xlu0 %2727
    %v2730 = vrcp.pop %v2653
    %v2731 = vmul.f32 %v2618, %v2730
    %v2732 = vrcp.pop %v2658
    %v2733 = vmul.f32 %v2619, %v2732
    %v2734 = vrcp.pop %v2663
    %v2735 = vmul.f32 %v2620, %v2734
    %v2736 = vrcp.pop %v2668
    %v2737 = vmul.f32 %v2621, %v2736
    %v2738 = vrcp.pop %v2673
    %v2739 = vmul.f32 %v2622, %v2738
    %v2740 = vrcp.pop %v2678
    %v2741 = vmul.f32 %v2623, %v2740
    %v2742 = vrcp.pop %v2683
    %v2743 = vmul.f32 %v2624, %v2742
    %v2744 = vrcp.pop %v2688
    %v2745 = vmul.f32 %v2625, %v2744
    %v2746 = vrcp.pop %v2693
    %v2747 = vmul.f32 %v2626, %v2746
    %v2748 = vrcp.pop %v2698
    %v2749 = vmul.f32 %v2627, %v2748
    %v2750 = vrcp.pop %v2703
    %v2751 = vmul.f32 %v2628, %v2750
    %v2752 = vrcp.pop %v2708
    %v2753 = vmul.f32 %v2629, %v2752
    %v2754 = vrcp.pop %v2713
    %v2755 = vmul.f32 %v2630, %v2754
    %v2756 = vrcp.pop %v2718
    %v2757 = vmul.f32 %v2631, %v2756
    %v2758 = vrcp.pop %v2723
    %v2759 = vmul.f32 %v2632, %v2758
    %v2760 = vrcp.pop %v2728
    %v2761 = vmul.f32 %v2633, %v2760
    %v2762 = vadd.f32 %v2731, 1e-31
    %v2763 = vadd.f32 %v2733, 1e-31
    %v2764 = vadd.f32 %v2735, 1e-31
    %v2765 = vadd.f32 %v2737, 1e-31
    %v2766 = vadd.f32 %v2739, 1e-31
    %v2767 = vadd.f32 %v2741, 1e-31
    %v2768 = vadd.f32 %v2743, 1e-31
    %v2769 = vadd.f32 %v2745, 1e-31
    %v2770 = vadd.f32 %v2747, 1e-31
    %v2771 = vadd.f32 %v2749, 1e-31
    %v2772 = vadd.f32 %v2751, 1e-31
    %v2773 = vadd.f32 %v2753, 1e-31
    %v2774 = vadd.f32 %v2755, 1e-31
    %v2775 = vadd.f32 %v2757, 1e-31
    %v2776 = vadd.f32 %v2759, 1e-31
    %v2777 = vadd.f32 %v2761, 1e-31
    %v2778 = vrsqrt.pop %v2762
    %v2779 = vmul.f32 %v2762, %v2778
    %vm2780 = vcmp.eq.f32.partialorder %v2762, inf
    %v2781 = vsel %vm2780, %v2762, %v2779
    %vm2782 = vcmp.eq.f32.partialorder %v2762, 0.0
    %v2783 = vand.u32 %v2762, 2147483648
    %v2784 = vsel %vm2782, %v2783, %v2781
    %v2785 = vrsqrt.pop %v2763
    %v2786 = vmul.f32 %v2763, %v2785
    %vm2787 = vcmp.eq.f32.partialorder %v2763, inf
    %v2788 = vsel %vm2787, %v2763, %v2786
    %vm2789 = vcmp.eq.f32.partialorder %v2763, 0.0
    %v2790 = vand.u32 %v2763, 2147483648
    %v2791 = vsel %vm2789, %v2790, %v2788
    %v2792 = vrsqrt.pop %v2764
    %v2793 = vmul.f32 %v2764, %v2792
    %vm2794 = vcmp.eq.f32.partialorder %v2764, inf
    %v2795 = vsel %vm2794, %v2764, %v2793
    %vm2796 = vcmp.eq.f32.partialorder %v2764, 0.0
    %v2797 = vand.u32 %v2764, 2147483648
    %v2798 = vsel %vm2796, %v2797, %v2795
    %v2799 = vrsqrt.pop %v2765
    %v2800 = vmul.f32 %v2765, %v2799
    %vm2801 = vcmp.eq.f32.partialorder %v2765, inf
    %v2802 = vsel %vm2801, %v2765, %v2800
    %vm2803 = vcmp.eq.f32.partialorder %v2765, 0.0
    %v2804 = vand.u32 %v2765, 2147483648
    %v2805 = vsel %vm2803, %v2804, %v2802
    %v2806 = vrsqrt.pop %v2766
    %v2807 = vmul.f32 %v2766, %v2806
    %vm2808 = vcmp.eq.f32.partialorder %v2766, inf
    %v2809 = vsel %vm2808, %v2766, %v2807
    %vm2810 = vcmp.eq.f32.partialorder %v2766, 0.0
    %v2811 = vand.u32 %v2766, 2147483648
    %v2812 = vsel %vm2810, %v2811, %v2809
    %v2813 = vrsqrt.pop %v2767
    %v2814 = vmul.f32 %v2767, %v2813
    %vm2815 = vcmp.eq.f32.partialorder %v2767, inf
    %v2816 = vsel %vm2815, %v2767, %v2814
    %vm2817 = vcmp.eq.f32.partialorder %v2767, 0.0
    %v2818 = vand.u32 %v2767, 2147483648
    %v2819 = vsel %vm2817, %v2818, %v2816
    %v2820 = vrsqrt.pop %v2768
    %v2821 = vmul.f32 %v2768, %v2820
    %vm2822 = vcmp.eq.f32.partialorder %v2768, inf
    %v2823 = vsel %vm2822, %v2768, %v2821
    %vm2824 = vcmp.eq.f32.partialorder %v2768, 0.0
    %v2825 = vand.u32 %v2768, 2147483648
    %v2826 = vsel %vm2824, %v2825, %v2823
    %v2827 = vrsqrt.pop %v2769
    %v2828 = vmul.f32 %v2769, %v2827
    %vm2829 = vcmp.eq.f32.partialorder %v2769, inf
    %v2830 = vsel %vm2829, %v2769, %v2828
    %vm2831 = vcmp.eq.f32.partialorder %v2769, 0.0
    %v2832 = vand.u32 %v2769, 2147483648
    %v2833 = vsel %vm2831, %v2832, %v2830
    %v2834 = vrsqrt.pop %v2770
    %v2835 = vmul.f32 %v2770, %v2834
    %vm2836 = vcmp.eq.f32.partialorder %v2770, inf
    %v2837 = vsel %vm2836, %v2770, %v2835
    %vm2838 = vcmp.eq.f32.partialorder %v2770, 0.0
    %v2839 = vand.u32 %v2770, 2147483648
    %v2840 = vsel %vm2838, %v2839, %v2837
    %v2841 = vrsqrt.pop %v2771
    %v2842 = vmul.f32 %v2771, %v2841
    %vm2843 = vcmp.eq.f32.partialorder %v2771, inf
    %v2844 = vsel %vm2843, %v2771, %v2842
    %vm2845 = vcmp.eq.f32.partialorder %v2771, 0.0
    %v2846 = vand.u32 %v2771, 2147483648
    %v2847 = vsel %vm2845, %v2846, %v2844
    %v2848 = vrsqrt.pop %v2772
    %v2849 = vmul.f32 %v2772, %v2848
    %vm2850 = vcmp.eq.f32.partialorder %v2772, inf
    %v2851 = vsel %vm2850, %v2772, %v2849
    %vm2852 = vcmp.eq.f32.partialorder %v2772, 0.0
    %v2853 = vand.u32 %v2772, 2147483648
    %v2854 = vsel %vm2852, %v2853, %v2851
    %v2855 = vrsqrt.pop %v2773
    %v2856 = vmul.f32 %v2773, %v2855
    %vm2857 = vcmp.eq.f32.partialorder %v2773, inf
    %v2858 = vsel %vm2857, %v2773, %v2856
    %vm2859 = vcmp.eq.f32.partialorder %v2773, 0.0
    %v2860 = vand.u32 %v2773, 2147483648
    %v2861 = vsel %vm2859, %v2860, %v2858
    %v2862 = vrsqrt.pop %v2774
    %v2863 = vmul.f32 %v2774, %v2862
    %vm2864 = vcmp.eq.f32.partialorder %v2774, inf
    %v2865 = vsel %vm2864, %v2774, %v2863
    %vm2866 = vcmp.eq.f32.partialorder %v2774, 0.0
    %v2867 = vand.u32 %v2774, 2147483648
    %v2868 = vsel %vm2866, %v2867, %v2865
    %v2869 = vrsqrt.pop %v2775
    %v2870 = vmul.f32 %v2775, %v2869
    %vm2871 = vcmp.eq.f32.partialorder %v2775, inf
    %v2872 = vsel %vm2871, %v2775, %v2870
    %vm2873 = vcmp.eq.f32.partialorder %v2775, 0.0
    %v2874 = vand.u32 %v2775, 2147483648
    %v2875 = vsel %vm2873, %v2874, %v2872
    %v2876 = vrsqrt.pop %v2776
    %v2877 = vmul.f32 %v2776, %v2876
    %vm2878 = vcmp.eq.f32.partialorder %v2776, inf
    %v2879 = vsel %vm2878, %v2776, %v2877
    %vm2880 = vcmp.eq.f32.partialorder %v2776, 0.0
    %v2881 = vand.u32 %v2776, 2147483648
    %v2882 = vsel %vm2880, %v2881, %v2879
    %v2883 = vrsqrt.pop %v2777
    %v2884 = vmul.f32 %v2777, %v2883
    %vm2885 = vcmp.eq.f32.partialorder %v2777, inf
    %v2886 = vsel %vm2885, %v2777, %v2884
    %vm2887 = vcmp.eq.f32.partialorder %v2777, 0.0
    %v2888 = vand.u32 %v2777, 2147483648
    %v2889 = vsel %vm2887, %v2888, %v2886
    %v2890 = vld [vmem:[%s2] sm:$0xf]
    %v2891 = vld [vmem:[%s2 + $0x4] sm:$0xf]
    %v2892 = vpack.c.bf16 %v2554, %v2554
    %v2893 = vpack.c.bf16 %v2555, %v2555
    %v2894 = vpack.c.bf16 %v2556, %v2556
    %v2895 = vpack.c.bf16 %v2557, %v2557
    %v2896 = vpack.c.bf16 %v2558, %v2558
    %v2897 = vpack.c.bf16 %v2559, %v2559
    %v2898 = vpack.c.bf16 %v2560, %v2560
    %v2899 = vpack.c.bf16 %v2561, %v2561
    %v2900 = vpack.c.bf16 %v2562, %v2562
    %v2901 = vpack.c.bf16 %v2563, %v2563
    %v2902 = vpack.c.bf16 %v2564, %v2564
    %v2903 = vpack.c.bf16 %v2565, %v2565
    %v2904 = vpack.c.bf16 %v2566, %v2566
    %v2905 = vpack.c.bf16 %v2567, %v2567
    %v2906 = vpack.c.bf16 %v2568, %v2568
    %v2907 = vpack.c.bf16 %v2569, %v2569
    %v2908 = vld [vmem:[%s8] sm:$0xf]
    %v2909 = vld [vmem:[%s8 + $0x4] sm:$0xf]
    %v2910 = vld [vmem:[%s8 + $0x8] sm:$0xf]
    %v2911 = vld [vmem:[%s8 + $0xc] sm:$0xf]
    %v2912 = vld [vmem:[%s8 + $0x10] sm:$0xf]
    %v2913 = vld [vmem:[%s8 + $0x14] sm:$0xf]
    %v2914 = vld [vmem:[%s8 + $0x18] sm:$0xf]
    %v2915 = vld [vmem:[%s8 + $0x1c] sm:$0xf]
    %v2916 = vpack.c.bf16 %v2784, %v2784
    %v2917 = vpack.c.bf16 %v2791, %v2791
    %v2918 = vpack.c.bf16 %v2798, %v2798
    %v2919 = vpack.c.bf16 %v2805, %v2805
    %v2920 = vpack.c.bf16 %v2812, %v2812
    %v2921 = vpack.c.bf16 %v2819, %v2819
    %v2922 = vpack.c.bf16 %v2826, %v2826
    %v2923 = vpack.c.bf16 %v2833, %v2833
    %v2924 = vpack.c.bf16 %v2840, %v2840
    %v2925 = vpack.c.bf16 %v2847, %v2847
    %v2926 = vpack.c.bf16 %v2854, %v2854
    %v2927 = vpack.c.bf16 %v2861, %v2861
    %v2928 = vpack.c.bf16 %v2868, %v2868
    %v2929 = vpack.c.bf16 %v2875, %v2875
    %v2930 = vpack.c.bf16 %v2882, %v2882
    %v2931 = vpack.c.bf16 %v2889, %v2889
    %v2932 = vld [vmem:[%s9] sm:$0xf]
    %v2933 = vld [vmem:[%s9 + $0x4] sm:$0xf]
    %v2934 = vld [vmem:[%s9 + $0x8] sm:$0xf]
    %v2935 = vld [vmem:[%s9 + $0xc] sm:$0xf]
    %v2936 = vld [vmem:[%s9 + $0x10] sm:$0xf]
    %v2937 = vld [vmem:[%s9 + $0x14] sm:$0xf]
    %v2938 = vld [vmem:[%s9 + $0x18] sm:$0xf]
    %v2939 = vld [vmem:[%s9 + $0x1c] sm:$0xf]
    %v2956 = vunpack.c.l.b16 %v2916
    %v2957 = vunpack.c.l.b16 %v2917
    %v2958 = vunpack.c.l.b16 %v2918
    %v2959 = vunpack.c.l.b16 %v2919
    %v2960 = vunpack.c.l.b16 %v2920
    %v2961 = vunpack.c.l.b16 %v2921
    %v2962 = vunpack.c.l.b16 %v2922
    %v2963 = vunpack.c.l.b16 %v2923
    %v2964 = vunpack.c.l.b16 %v2924
    %v2965 = vunpack.c.l.b16 %v2925
    %v2966 = vunpack.c.l.b16 %v2926
    %v2967 = vunpack.c.l.b16 %v2927
    %v2968 = vunpack.c.l.b16 %v2928
    %v2969 = vunpack.c.l.b16 %v2929
    %v2970 = vunpack.c.l.b16 %v2930
    %v2971 = vunpack.c.l.b16 %v2931
    %vm2972 = vcmask 1041409
    %v2973 = vsel %vm2972, %v2957, %v2956
    %vm2974 = vcmask 1042434
    %v2975 = vsel %vm2974, %v2958, %v2973
    %vm2976 = vcmask 1043459
    %v2977 = vsel %vm2976, %v2959, %v2975
    %vm2978 = vcmask 1044484
    %v2979 = vsel %vm2978, %v2960, %v2977
    %vm2980 = vcmask 1045509
    %v2981 = vsel %vm2980, %v2961, %v2979
    %vm2982 = vcmask 1046534
    %v2983 = vsel %vm2982, %v2962, %v2981
    %vm2984 = vcmask 1047559
    %v2985 = vsel %vm2984, %v2963, %v2983
    %v2986 = vsel %vm2972, %v2965, %v2964
    %v2987 = vsel %vm2974, %v2966, %v2986
    %v2988 = vsel %vm2976, %v2967, %v2987
    %v2989 = vsel %vm2978, %v2968, %v2988
    %v2990 = vsel %vm2980, %v2969, %v2989
    %v2991 = vsel %vm2982, %v2970, %v2990
    %v2992 = vsel %vm2984, %v2971, %v2991
    %v2993 = vpack.c.b16 %v2992, %v2985
    %v3002 = vunpack.c.l.b16 %v2932
    %v3003 = vunpack.c.l.b16 %v2933
    %v3004 = vunpack.c.l.b16 %v2934
    %v3005 = vunpack.c.l.b16 %v2935
    %v3006 = vunpack.c.l.b16 %v2936
    %v3007 = vunpack.c.l.b16 %v2937
    %v3008 = vunpack.c.l.b16 %v2938
    %v3009 = vunpack.c.l.b16 %v2939
    %v3010 = vpack.c.b16 %v3003, %v3002
    %v3011 = vpack.c.b16 %v3005, %v3004
    %v3012 = vpack.c.b16 %v3007, %v3006
    %v3013 = vpack.c.b16 %v3009, %v3008
    %v3019 = vsel %vm1993, %v2993, 0
    %3021 = vmatprep.subr.bf16.mxu0 0
    %3022 = vmatpush1.bf16.msra.mxu0 %v3010
    %3023 = vmatprep.subr.bf16.mxu0 0
    %3024 = vmatpush1.bf16.msra.mxu0 %v3011
    %3025 = vmatprep.subr.bf16.mxu0 0
    %3026 = vmatpush1.bf16.msra.mxu0 %v3012
    %3027 = vmatprep.subr.bf16.mxu0 0
    %3028 = vmatpush1.bf16.msra.mxu0 %v3013
    %3029 = vmatprep.subr.bf16.mxu0 0
    %3030 = vmatpush1.bf16.msra.mxu0 0
    %3031 = vmatprep.subr.bf16.mxu0 0
    %3032 = vmatpush1.bf16.msra.mxu0 0
    %3033 = vmatprep.subr.bf16.mxu0 0
    %3034 = vmatpush1.bf16.msra.mxu0 0
    %3035 = vmatprep.subr.bf16.mxu0 0
    %3036 = vmatpush1.bf16.msra.mxu0 0
    %3037 = vmatprep.subr.bf16.mxu0 0
    %3038 = vmatpush1.bf16.msra.mxu0 0
    %3039 = vmatprep.subr.bf16.mxu0 0
    %3040 = vmatpush1.bf16.msra.mxu0 0
    %3041 = vmatprep.subr.bf16.mxu0 0
    %3042 = vmatpush1.bf16.msra.mxu0 0
    %3043 = vmatprep.subr.bf16.mxu0 0
    %3044 = vmatpush1.bf16.msra.mxu0 0
    %3045 = vmatprep.subr.bf16.mxu0 0
    %3046 = vmatpush1.bf16.msra.mxu0 0
    %3047 = vmatprep.subr.bf16.mxu0 0
    %3048 = vmatpush1.bf16.msra.mxu0 0
    %3049 = vmatprep.subr.bf16.mxu0 0
    %3050 = vmatpush1.bf16.msra.mxu0 0
    %3051 = vmatprep.subr.bf16.mxu0 0
    %3052 = vmatpush1.bf16.msra.mxu0 0
    %3053 = vmatprep.mubr.bf16.mxu0 0
    %3054 = vmatmul.mubr.bf16.gmra.mrb[0].mxu0 %v3019
    %v3055 = vpop.f32.mrb[0].mxu0
    %v3056 = vadd.f32 0.0, %v3055
    %v3057 = vpop.f32.mrb[0].mxu0
    %v3058 = vpop.f32.mrb[0].mxu0
    %v3059 = vadd.f32 0.0, %v3058
    %v3060 = vpop.f32.mrb[0].mxu0
    %3061 = vdwg.mxu0
    %v3078 = vunpack.c.l.b16 %v2892
    %v3079 = vunpack.c.l.b16 %v2893
    %v3080 = vunpack.c.l.b16 %v2894
    %v3081 = vunpack.c.l.b16 %v2895
    %v3082 = vunpack.c.l.b16 %v2896
    %v3083 = vunpack.c.l.b16 %v2897
    %v3084 = vunpack.c.l.b16 %v2898
    %v3085 = vunpack.c.l.b16 %v2899
    %v3086 = vunpack.c.l.b16 %v2900
    %v3087 = vunpack.c.l.b16 %v2901
    %v3088 = vunpack.c.l.b16 %v2902
    %v3089 = vunpack.c.l.b16 %v2903
    %v3090 = vunpack.c.l.b16 %v2904
    %v3091 = vunpack.c.l.b16 %v2905
    %v3092 = vunpack.c.l.b16 %v2906
    %v3093 = vunpack.c.l.b16 %v2907
    %v3094 = vsel %vm2972, %v3079, %v3078
    %v3095 = vsel %vm2974, %v3080, %v3094
    %v3096 = vsel %vm2976, %v3081, %v3095
    %v3097 = vsel %vm2978, %v3082, %v3096
    %v3098 = vsel %vm2980, %v3083, %v3097
    %v3099 = vsel %vm2982, %v3084, %v3098
    %v3100 = vsel %vm2984, %v3085, %v3099
    %v3101 = vsel %vm2972, %v3087, %v3086
    %v3102 = vsel %vm2974, %v3088, %v3101
    %v3103 = vsel %vm2976, %v3089, %v3102
    %v3104 = vsel %vm2978, %v3090, %v3103
    %v3105 = vsel %vm2980, %v3091, %v3104
    %v3106 = vsel %vm2982, %v3092, %v3105
    %v3107 = vsel %vm2984, %v3093, %v3106
    %v3108 = vpack.c.b16 %v3107, %v3100
    %v3117 = vunpack.c.l.b16 %v2908
    %v3118 = vunpack.c.l.b16 %v2909
    %v3119 = vunpack.c.l.b16 %v2910
    %v3120 = vunpack.c.l.b16 %v2911
    %v3121 = vunpack.c.l.b16 %v2912
    %v3122 = vunpack.c.l.b16 %v2913
    %v3123 = vunpack.c.l.b16 %v2914
    %v3124 = vunpack.c.l.b16 %v2915
    %v3125 = vpack.c.b16 %v3118, %v3117
    %v3126 = vpack.c.b16 %v3120, %v3119
    %v3127 = vpack.c.b16 %v3122, %v3121
    %v3128 = vpack.c.b16 %v3124, %v3123
    %v3134 = vsel %vm1993, %v3108, 0
    %3136 = vmatprep.subr.bf16.mxu0 0
    %3137 = vmatpush1.bf16.msra.mxu0 %v3125
    %3138 = vmatprep.subr.bf16.mxu0 0
    %3139 = vmatpush1.bf16.msra.mxu0 %v3126
    %3140 = vmatprep.subr.bf16.mxu0 0
    %3141 = vmatpush1.bf16.msra.mxu0 %v3127
    %3142 = vmatprep.subr.bf16.mxu0 0
    %3143 = vmatpush1.bf16.msra.mxu0 %v3128
    %3144 = vmatprep.subr.bf16.mxu0 0
    %3145 = vmatpush1.bf16.msra.mxu0 0
    %3146 = vmatprep.subr.bf16.mxu0 0
    %3147 = vmatpush1.bf16.msra.mxu0 0
    %3148 = vmatprep.subr.bf16.mxu0 0
    %3149 = vmatpush1.bf16.msra.mxu0 0
    %3150 = vmatprep.subr.bf16.mxu0 0
    %3151 = vmatpush1.bf16.msra.mxu0 0
    %3152 = vmatprep.subr.bf16.mxu0 0
    %3153 = vmatpush1.bf16.msra.mxu0 0
    %3154 = vmatprep.subr.bf16.mxu0 0
    %3155 = vmatpush1.bf16.msra.mxu0 0
    %3156 = vmatprep.subr.bf16.mxu0 0
    %3157 = vmatpush1.bf16.msra.mxu0 0
    %3158 = vmatprep.subr.bf16.mxu0 0
    %3159 = vmatpush1.bf16.msra.mxu0 0
    %3160 = vmatprep.subr.bf16.mxu0 0
    %3161 = vmatpush1.bf16.msra.mxu0 0
    %3162 = vmatprep.subr.bf16.mxu0 0
    %3163 = vmatpush1.bf16.msra.mxu0 0
    %3164 = vmatprep.subr.bf16.mxu0 0
    %3165 = vmatpush1.bf16.msra.mxu0 0
    %3166 = vmatprep.subr.bf16.mxu0 0
    %3167 = vmatpush1.bf16.msra.mxu0 0
    %3168 = vmatprep.mubr.bf16.mxu0 0
    %3169 = vmatmul.mubr.bf16.gmra.mrb[0].mxu0 %v3134
    %v3170 = vpop.f32.mrb[0].mxu0
    %v3171 = vadd.f32 %v3056, %v3170
    %v3172 = vpop.f32.mrb[0].mxu0
    %v3173 = vpop.f32.mrb[0].mxu0
    %v3174 = vadd.f32 %v3059, %v3173
    %v3175 = vpop.f32.mrb[0].mxu0
    %3176 = vdwg.mxu0
    %v3177 = vld [vmem:[%s10] sm:$0x3]
    %v3180 = vunpack.c.l.b16 %v2890
    %v3181 = vunpack.c.l.b16 %v2891
    %v3182 = vpack.c.b16 %v3181, %v3180
    %vm3183 = vcmask 31744
    %v3185 = vsel %vm3183, %v3182, 0
    %vm3187 = vcmask 1041408
    %v3189 = vsel %vm3187, %v3177, 0
    %3191 = vmatprep.subr.bf16.mxu0 0
    %3192 = vmatpush1.bf16.msra.mxu0 %v3189
    %3193 = vmatprep.subr.bf16.mxu0 0
    %3194 = vmatpush1.bf16.msra.mxu0 0
    %3195 = vmatprep.subr.bf16.mxu0 0
    %3196 = vmatpush1.bf16.msra.mxu0 0
    %3197 = vmatprep.subr.bf16.mxu0 0
    %3198 = vmatpush1.bf16.msra.mxu0 0
    %3199 = vmatprep.subr.bf16.mxu0 0
    %3200 = vmatpush1.bf16.msra.mxu0 0
    %3201 = vmatprep.subr.bf16.mxu0 0
    %3202 = vmatpush1.bf16.msra.mxu0 0
    %3203 = vmatprep.subr.bf16.mxu0 0
    %3204 = vmatpush1.bf16.msra.mxu0 0
    %3205 = vmatprep.subr.bf16.mxu0 0
    %3206 = vmatpush1.bf16.msra.mxu0 0
    %3207 = vmatprep.subr.bf16.mxu0 0
    %3208 = vmatpush1.bf16.msra.mxu0 0
    %3209 = vmatprep.subr.bf16.mxu0 0
    %3210 = vmatpush1.bf16.msra.mxu0 0
    %3211 = vmatprep.subr.bf16.mxu0 0
    %3212 = vmatpush1.bf16.msra.mxu0 0
    %3213 = vmatprep.subr.bf16.mxu0 0
    %3214 = vmatpush1.bf16.msra.mxu0 0
    %3215 = vmatprep.subr.bf16.mxu0 0
    %3216 = vmatpush1.bf16.msra.mxu0 0
    %3217 = vmatprep.subr.bf16.mxu0 0
    %3218 = vmatpush1.bf16.msra.mxu0 0
    %3219 = vmatprep.subr.bf16.mxu0 0
    %3220 = vmatpush1.bf16.msra.mxu0 0
    %3221 = vmatprep.subr.bf16.mxu0 0
    %3222 = vmatpush1.bf16.msra.mxu0 0
    %3223 = vmatprep.mubr.bf16.mxu0 0
    %3224 = vmatmul.mubr.bf16.gmra.mrb[0].mxu0 %v3185
    %v3225 = vpop.f32.mrb[0].mxu0
    %v3226 = vadd.f32 0.0, %v3225
    %v3227 = vpop.f32.mrb[0].mxu0
    %v3228 = vpop.f32.mrb[0].mxu0
    %v3229 = vadd.f32 0.0, %v3228
    %v3230 = vpop.f32.mrb[0].mxu0
    %3231 = vdwg.mxu0
    %v3232 = vadd.f32 %v3171, %v3226
    %v3233 = vadd.f32 %v3174, %v3229
    %v3234 = vld [vmem:[%s11] sm:$0x1]
    %v3236 = vlaneseq
    %v3237 = vshrl.u32 %v3236, 7
    %v3238 = vsub.s32 0, %v3237
    %v3239 = vrot.slane %v3234, %v3238
    %v3241 = vadd.f32 %v3232, %v3239
    %v3242 = vadd.f32 %v3233, %v3239
    %3243 = vadd.xlane.f32.xlu0 %v3241
    %v3244 = vpop.xlane.xlu0 %3243
    %3245 = vadd.xlane.f32.xlu0 %v3242
    %v3246 = vpop.xlane.xlu0 %3245
    %v3247 = vrcp.pop 128.0
    %v3248 = vmul.f32 %v3244, %v3247
    %v3249 = vmul.f32 %v3246, %v3247
    %v3250 = vsub.f32 %v3241, %v3248
    %v3251 = vsub.f32 %v3242, %v3249
    %v3252 = vmul.f32 %v3250, %v3250
    %v3253 = vmul.f32 %v3251, %v3251
    %3254 = vadd.xlane.f32.xlu0 %v3252
    %v3255 = vpop.xlane.xlu0 %3254
    %3256 = vadd.xlane.f32.xlu0 %v3253
    %v3257 = vpop.xlane.xlu0 %3256
    %v3258 = vmul.f32 %v3255, %v3247
    %v3259 = vmul.f32 %v3257, %v3247
    %v3260 = vadd.f32 %v3258, 1e-05
    %v3261 = vadd.f32 %v3259, 1e-05
    %v3262 = vrsqrt.pop %v3260
    %v3263 = vrsqrt.pop %v3261
    %v3264 = vmul.f32 %v3250, %v3262
    %v3265 = vmul.f32 %v3251, %v3263
    %v3266 = vld [vmem:[%s12] sm:$0x1]
    %v3268 = vlaneseq
    %v3269 = vshrl.u32 %v3268, 7
    %v3270 = vsub.s32 0, %v3269
    %v3271 = vrot.slane %v3266, %v3270
    %v3273 = vmul.f32 %v3264, %v3271
    %v3274 = vmul.f32 %v3265, %v3271
    %v3275 = vld [vmem:[%s13] sm:$0x1]
    %v3277 = vlaneseq
    %v3278 = vshrl.u32 %v3277, 7
    %v3279 = vsub.s32 0, %v3278
    %v3280 = vrot.slane %v3275, %v3279
    %v3282 = vadd.f32 %v3273, %v3280
    %v3283 = vadd.f32 %v3274, %v3280
    %v3284 = vld [vmem:[%s3] sm:$0xff]
    %v3285 = vadd.f32 %v3282, %v3284
    %v3286 = vadd.f32 %v3283, %v3284
    %v3287 = vpack.c.bf16 %v3286, %v3285
    %v3288 = vld [vmem:[%s14] sm:$0xf]
    %v3289 = vld [vmem:[%s14 + $0x4] sm:$0xf]
    %v3290 = vld [vmem:[%s14 + $0x8] sm:$0xf]
    %v3291 = vld [vmem:[%s14 + $0xc] sm:$0xf]
    %v3292 = vld [vmem:[%s14 + $0x10] sm:$0xf]
    %v3293 = vld [vmem:[%s14 + $0x14] sm:$0xf]
    %v3294 = vld [vmem:[%s14 + $0x18] sm:$0xf]
    %v3295 = vld [vmem:[%s14 + $0x1c] sm:$0xf]
    %v3296 = vld [vmem:[%s14 + $0x20] sm:$0xf]
    %v3297 = vld [vmem:[%s14 + $0x24] sm:$0xf]
    %v3298 = vld [vmem:[%s14 + $0x28] sm:$0xf]
    %v3299 = vld [vmem:[%s14 + $0x2c] sm:$0xf]
    %v3300 = vld [vmem:[%s14 + $0x30] sm:$0xf]
    %v3301 = vld [vmem:[%s14 + $0x34] sm:$0xf]
    %v3302 = vld [vmem:[%s14 + $0x38] sm:$0xf]
    %v3303 = vld [vmem:[%s14 + $0x3c] sm:$0xf]
    %v3304 = vld [vmem:[%s15] sm:$0x1]
    %v3306 = vlaneseq
    %v3307 = vshrl.u32 %v3306, 7
    %v3308 = vsub.s32 0, %v3307
    %v3309 = vrot.slane %v3304, %v3308
    %v3327 = vunpack.c.l.b16 %v3288
    %v3328 = vunpack.c.l.b16 %v3289
    %v3329 = vunpack.c.l.b16 %v3290
    %v3330 = vunpack.c.l.b16 %v3291
    %v3331 = vunpack.c.l.b16 %v3292
    %v3332 = vunpack.c.l.b16 %v3293
    %v3333 = vunpack.c.l.b16 %v3294
    %v3334 = vunpack.c.l.b16 %v3295
    %v3335 = vunpack.c.l.b16 %v3296
    %v3336 = vunpack.c.l.b16 %v3297
    %v3337 = vunpack.c.l.b16 %v3298
    %v3338 = vunpack.c.l.b16 %v3299
    %v3339 = vunpack.c.l.b16 %v3300
    %v3340 = vunpack.c.l.b16 %v3301
    %v3341 = vunpack.c.l.b16 %v3302
    %v3342 = vunpack.c.l.b16 %v3303
    %v3343 = vpack.c.b16 %v3328, %v3327
    %v3344 = vpack.c.b16 %v3330, %v3329
    %v3345 = vpack.c.b16 %v3332, %v3331
    %v3346 = vpack.c.b16 %v3334, %v3333
    %v3347 = vpack.c.b16 %v3336, %v3335
    %v3348 = vpack.c.b16 %v3338, %v3337
    %v3349 = vpack.c.b16 %v3340, %v3339
    %v3350 = vpack.c.b16 %v3342, %v3341
    %3359 = vmatprep.subr.bf16.mxu0 0
    %3360 = vmatpush1.bf16.msra.mxu0 %v3343
    %3361 = vmatprep.subr.bf16.mxu0 0
    %3362 = vmatpush1.bf16.msra.mxu0 %v3344
    %3363 = vmatprep.subr.bf16.mxu0 0
    %3364 = vmatpush1.bf16.msra.mxu0 %v3345
    %3365 = vmatprep.subr.bf16.mxu0 0
    %3366 = vmatpush1.bf16.msra.mxu0 %v3346
    %3367 = vmatprep.subr.bf16.mxu0 0
    %3368 = vmatpush1.bf16.msra.mxu0 %v3347
    %3369 = vmatprep.subr.bf16.mxu0 0
    %3370 = vmatpush1.bf16.msra.mxu0 %v3348
    %3371 = vmatprep.subr.bf16.mxu0 0
    %3372 = vmatpush1.bf16.msra.mxu0 %v3349
    %3373 = vmatprep.subr.bf16.mxu0 0
    %3374 = vmatpush1.bf16.msra.mxu0 %v3350
    %3375 = vmatprep.subr.bf16.mxu0 0
    %3376 = vmatpush1.bf16.msra.mxu0 0
    %3377 = vmatprep.subr.bf16.mxu0 0
    %3378 = vmatpush1.bf16.msra.mxu0 0
    %3379 = vmatprep.subr.bf16.mxu0 0
    %3380 = vmatpush1.bf16.msra.mxu0 0
    %3381 = vmatprep.subr.bf16.mxu0 0
    %3382 = vmatpush1.bf16.msra.mxu0 0
    %3383 = vmatprep.subr.bf16.mxu0 0
    %3384 = vmatpush1.bf16.msra.mxu0 0
    %3385 = vmatprep.subr.bf16.mxu0 0
    %3386 = vmatpush1.bf16.msra.mxu0 0
    %3387 = vmatprep.subr.bf16.mxu0 0
    %3388 = vmatpush1.bf16.msra.mxu0 0
    %3389 = vmatprep.subr.bf16.mxu0 0
    %3390 = vmatpush1.bf16.msra.mxu0 0
    %3391 = vmatprep.mubr.bf16.mxu0 0
    %3392 = vmatmul.mubr.bf16.gmra.mrb[0].mxu0 %v3287
    %v3393 = vpop.f32.mrb[0].mxu0
    %v3394 = vadd.f32 %v3309, %v3393
    %v3395 = vpop.f32.mrb[0].mxu0
    %v3396 = vpop.f32.mrb[0].mxu0
    %v3397 = vadd.f32 %v3309, %v3396
    %v3398 = vpop.f32.mrb[0].mxu0
    %3399 = vdwg.mxu0
    %v3400 = vmul.f32 %v3394, 0.17677669
    %v3401 = vmul.f32 %v3397, 0.17677669
    %v3402 = vsel %vm3183, %v3400, -inf
    %v3403 = vrot.slane %v3402, 4
    %v3404 = vmax.f32 %v3402, %v3403
    %v3405 = vrot.slane %v3404, 2
    %v3406 = vmax.f32 %v3404, %v3405
    %v3407 = vrot.slane %v3406, 1
    %v3408 = vmax.f32 %v3406, %v3407
    %v3409 = vsel %vm3183, %v3401, -inf
    %v3410 = vrot.slane %v3409, 4
    %v3411 = vmax.f32 %v3409, %v3410
    %v3412 = vrot.slane %v3411, 2
    %v3413 = vmax.f32 %v3411, %v3412
    %v3414 = vrot.slane %v3413, 1
    %v3415 = vmax.f32 %v3413, %v3414
    %v3416 = vsub.f32 %v3400, %v3408
    %v3417 = vsub.f32 %v3401, %v3415
    %v3418 = vmul.f32 %v3416, 1.442695
    %v3419 = vpow.pop %v3418
    %v3420 = vmul.f32 %v3417, 1.442695
    %v3421 = vpow.pop %v3420
    %v3422 = vsel %vm3183, %v3419, 0.0
    %v3423 = vrot.slane %v3422, 4
    %v3424 = vadd.f32 %v3422, %v3423
    %v3425 = vrot.slane %v3424, 2
    %v3426 = vadd.f32 %v3424, %v3425
    %v3427 = vrot.slane %v3426, 1
    %v3428 = vadd.f32 %v3426, %v3427
    %v3429 = vsel %vm3183, %v3421, 0.0
    %v3430 = vrot.slane %v3429, 4
    %v3431 = vadd.f32 %v3429, %v3430
    %v3432 = vrot.slane %v3431, 2
    %v3433 = vadd.f32 %v3431, %v3432
    %v3434 = vrot.slane %v3433, 1
    %v3435 = vadd.f32 %v3433, %v3434
    %v3436 = vrcp.pop %v3428
    %v3437 = vmul.f32 %v3419, %v3436
    %v3438 = vrcp.pop %v3435
    %v3439 = vmul.f32 %v3421, %v3438
    %3441 = vset.pattern.permute.xlu0 0
    %3442 = vperm.xlu0 %3441, %v3437
    %v3443 = vpop.permute.xlu0 %3442
    %3446 = vset.pattern.permute.xlu0 0
    %3447 = vperm.xlu0 %3446, %v3439
    %v3448 = vpop.permute.xlu0 %3447
    %v3450 = vmul.f32 %v3443, %v3285
    %v3451 = vmul.f32 %v3448, %v3286
    %v3452 = vrot.slane %v3450, 4
    %v3453 = vadd.f32 %v3450, %v3452
    %v3454 = vrot.slane %v3453, 2
    %v3455 = vadd.f32 %v3453, %v3454
    %v3456 = vrot.slane %v3455, 1
    %v3457 = vadd.f32 %v3455, %v3456
    %v3458 = vrot.slane %v3451, 4
    %v3459 = vadd.f32 %v3451, %v3458
    %v3460 = vrot.slane %v3459, 2
    %v3461 = vadd.f32 %v3459, %v3460
    %v3462 = vrot.slane %v3461, 1
    %v3463 = vadd.f32 %v3461, %v3462
    %3464 = vset.pattern.permute.xlu0 1
    %3465 = vperm.xlu0 %3464, %v3437
    %v3466 = vpop.permute.xlu0 %3465
    %3468 = vset.pattern.permute.xlu0 1
    %3469 = vperm.xlu0 %3468, %v3439
    %v3470 = vpop.permute.xlu0 %3469
    %v3472 = vmul.f32 %v3466, %v3285
    %v3473 = vmul.f32 %v3470, %v3286
    %v3474 = vrot.slane %v3472, 4
    %v3475 = vadd.f32 %v3472, %v3474
    %v3476 = vrot.slane %v3475, 2
    %v3477 = vadd.f32 %v3475, %v3476
    %v3478 = vrot.slane %v3477, 1
    %v3479 = vadd.f32 %v3477, %v3478
    %v3480 = vrot.slane %v3473, 4
    %v3481 = vadd.f32 %v3473, %v3480
    %v3482 = vrot.slane %v3481, 2
    %v3483 = vadd.f32 %v3481, %v3482
    %v3484 = vrot.slane %v3483, 1
    %v3485 = vadd.f32 %v3483, %v3484
    %3486 = vset.pattern.permute.xlu0 2
    %3487 = vperm.xlu0 %3486, %v3437
    %v3488 = vpop.permute.xlu0 %3487
    %3490 = vset.pattern.permute.xlu0 2
    %3491 = vperm.xlu0 %3490, %v3439
    %v3492 = vpop.permute.xlu0 %3491
    %v3494 = vmul.f32 %v3488, %v3285
    %v3495 = vmul.f32 %v3492, %v3286
    %v3496 = vrot.slane %v3494, 4
    %v3497 = vadd.f32 %v3494, %v3496
    %v3498 = vrot.slane %v3497, 2
    %v3499 = vadd.f32 %v3497, %v3498
    %v3500 = vrot.slane %v3499, 1
    %v3501 = vadd.f32 %v3499, %v3500
    %v3502 = vrot.slane %v3495, 4
    %v3503 = vadd.f32 %v3495, %v3502
    %v3504 = vrot.slane %v3503, 2
    %v3505 = vadd.f32 %v3503, %v3504
    %v3506 = vrot.slane %v3505, 1
    %v3507 = vadd.f32 %v3505, %v3506
    %3508 = vset.pattern.permute.xlu0 3
    %3509 = vperm.xlu0 %3508, %v3437
    %v3510 = vpop.permute.xlu0 %3509
    %3512 = vset.pattern.permute.xlu0 3
    %3513 = vperm.xlu0 %3512, %v3439
    %v3514 = vpop.permute.xlu0 %3513
    %v3516 = vmul.f32 %v3510, %v3285
    %v3517 = vmul.f32 %v3514, %v3286
    %v3518 = vrot.slane %v3516, 4
    %v3519 = vadd.f32 %v3516, %v3518
    %v3520 = vrot.slane %v3519, 2
    %v3521 = vadd.f32 %v3519, %v3520
    %v3522 = vrot.slane %v3521, 1
    %v3523 = vadd.f32 %v3521, %v3522
    %v3524 = vrot.slane %v3517, 4
    %v3525 = vadd.f32 %v3517, %v3524
    %v3526 = vrot.slane %v3525, 2
    %v3527 = vadd.f32 %v3525, %v3526
    %v3528 = vrot.slane %v3527, 1
    %v3529 = vadd.f32 %v3527, %v3528
    %v3532 = vsel %vm2972, %v3463, %v3457
    %v3536 = vsel %vm2972, %v3485, %v3479
    %v3540 = vsel %vm2972, %v3507, %v3501
    %v3544 = vsel %vm2972, %v3529, %v3523
    %v3546 = vpack.c.bf16 %v3532, %v3532
    %v3547 = vpack.c.bf16 %v3536, %v3536
    %v3548 = vpack.c.bf16 %v3540, %v3540
    %v3549 = vpack.c.bf16 %v3544, %v3544
    %v3550 = vld [vmem:[%s16] sm:$0xf]
    %v3551 = vld [vmem:[%s16 + $0x4] sm:$0xf]
    %v3552 = vld [vmem:[%s16 + $0x8] sm:$0xf]
    %v3553 = vld [vmem:[%s16 + $0xc] sm:$0xf]
    %v3554 = vld [vmem:[%s16 + $0x10] sm:$0xf]
    %v3555 = vld [vmem:[%s16 + $0x14] sm:$0xf]
    %v3556 = vld [vmem:[%s16 + $0x18] sm:$0xf]
    %v3557 = vld [vmem:[%s16 + $0x1c] sm:$0xf]
    %v3558 = vld [vmem:[%s16 + $0x20] sm:$0xf]
    %v3559 = vld [vmem:[%s16 + $0x24] sm:$0xf]
    %v3560 = vld [vmem:[%s16 + $0x28] sm:$0xf]
    %v3561 = vld [vmem:[%s16 + $0x2c] sm:$0xf]
    %v3562 = vld [vmem:[%s16 + $0x30] sm:$0xf]
    %v3563 = vld [vmem:[%s16 + $0x34] sm:$0xf]
    %v3564 = vld [vmem:[%s16 + $0x38] sm:$0xf]
    %v3565 = vld [vmem:[%s16 + $0x3c] sm:$0xf]
    %v3566 = vld [vmem:[%s16 + $0x40] sm:$0xf]
    %v3567 = vld [vmem:[%s16 + $0x44] sm:$0xf]
    %v3568 = vld [vmem:[%s16 + $0x48] sm:$0xf]
    %v3569 = vld [vmem:[%s16 + $0x4c] sm:$0xf]
    %v3570 = vld [vmem:[%s16 + $0x50] sm:$0xf]
    %v3571 = vld [vmem:[%s16 + $0x54] sm:$0xf]
    %v3572 = vld [vmem:[%s16 + $0x58] sm:$0xf]
    %v3573 = vld [vmem:[%s16 + $0x5c] sm:$0xf]
    %v3574 = vld [vmem:[%s16 + $0x60] sm:$0xf]
    %v3575 = vld [vmem:[%s16 + $0x64] sm:$0xf]
    %v3576 = vld [vmem:[%s16 + $0x68] sm:$0xf]
    %v3577 = vld [vmem:[%s16 + $0x6c] sm:$0xf]
    %v3578 = vld [vmem:[%s16 + $0x70] sm:$0xf]
    %v3579 = vld [vmem:[%s16 + $0x74] sm:$0xf]
    %v3580 = vld [vmem:[%s16 + $0x78] sm:$0xf]
    %v3581 = vld [vmem:[%s16 + $0x7c] sm:$0xf]
    %v3582 = vld [vmem:[%s16 + $0x80] sm:$0xf]
    %v3583 = vld [vmem:[%s16 + $0x84] sm:$0xf]
    %v3584 = vld [vmem:[%s16 + $0x88] sm:$0xf]
    %v3585 = vld [vmem:[%s16 + $0x8c] sm:$0xf]
    %v3586 = vld [vmem:[%s16 + $0x90] sm:$0xf]
    %v3587 = vld [vmem:[%s16 + $0x94] sm:$0xf]
    %v3588 = vld [vmem:[%s16 + $0x98] sm:$0xf]
    %v3589 = vld [vmem:[%s16 + $0x9c] sm:$0xf]
    %v3590 = vld [vmem:[%s16 + $0xa0] sm:$0xf]
    %v3591 = vld [vmem:[%s16 + $0xa4] sm:$0xf]
    %v3592 = vld [vmem:[%s16 + $0xa8] sm:$0xf]
    %v3593 = vld [vmem:[%s16 + $0xac] sm:$0xf]
    %v3594 = vld [vmem:[%s16 + $0xb0] sm:$0xf]
    %v3595 = vld [vmem:[%s16 + $0xb4] sm:$0xf]
    %v3596 = vld [vmem:[%s16 + $0xb8] sm:$0xf]
    %v3597 = vld [vmem:[%s16 + $0xbc] sm:$0xf]
    %v3598 = vld [vmem:[%s16 + $0xc0] sm:$0xf]
    %v3599 = vld [vmem:[%s16 + $0xc4] sm:$0xf]
    %v3600 = vld [vmem:[%s16 + $0xc8] sm:$0xf]
    %v3601 = vld [vmem:[%s16 + $0xcc] sm:$0xf]
    %v3602 = vld [vmem:[%s16 + $0xd0] sm:$0xf]
    %v3603 = vld [vmem:[%s16 + $0xd4] sm:$0xf]
    %v3604 = vld [vmem:[%s16 + $0xd8] sm:$0xf]
    %v3605 = vld [vmem:[%s16 + $0xdc] sm:$0xf]
    %v3606 = vld [vmem:[%s16 + $0xe0] sm:$0xf]
    %v3607 = vld [vmem:[%s16 + $0xe4] sm:$0xf]
    %v3608 = vld [vmem:[%s16 + $0xe8] sm:$0xf]
    %v3609 = vld [vmem:[%s16 + $0xec] sm:$0xf]
    %v3610 = vld [vmem:[%s16 + $0xf0] sm:$0xf]
    %v3611 = vld [vmem:[%s16 + $0xf4] sm:$0xf]
    %v3612 = vld [vmem:[%s16 + $0xf8] sm:$0xf]
    %v3613 = vld [vmem:[%s16 + $0xfc] sm:$0xf]
    %v3614 = vld [vmem:[%s17] sm:$0x1]
    %v3616 = vlaneseq
    %v3617 = vshrl.u32 %v3616, 7
    %v3618 = vsub.s32 0, %v3617
    %v3619 = vrot.slane %v3614, %v3618
    %v3685 = vunpack.c.l.b16 %v3550
    %v3686 = vunpack.c.l.b16 %v3551
    %v3687 = vunpack.c.l.b16 %v3552
    %v3688 = vunpack.c.l.b16 %v3553
    %v3689 = vunpack.c.l.b16 %v3554
    %v3690 = vunpack.c.l.b16 %v3555
    %v3691 = vunpack.c.l.b16 %v3556
    %v3692 = vunpack.c.l.b16 %v3557
    %v3693 = vunpack.c.l.b16 %v3558
    %v3694 = vunpack.c.l.b16 %v3559
    %v3695 = vunpack.c.l.b16 %v3560
    %v3696 = vunpack.c.l.b16 %v3561
    %v3697 = vunpack.c.l.b16 %v3562
    %v3698 = vunpack.c.l.b16 %v3563
    %v3699 = vunpack.c.l.b16 %v3564
    %v3700 = vunpack.c.l.b16 %v3565
    %v3701 = vunpack.c.l.b16 %v3566
    %v3702 = vunpack.c.l.b16 %v3567
    %v3703 = vunpack.c.l.b16 %v3568
    %v3704 = vunpack.c.l.b16 %v3569
    %v3705 = vunpack.c.l.b16 %v3570
    %v3706 = vunpack.c.l.b16 %v3571
    %v3707 = vunpack.c.l.b16 %v3572
    %v3708 = vunpack.c.l.b16 %v3573
    %v3709 = vunpack.c.l.b16 %v3574
    %v3710 = vunpack.c.l.b16 %v3575
    %v3711 = vunpack.c.l.b16 %v3576
    %v3712 = vunpack.c.l.b16 %v3577
    %v3713 = vunpack.c.l.b16 %v3578
    %v3714 = vunpack.c.l.b16 %v3579
    %v3715 = vunpack.c.l.b16 %v3580
    %v3716 = vunpack.c.l.b16 %v3581
    %v3717 = vunpack.c.l.b16 %v3582
    %v3718 = vunpack.c.l.b16 %v3583
    %v3719 = vunpack.c.l.b16 %v3584
    %v3720 = vunpack.c.l.b16 %v3585
    %v3721 = vunpack.c.l.b16 %v3586
    %v3722 = vunpack.c.l.b16 %v3587
    %v3723 = vunpack.c.l.b16 %v3588
    %v3724 = vunpack.c.l.b16 %v3589
    %v3725 = vunpack.c.l.b16 %v3590
    %v3726 = vunpack.c.l.b16 %v3591
    %v3727 = vunpack.c.l.b16 %v3592
    %v3728 = vunpack.c.l.b16 %v3593
    %v3729 = vunpack.c.l.b16 %v3594
    %v3730 = vunpack.c.l.b16 %v3595
    %v3731 = vunpack.c.l.b16 %v3596
    %v3732 = vunpack.c.l.b16 %v3597
    %v3733 = vunpack.c.l.b16 %v3598
    %v3734 = vunpack.c.l.b16 %v3599
    %v3735 = vunpack.c.l.b16 %v3600
    %v3736 = vunpack.c.l.b16 %v3601
    %v3737 = vunpack.c.l.b16 %v3602
    %v3738 = vunpack.c.l.b16 %v3603
    %v3739 = vunpack.c.l.b16 %v3604
    %v3740 = vunpack.c.l.b16 %v3605
    %v3741 = vunpack.c.l.b16 %v3606
    %v3742 = vunpack.c.l.b16 %v3607
    %v3743 = vunpack.c.l.b16 %v3608
    %v3744 = vunpack.c.l.b16 %v3609
    %v3745 = vunpack.c.l.b16 %v3610
    %v3746 = vunpack.c.l.b16 %v3611
    %v3747 = vunpack.c.l.b16 %v3612
    %v3748 = vunpack.c.l.b16 %v3613
    %v3749 = vpack.c.b16 %v3686, %v3685
    %v3750 = vpack.c.b16 %v3688, %v3687
    %v3751 = vpack.c.b16 %v3690, %v3689
    %v3752 = vpack.c.b16 %v3692, %v3691
    %v3753 = vpack.c.b16 %v3694, %v3693
    %v3754 = vpack.c.b16 %v3696, %v3695
    %v3755 = vpack.c.b16 %v3698, %v3697
    %v3756 = vpack.c.b16 %v3700, %v3699
    %v3757 = vpack.c.b16 %v3702, %v3701
    %v3758 = vpack.c.b16 %v3704, %v3703
    %v3759 = vpack.c.b16 %v3706, %v3705
    %v3760 = vpack.c.b16 %v3708, %v3707
    %v3761 = vpack.c.b16 %v3710, %v3709
    %v3762 = vpack.c.b16 %v3712, %v3711
    %v3763 = vpack.c.b16 %v3714, %v3713
    %v3764 = vpack.c.b16 %v3716, %v3715
    %v3765 = vpack.c.b16 %v3718, %v3717
    %v3766 = vpack.c.b16 %v3720, %v3719
    %v3767 = vpack.c.b16 %v3722, %v3721
    %v3768 = vpack.c.b16 %v3724, %v3723
    %v3769 = vpack.c.b16 %v3726, %v3725
    %v3770 = vpack.c.b16 %v3728, %v3727
    %v3771 = vpack.c.b16 %v3730, %v3729
    %v3772 = vpack.c.b16 %v3732, %v3731
    %v3773 = vpack.c.b16 %v3734, %v3733
    %v3774 = vpack.c.b16 %v3736, %v3735
    %v3775 = vpack.c.b16 %v3738, %v3737
    %v3776 = vpack.c.b16 %v3740, %v3739
    %v3777 = vpack.c.b16 %v3742, %v3741
    %v3778 = vpack.c.b16 %v3744, %v3743
    %v3779 = vpack.c.b16 %v3746, %v3745
    %v3780 = vpack.c.b16 %v3748, %v3747
    %3813 = vmatprep.subr.bf16.mxu0 0
    %3814 = vmatpush1.bf16.msra.mxu0 %v3749
    %3815 = vmatprep.subr.bf16.mxu0 0
    %3816 = vmatpush1.bf16.msra.mxu0 %v3750
    %3817 = vmatprep.subr.bf16.mxu0 0
    %3818 = vmatpush1.bf16.msra.mxu0 %v3751
    %3819 = vmatprep.subr.bf16.mxu0 0
    %3820 = vmatpush1.bf16.msra.mxu0 %v3752
    %3821 = vmatprep.subr.bf16.mxu0 0
    %3822 = vmatpush1.bf16.msra.mxu0 %v3753
    %3823 = vmatprep.subr.bf16.mxu0 0
    %3824 = vmatpush1.bf16.msra.mxu0 %v3754
    %3825 = vmatprep.subr.bf16.mxu0 0
    %3826 = vmatpush1.bf16.msra.mxu0 %v3755
    %3827 = vmatprep.subr.bf16.mxu0 0
    %3828 = vmatpush1.bf16.msra.mxu0 %v3756
    %3829 = vmatprep.subr.bf16.mxu0 0
    %3830 = vmatpush1.bf16.msra.mxu0 %v3757
    %3831 = vmatprep.subr.bf16.mxu0 0
    %3832 = vmatpush1.bf16.msra.mxu0 %v3758
    %3833 = vmatprep.subr.bf16.mxu0 0
    %3834 = vmatpush1.bf16.msra.mxu0 %v3759
    %3835 = vmatprep.subr.bf16.mxu0 0
    %3836 = vmatpush1.bf16.msra.mxu0 %v3760
    %3837 = vmatprep.subr.bf16.mxu0 0
    %3838 = vmatpush1.bf16.msra.mxu0 %v3761
    %3839 = vmatprep.subr.bf16.mxu0 0
    %3840 = vmatpush1.bf16.msra.mxu0 %v3762
    %3841 = vmatprep.subr.bf16.mxu0 0
    %3842 = vmatpush1.bf16.msra.mxu0 %v3763
    %3843 = vmatprep.subr.bf16.mxu0 0
    %3844 = vmatpush1.bf16.msra.mxu0 %v3764
    %3845 = vmatprep.mubr.bf16.mxu0 %v3547
    %3846 = vmatmul.mubr.bf16.gmra.mrb[0].mxu0 %v3546
    %v3847 = vpop.f32.mrb[0].mxu0
    %v3848 = vadd.f32 %v3619, %v3847
    %v3849 = vpop.f32.mrb[0].mxu0
    %v3850 = vpop.f32.mrb[0].mxu0
    %v3851 = vpop.f32.mrb[0].mxu0
    %3852 = vdwg.mxu0
    %3853 = vmatprep.subr.bf16.mxu0 0
    %3854 = vmatpush1.bf16.msra.mxu0 %v3765
    %3855 = vmatprep.subr.bf16.mxu0 0
    %3856 = vmatpush1.bf16.msra.mxu0 %v3766
    %3857 = vmatprep.subr.bf16.mxu0 0
    %3858 = vmatpush1.bf16.msra.mxu0 %v3767
    %3859 = vmatprep.subr.bf16.mxu0 0
    %3860 = vmatpush1.bf16.msra.mxu0 %v3768
    %3861 = vmatprep.subr.bf16.mxu0 0
    %3862 = vmatpush1.bf16.msra.mxu0 %v3769
    %3863 = vmatprep.subr.bf16.mxu0 0
    %3864 = vmatpush1.bf16.msra.mxu0 %v3770
    %3865 = vmatprep.subr.bf16.mxu0 0
    %3866 = vmatpush1.bf16.msra.mxu0 %v3771
    %3867 = vmatprep.subr.bf16.mxu0 0
    %3868 = vmatpush1.bf16.msra.mxu0 %v3772
    %3869 = vmatprep.subr.bf16.mxu0 0
    %3870 = vmatpush1.bf16.msra.mxu0 %v3773
    %3871 = vmatprep.subr.bf16.mxu0 0
    %3872 = vmatpush1.bf16.msra.mxu0 %v3774
    %3873 = vmatprep.subr.bf16.mxu0 0
    %3874 = vmatpush1.bf16.msra.mxu0 %v3775
    %3875 = vmatprep.subr.bf16.mxu0 0
    %3876 = vmatpush1.bf16.msra.mxu0 %v3776
    %3877 = vmatprep.subr.bf16.mxu0 0
    %3878 = vmatpush1.bf16.msra.mxu0 %v3777
    %3879 = vmatprep.subr.bf16.mxu0 0
    %3880 = vmatpush1.bf16.msra.mxu0 %v3778
    %3881 = vmatprep.subr.bf16.mxu0 0
    %3882 = vmatpush1.bf16.msra.mxu0 %v3779
    %3883 = vmatprep.subr.bf16.mxu0 0
    %3884 = vmatpush1.bf16.msra.mxu0 %v3780
    %3885 = vmatprep.mubr.bf16.mxu0 %v3549
    %3886 = vmatmul.mubr.bf16.gmra.mrb[0].mxu0 %v3548
    %v3887 = vpop.f32.mrb[0].mxu0
    %v3888 = vadd.f32 %v3848, %v3887
    %v3889 = vpop.f32.mrb[0].mxu0
    %v3890 = vpop.f32.mrb[0].mxu0
    %v3891 = vpop.f32.mrb[0].mxu0
    %3892 = vdwg.mxu0
    %v3893 = vmax.f32 %v3888, 0.0
    %v3894 = vpack.c.bf16 %v3893, %v3893
    %v3895 = vld [vmem:[%s18] sm:$0xf]
    %v3896 = vld [vmem:[%s18 + $0x4] sm:$0xf]
    %v3897 = vld [vmem:[%s18 + $0x8] sm:$0xf]
    %v3898 = vld [vmem:[%s18 + $0xc] sm:$0xf]
    %v3899 = vld [vmem:[%s18 + $0x10] sm:$0xf]
    %v3900 = vld [vmem:[%s18 + $0x14] sm:$0xf]
    %v3901 = vld [vmem:[%s18 + $0x18] sm:$0xf]
    %v3902 = vld [vmem:[%s18 + $0x1c] sm:$0xf]
    %v3903 = vld [vmem:[%s18 + $0x20] sm:$0xf]
    %v3904 = vld [vmem:[%s18 + $0x24] sm:$0xf]
    %v3905 = vld [vmem:[%s18 + $0x28] sm:$0xf]
    %v3906 = vld [vmem:[%s18 + $0x2c] sm:$0xf]
    %v3907 = vld [vmem:[%s18 + $0x30] sm:$0xf]
    %v3908 = vld [vmem:[%s18 + $0x34] sm:$0xf]
    %v3909 = vld [vmem:[%s18 + $0x38] sm:$0xf]
    %v3910 = vld [vmem:[%s18 + $0x3c] sm:$0xf]
    %v3911 = vld [vmem:[%s19] sm:$0x1]
    %v3913 = vlaneseq
    %v3914 = vshrl.u32 %v3913, 7
    %v3915 = vsub.s32 0, %v3914
    %v3916 = vrot.slane %v3911, %v3915
    %v3934 = vunpack.c.l.b16 %v3895
    %v3935 = vunpack.c.l.b16 %v3896
    %v3936 = vunpack.c.l.b16 %v3897
    %v3937 = vunpack.c.l.b16 %v3898
    %v3938 = vunpack.c.l.b16 %v3899
    %v3939 = vunpack.c.l.b16 %v3900
    %v3940 = vunpack.c.l.b16 %v3901
    %v3941 = vunpack.c.l.b16 %v3902
    %v3942 = vunpack.c.l.b16 %v3903
    %v3943 = vunpack.c.l.b16 %v3904
    %v3944 = vunpack.c.l.b16 %v3905
    %v3945 = vunpack.c.l.b16 %v3906
    %v3946 = vunpack.c.l.b16 %v3907
    %v3947 = vunpack.c.l.b16 %v3908
    %v3948 = vunpack.c.l.b16 %v3909
    %v3949 = vunpack.c.l.b16 %v3910
    %v3950 = vpack.c.b16 %v3935, %v3934
    %v3951 = vpack.c.b16 %v3937, %v3936
    %v3952 = vpack.c.b16 %v3939, %v3938
    %v3953 = vpack.c.b16 %v3941, %v3940
    %v3954 = vpack.c.b16 %v3943, %v3942
    %v3955 = vpack.c.b16 %v3945, %v3944
    %v3956 = vpack.c.b16 %v3947, %v3946
    %v3957 = vpack.c.b16 %v3949, %v3948
    %3966 = vmatprep.subr.bf16.mxu0 0
    %3967 = vmatpush1.bf16.msra.mxu0 %v3950
    %3968 = vmatprep.subr.bf16.mxu0 0
    %3969 = vmatpush1.bf16.msra.mxu0 %v3951
    %3970 = vmatprep.subr.bf16.mxu0 0
    %3971 = vmatpush1.bf16.msra.mxu0 %v3952
    %3972 = vmatprep.subr.bf16.mxu0 0
    %3973 = vmatpush1.bf16.msra.mxu0 %v3953
    %3974 = vmatprep.subr.bf16.mxu0 0
    %3975 = vmatpush1.bf16.msra.mxu0 %v3954
    %3976 = vmatprep.subr.bf16.mxu0 0
    %3977 = vmatpush1.bf16.msra.mxu0 %v3955
    %3978 = vmatprep.subr.bf16.mxu0 0
    %3979 = vmatpush1.bf16.msra.mxu0 %v3956
    %3980 = vmatprep.subr.bf16.mxu0 0
    %3981 = vmatpush1.bf16.msra.mxu0 %v3957
    %3982 = vmatprep.subr.bf16.mxu0 0
    %3983 = vmatpush1.bf16.msra.mxu0 0
    %3984 = vmatprep.subr.bf16.mxu0 0
    %3985 = vmatpush1.bf16.msra.mxu0 0
    %3986 = vmatprep.subr.bf16.mxu0 0
    %3987 = vmatpush1.bf16.msra.mxu0 0
    %3988 = vmatprep.subr.bf16.mxu0 0
    %3989 = vmatpush1.bf16.msra.mxu0 0
    %3990 = vmatprep.subr.bf16.mxu0 0
    %3991 = vmatpush1.bf16.msra.mxu0 0
    %3992 = vmatprep.subr.bf16.mxu0 0
    %3993 = vmatpush1.bf16.msra.mxu0 0
    %3994 = vmatprep.subr.bf16.mxu0 0
    %3995 = vmatpush1.bf16.msra.mxu0 0
    %3996 = vmatprep.subr.bf16.mxu0 0
    %3997 = vmatpush1.bf16.msra.mxu0 0
    %3998 = vmatprep.mubr.bf16.mxu0 0
    %3999 = vmatmul.mubr.bf16.gmra.mrb[0].mxu0 %v3894
    %v4000 = vpop.f32.mrb[0].mxu0
    %v4001 = vadd.f32 %v3916, %v4000
    %v4002 = vpop.f32.mrb[0].mxu0
    %v4003 = vpop.f32.mrb[0].mxu0
    %v4004 = vpop.f32.mrb[0].mxu0
    %4005 = vdwg.mxu0
    %v4006 = vmax.f32 %v4001, 0.0
    %v4007 = vsel %vm3187, %v4006, 0.0
    %4008 = vadd.xlane.f32.xlu0 %v4007
    %v4009 = vpop.xlane.xlu0 %4008
    %v4010 = vmul.f32 %v4009, %v3247
    %v4011 = vsub.f32 %v4006, %v4010
    %v4012 = vmul.f32 %v4011, %v4011
    %v4013 = vsel %vm3187, %v4012, 0.0
    %4014 = vadd.xlane.f32.xlu0 %v4013
    %v4015 = vpop.xlane.xlu0 %4014
    %v4016 = vmul.f32 %v4015, %v3247
    %v4017 = vadd.f32 %v4016, 1e-05
    %v4018 = vrsqrt.pop %v4017
    %v4019 = vmul.f32 %v4011, %v4018
    %v4020 = vld [vmem:[%s20] sm:$0x1]
    %v4022 = vlaneseq
    %v4023 = vshrl.u32 %v4022, 7
    %v4024 = vsub.s32 0, %v4023
    %v4025 = vrot.slane %v4020, %v4024
    %v4027 = vmul.f32 %v4019, %v4025
    %v4028 = vld [vmem:[%s21] sm:$0x1]
    %v4030 = vlaneseq
    %v4031 = vshrl.u32 %v4030, 7
    %v4032 = vsub.s32 0, %v4031
    %v4033 = vrot.slane %v4028, %v4032
    %v4035 = vadd.f32 %v4027, %v4033
    %v4036 = vpack.c.bf16 %v4035, %v4035
    %v4037 = vld [vmem:[%s22] sm:$0xf]
    %v4038 = vld [vmem:[%s22 + $0x4] sm:$0xf]
    %v4039 = vld [vmem:[%s22 + $0x8] sm:$0xf]
    %v4040 = vld [vmem:[%s22 + $0xc] sm:$0xf]
    %v4041 = vld [vmem:[%s22 + $0x10] sm:$0xf]
    %v4042 = vld [vmem:[%s22 + $0x14] sm:$0xf]
    %v4043 = vld [vmem:[%s22 + $0x18] sm:$0xf]
    %v4044 = vld [vmem:[%s22 + $0x1c] sm:$0xf]
    %v4045 = vld [vmem:[%s22 + $0x20] sm:$0xf]
    %v4046 = vld [vmem:[%s22 + $0x24] sm:$0xf]
    %v4047 = vld [vmem:[%s22 + $0x28] sm:$0xf]
    %v4048 = vld [vmem:[%s22 + $0x2c] sm:$0xf]
    %v4049 = vld [vmem:[%s22 + $0x30] sm:$0xf]
    %v4050 = vld [vmem:[%s22 + $0x34] sm:$0xf]
    %v4051 = vld [vmem:[%s22 + $0x38] sm:$0xf]
    %v4052 = vld [vmem:[%s22 + $0x3c] sm:$0xf]
    %v4053 = vld [vmem:[%s23] sm:$0x1]
    %v4055 = vlaneseq
    %v4056 = vshrl.u32 %v4055, 7
    %v4057 = vsub.s32 0, %v4056
    %v4058 = vrot.slane %v4053, %v4057
    %v4076 = vunpack.c.l.b16 %v4037
    %v4077 = vunpack.c.l.b16 %v4038
    %v4078 = vunpack.c.l.b16 %v4039
    %v4079 = vunpack.c.l.b16 %v4040
    %v4080 = vunpack.c.l.b16 %v4041
    %v4081 = vunpack.c.l.b16 %v4042
    %v4082 = vunpack.c.l.b16 %v4043
    %v4083 = vunpack.c.l.b16 %v4044
    %v4084 = vunpack.c.l.b16 %v4045
    %v4085 = vunpack.c.l.b16 %v4046
    %v4086 = vunpack.c.l.b16 %v4047
    %v4087 = vunpack.c.l.b16 %v4048
    %v4088 = vunpack.c.l.b16 %v4049
    %v4089 = vunpack.c.l.b16 %v4050
    %v4090 = vunpack.c.l.b16 %v4051
    %v4091 = vunpack.c.l.b16 %v4052
    %v4092 = vpack.c.b16 %v4077, %v4076
    %v4093 = vpack.c.b16 %v4079, %v4078
    %v4094 = vpack.c.b16 %v4081, %v4080
    %v4095 = vpack.c.b16 %v4083, %v4082
    %v4096 = vpack.c.b16 %v4085, %v4084
    %v4097 = vpack.c.b16 %v4087, %v4086
    %v4098 = vpack.c.b16 %v4089, %v4088
    %v4099 = vpack.c.b16 %v4091, %v4090
    %4108 = vmatprep.subr.bf16.mxu0 0
    %4109 = vmatpush1.bf16.msra.mxu0 %v4092
    %4110 = vmatprep.subr.bf16.mxu0 0
    %4111 = vmatpush1.bf16.msra.mxu0 %v4093
    %4112 = vmatprep.subr.bf16.mxu0 0
    %4113 = vmatpush1.bf16.msra.mxu0 %v4094
    %4114 = vmatprep.subr.bf16.mxu0 0
    %4115 = vmatpush1.bf16.msra.mxu0 %v4095
    %4116 = vmatprep.subr.bf16.mxu0 0
    %4117 = vmatpush1.bf16.msra.mxu0 %v4096
    %4118 = vmatprep.subr.bf16.mxu0 0
    %4119 = vmatpush1.bf16.msra.mxu0 %v4097
    %4120 = vmatprep.subr.bf16.mxu0 0
    %4121 = vmatpush1.bf16.msra.mxu0 %v4098
    %4122 = vmatprep.subr.bf16.mxu0 0
    %4123 = vmatpush1.bf16.msra.mxu0 %v4099
    %4124 = vmatprep.subr.bf16.mxu0 0
    %4125 = vmatpush1.bf16.msra.mxu0 0
    %4126 = vmatprep.subr.bf16.mxu0 0
    %4127 = vmatpush1.bf16.msra.mxu0 0
    %4128 = vmatprep.subr.bf16.mxu0 0
    %4129 = vmatpush1.bf16.msra.mxu0 0
    %4130 = vmatprep.subr.bf16.mxu0 0
    %4131 = vmatpush1.bf16.msra.mxu0 0
    %4132 = vmatprep.subr.bf16.mxu0 0
    %4133 = vmatpush1.bf16.msra.mxu0 0
    %4134 = vmatprep.subr.bf16.mxu0 0
    %4135 = vmatpush1.bf16.msra.mxu0 0
    %4136 = vmatprep.subr.bf16.mxu0 0
    %4137 = vmatpush1.bf16.msra.mxu0 0
    %4138 = vmatprep.subr.bf16.mxu0 0
    %4139 = vmatpush1.bf16.msra.mxu0 0
    %4140 = vmatprep.mubr.bf16.mxu0 0
    %4141 = vmatmul.mubr.bf16.gmra.mrb[0].mxu0 %v4036
    %v4142 = vpop.f32.mrb[0].mxu0
    %v4143 = vadd.f32 %v4058, %v4142
    %v4144 = vpop.f32.mrb[0].mxu0
    %v4145 = vpop.f32.mrb[0].mxu0
    %v4146 = vpop.f32.mrb[0].mxu0
    %4147 = vdwg.mxu0
    %v4148 = vmax.f32 %v4143, 0.0
    %v4149 = vpack.c.bf16 %v4148, %v4148
    %v4150 = vld [vmem:[%s24] sm:$0xf]
    %v4151 = vld [vmem:[%s24 + $0x4] sm:$0xf]
    %v4152 = vld [vmem:[%s24 + $0x8] sm:$0xf]
    %v4153 = vld [vmem:[%s24 + $0xc] sm:$0xf]
    %v4154 = vld [vmem:[%s24 + $0x10] sm:$0xf]
    %v4155 = vld [vmem:[%s24 + $0x14] sm:$0xf]
    %v4156 = vld [vmem:[%s24 + $0x18] sm:$0xf]
    %v4157 = vld [vmem:[%s24 + $0x1c] sm:$0xf]
    %v4158 = vld [vmem:[%s25] sm:$0x1]
    %v4160 = vlaneseq
    %v4161 = vshrl.u32 %v4160, 7
    %v4162 = vsub.s32 0, %v4161
    %v4163 = vrot.slane %v4158, %v4162
    %v4173 = vunpack.c.l.b16 %v4150
    %v4174 = vunpack.c.l.b16 %v4151
    %v4175 = vunpack.c.l.b16 %v4152
    %v4176 = vunpack.c.l.b16 %v4153
    %v4177 = vunpack.c.l.b16 %v4154
    %v4178 = vunpack.c.l.b16 %v4155
    %v4179 = vunpack.c.l.b16 %v4156
    %v4180 = vunpack.c.l.b16 %v4157
    %v4181 = vpack.c.b16 %v4174, %v4173
    %v4182 = vpack.c.b16 %v4176, %v4175
    %v4183 = vpack.c.b16 %v4178, %v4177
    %v4184 = vpack.c.b16 %v4180, %v4179
    %v4190 = vsel %vm1993, %v4149, 0
    %4192 = vmatprep.subr.bf16.mxu0 0
    %4193 = vmatpush1.bf16.msra.mxu0 %v4181
    %4194 = vmatprep.subr.bf16.mxu0 0
    %4195 = vmatpush1.bf16.msra.mxu0 %v4182
    %4196 = vmatprep.subr.bf16.mxu0 0
    %4197 = vmatpush1.bf16.msra.mxu0 %v4183
    %4198 = vmatprep.subr.bf16.mxu0 0
    %4199 = vmatpush1.bf16.msra.mxu0 %v4184
    %4200 = vmatprep.subr.bf16.mxu0 0
    %4201 = vmatpush1.bf16.msra.mxu0 0
    %4202 = vmatprep.subr.bf16.mxu0 0
    %4203 = vmatpush1.bf16.msra.mxu0 0
    %4204 = vmatprep.subr.bf16.mxu0 0
    %4205 = vmatpush1.bf16.msra.mxu0 0
    %4206 = vmatprep.subr.bf16.mxu0 0
    %4207 = vmatpush1.bf16.msra.mxu0 0
    %4208 = vmatprep.subr.bf16.mxu0 0
    %4209 = vmatpush1.bf16.msra.mxu0 0
    %4210 = vmatprep.subr.bf16.mxu0 0
    %4211 = vmatpush1.bf16.msra.mxu0 0
    %4212 = vmatprep.subr.bf16.mxu0 0
    %4213 = vmatpush1.bf16.msra.mxu0 0
    %4214 = vmatprep.subr.bf16.mxu0 0
    %4215 = vmatpush1.bf16.msra.mxu0 0
    %4216 = vmatprep.subr.bf16.mxu0 0
    %4217 = vmatpush1.bf16.msra.mxu0 0
    %4218 = vmatprep.subr.bf16.mxu0 0
    %4219 = vmatpush1.bf16.msra.mxu0 0
    %4220 = vmatprep.subr.bf16.mxu0 0
    %4221 = vmatpush1.bf16.msra.mxu0 0
    %4222 = vmatprep.subr.bf16.mxu0 0
    %4223 = vmatpush1.bf16.msra.mxu0 0
    %4224 = vmatprep.mubr.bf16.mxu0 0
    %4225 = vmatmul.mubr.bf16.gmra.mrb[0].mxu0 %v4190
    %v4226 = vpop.f32.mrb[0].mxu0
    %v4227 = vadd.f32 %v4163, %v4226
    %v4228 = vpop.f32.mrb[0].mxu0
    %v4229 = vpop.f32.mrb[0].mxu0
    %v4230 = vpop.f32.mrb[0].mxu0
    %4231 = vdwg.mxu0
    %v4232 = vmax.f32 %v4227, 0.0
    %v4233 = vpack.c.bf16 %v4232, %v4232
    %v4234 = vld [vmem:[%s26] sm:$0xf]
    %v4235 = vld [vmem:[%s26 + $0x4] sm:$0xf]
    %v4236 = vld [vmem:[%s26 + $0x8] sm:$0xf]
    %v4237 = vld [vmem:[%s26 + $0xc] sm:$0xf]
    %v4238 = vld [vmem:[%s27] sm:$0x1]
    %v4240 = vlaneseq
    %v4241 = vshrl.u32 %v4240, 7
    %v4242 = vsub.s32 0, %v4241
    %v4243 = vrot.slane %v4238, %v4242
    %v4249 = vunpack.c.l.b16 %v4234
    %v4250 = vunpack.c.l.b16 %v4235
    %v4251 = vunpack.c.l.b16 %v4236
    %v4252 = vunpack.c.l.b16 %v4237
    %v4253 = vpack.c.b16 %v4250, %v4249
    %v4254 = vpack.c.b16 %v4252, %v4251
    %v4258 = vsel %vm838, %v4233, 0
    %4260 = vmatprep.subr.bf16.mxu0 0
    %4261 = vmatpush1.bf16.msra.mxu0 %v4253
    %4262 = vmatprep.subr.bf16.mxu0 0
    %4263 = vmatpush1.bf16.msra.mxu0 %v4254
    %4264 = vmatprep.subr.bf16.mxu0 0
    %4265 = vmatpush1.bf16.msra.mxu0 0
    %4266 = vmatprep.subr.bf16.mxu0 0
    %4267 = vmatpush1.bf16.msra.mxu0 0
    %4268 = vmatprep.subr.bf16.mxu0 0
    %4269 = vmatpush1.bf16.msra.mxu0 0
    %4270 = vmatprep.subr.bf16.mxu0 0
    %4271 = vmatpush1.bf16.msra.mxu0 0
    %4272 = vmatprep.subr.bf16.mxu0 0
    %4273 = vmatpush1.bf16.msra.mxu0 0
    %4274 = vmatprep.subr.bf16.mxu0 0
    %4275 = vmatpush1.bf16.msra.mxu0 0
    %4276 = vmatprep.subr.bf16.mxu0 0
    %4277 = vmatpush1.bf16.msra.mxu0 0
    %4278 = vmatprep.subr.bf16.mxu0 0
    %4279 = vmatpush1.bf16.msra.mxu0 0
    %4280 = vmatprep.subr.bf16.mxu0 0
    %4281 = vmatpush1.bf16.msra.mxu0 0
    %4282 = vmatprep.subr.bf16.mxu0 0
    %4283 = vmatpush1.bf16.msra.mxu0 0
    %4284 = vmatprep.subr.bf16.mxu0 0
    %4285 = vmatpush1.bf16.msra.mxu0 0
    %4286 = vmatprep.subr.bf16.mxu0 0
    %4287 = vmatpush1.bf16.msra.mxu0 0
    %4288 = vmatprep.subr.bf16.mxu0 0
    %4289 = vmatpush1.bf16.msra.mxu0 0
    %4290 = vmatprep.subr.bf16.mxu0 0
    %4291 = vmatpush1.bf16.msra.mxu0 0
    %4292 = vmatprep.mubr.bf16.mxu0 0
    %4293 = vmatmul.mubr.bf16.gmra.mrb[0].mxu0 %v4258
    %v4294 = vpop.f32.mrb[0].mxu0
    %v4295 = vadd.f32 %v4243, %v4294
    %v4296 = vpop.f32.mrb[0].mxu0
    %v4297 = vpop.f32.mrb[0].mxu0
    %v4298 = vpop.f32.mrb[0].mxu0
    %4299 = vdwg.mxu0
    %4300 = vst [vmem:[#allocation2] sm:$0x3] %v4295
    // Predicated region
    $region114: #{tpu_custom_call.1} parent=1 // pred_check
      _
    $region115: #{tpu_custom_call.1} parent=1 // pred_check_branch
      %4302 = sbr.rel (0) target = $region117
    $region116: #{tpu_custom_call.1} parent=1 // pred_region
      %s4304 = ssub.s32 32, 32
      %4305 = vsyncadd [#allocation3], %s4304
      %s4307 = sshll.u32 [#allocation2], 4
      %s4308 = int_to_ptr.vmem [resolvable:$true] %s4307
      %4310 = dma.vmem_to_hbm [thread:$0]  %s4308, 32, %s28, [#allocation3]
    $region117: #{tpu_custom_call.1} parent=1 // pred_fallthru
      _
    // Predicated region
    $region118: #{tpu_custom_call.1} parent=1 // pred_check
      _
    $region119: #{tpu_custom_call.1} parent=1 // pred_check_branch
      %4312 = sbr.rel (0) target = $region121
    $region120: #{tpu_custom_call.1} parent=1 // pred_region
      %4313 = dma.done [#allocation3], 32
    $region121: #{tpu_custom_call.1} parent=1 // pred_fallthru
      _
    %4314 = vsyncpa [#allocation3], 1

</llo_original>
